<compile_context>
chip_gen: v5e
topology: v5e:2x2
jax: 0.10.0
libtpu: 0.0.40
codegen_flags: <defaults>
</compile_context>

<pallas_src>
import functools

import jax
import jax.numpy as jnp
from jax import lax
from jax.experimental import pallas as pl
from jax.experimental.pallas import tpu as pltpu

EPS = 1e-5
NEG_INF = -1e30
LANE = 128


def _round_up(x, m):
    return ((x + m - 1) // m) * m


def _pick_tile(hw):
    for t in (512, 256, 128, 64, 32, 16, 8):
        if hw % t == 0:
            return t
    return hw


def _vmem_limit(est_bytes):
    est = int(est_bytes * 1.3) + (2 << 20)
    return int(max(32 << 20, min(est, 64 << 20)))


# ---------------------------------------------------------------------------
# Kernel 1: GroupNorm(1, C) + qkv 1x1-conv projection (per sample).
# ---------------------------------------------------------------------------
def _gn_qkv_kernel(x_ref, gnw_ref, gnb_ref, wqkv_ref, bqkv_ref, qkv_ref, *,
                   inv_count, cp, q_scale):
    x = x_ref[...]                                    # [HW, Cp] f32 (pad = 0)

    # Single-pass GroupNorm(1, C) statistics over the REAL HW*C elements
    # (padded channels are zero, so they do not perturb the sums).
    s1 = jnp.sum(x)
    s2 = jnp.sum(x * x)
    mean = s1 * inv_count
    var = s2 * inv_count - mean * mean
    xn = (x - mean) * lax.rsqrt(var + EPS)
    xn = xn * gnw_ref[...] + gnb_ref[...]             # per-channel affine (f32)

    # 1x1 conv == channel matmul; narrow operands, f32 accumulation.
    qkv = jnp.dot(xn.astype(wqkv_ref.dtype), wqkv_ref[...],
                  preferred_element_type=jnp.float32)
    qkv = qkv + bqkv_ref[...]                         # [HW, 3*Cp] f32

    dt = qkv_ref.dtype
    # Softmax scale applied ONCE to q (in f32, before the narrow cast);
    # equals the reference's c_head**-0.25 on both q and k.
    qkv_ref[0] = (qkv[:, :cp] * q_scale).astype(dt)   # q (pre-scaled)
    qkv_ref[1] = qkv[:, cp:2 * cp].astype(dt)         # k
    qkv_ref[2] = qkv[:, 2 * cp:].astype(dt)           # v


# ---------------------------------------------------------------------------
# Kernel 2: flash attention (online softmax) + out projection + residual.
# ---------------------------------------------------------------------------
def _flash_attn_kernel(x_ref, q_ref, k_ref, v_ref, wout_ref, bout_ref, o_ref,
                       m_sc, l_sc, acc_sc, *, n_head, chp, approx_recip):
    ki = pl.program_id(2)

    @pl.when(ki == 0)
    def _init():
        m_sc[...] = jnp.full(m_sc.shape, NEG_INF, m_sc.dtype)
        l_sc[...] = jnp.zeros(l_sc.shape, l_sc.dtype)
        acc_sc[...] = jnp.zeros(acc_sc.shape, acc_sc.dtype)

    q = q_ref[...]                                    # [tq, Cp] (q pre-scaled)
    k = k_ref[...]                                    # [tk, Cp]
    v = v_ref[...]                                    # [tk, Cp]

    for h in range(n_head):                           # static unroll over heads
        sl = slice(h * chp, (h + 1) * chp)            # 128-aligned head slice

        # s = q_h @ k_h^T  (contract last dims; MXU, f32 accumulate)
        s = lax.dot_general(q[:, sl], k[:, sl], (((1,), (1,)), ((), ())),
                            preferred_element_type=jnp.float32)   # [tq, tk]

        m_prev = m_sc[h]                                           # [tq, 1]
        m_new = jnp.maximum(m_prev, jnp.max(s, axis=-1, keepdims=True))
        alpha = jnp.exp(m_prev - m_new)
        p = jnp.exp(s - m_new)                                     # [tq, tk] f32
        l_sc[h] = alpha * l_sc[h] + jnp.sum(p, axis=-1, keepdims=True)
        m_sc[h] = m_new
        acc_sc[:, sl] = alpha * acc_sc[:, sl] + jnp.dot(
            p.astype(v.dtype), v[:, sl], preferred_element_type=jnp.float32)

    @pl.when(ki == pl.num_programs(2) - 1)
    def _finalize():
        # Normalize each head in place (no concat; aligned slices), then one
        # out-projection matmul, residual read only here.
        for h in range(n_head):
            sl = slice(h * chp, (h + 1) * chp)
            inv_l = pl.reciprocal(l_sc[h], approx=approx_recip)    # [tq, 1]
            acc_sc[:, sl] = acc_sc[:, sl] * inv_l
        y = acc_sc[...].astype(wout_ref.dtype)                     # [tq, Cp]
        proj = jnp.dot(y, wout_ref[...], preferred_element_type=jnp.float32)
        o_ref[...] = x_ref[...] + proj + bout_ref[...]


# ---------------------------------------------------------------------------
# Wrapper
# ---------------------------------------------------------------------------
@functools.partial(jax.jit, static_argnames=("n_head", "compute_dtype"))
def self_attention_2d(x_nchw, params, n_head=1, compute_dtype=jnp.bfloat16):
    """SelfAttention2d forward (eval mode). x_nchw: [N, C, H, W] f32."""
    n, c, h, w = x_nchw.shape
    assert c % n_head == 0
    c_head = c // n_head
    hw = h * w

    cdtype = jnp.dtype(compute_dtype)
    f32 = jnp.float32
    cb = cdtype.itemsize

    # Pad each head's channels up to a lane multiple (dense lanes, aligned
    # per-head slices).  For real DDPM configs with c_head % 128 == 0 this is
    # a no-op.
    chp = _round_up(c_head, LANE)
    cp = n_head * chp

    gn_w, gn_b, w_qkv, b_qkv, w_out, b_out = params

    # ---- layout / padding glue (plain JAX) ---------------------------------
    # NCHW -> [N, HW, C] (HW on sublanes, channels on lanes); zero-pad C -> Cp.
    x = jnp.transpose(x_nchw.reshape(n, c, hw), (0, 2, 1))
    if cp != c:
        x = jnp.pad(x, ((0, 0), (0, 0), (0, cp - c)))

    gnw_p = jnp.zeros((1, cp), f32).at[0, :c].set(gn_w)
    gnb_p = jnp.zeros((1, cp), f32).at[0, :c].set(gn_b)

    # qkv conv weight [3C, C, 1, 1]: output channels are (qkv, head, c_head);
    # pad each head to chp; pad input channels to Cp (end padding, like x).
    wq = w_qkv.reshape(3, n_head, c_head, c)
    wq_p = jnp.zeros((3, n_head, chp, cp), f32).at[:, :, :c_head, :c].set(wq)
    wqkv_t = wq_p.reshape(3 * cp, cp).T                      # [Cp_in, 3Cp_out]
    bq = b_qkv.reshape(3, n_head, c_head)
    bqkv_p = jnp.zeros((3, n_head, chp), f32).at[:, :, :c_head].set(bq)
    bqkv_p = bqkv_p.reshape(1, 3 * cp)

    # out conv weight [C, C, 1, 1]: input channels (= y) are per-head padded;
    # output channels end-padded (same layout as x / residual).
    wo = w_out.reshape(c, n_head, c_head)
    wo_p = jnp.zeros((cp, n_head, chp), f32).at[:c, :, :c_head].set(wo)
    wout_t = wo_p.reshape(cp, cp).T                          # [Cp_y, Cp_out]
    bout_p = jnp.zeros((1, cp), f32).at[0, :c].set(b_out)

    wqkv_c = wqkv_t.astype(cdtype)
    wout_c = wout_t.astype(cdtype)

    # ---- kernel 1: GroupNorm + qkv projection ------------------------------
    q_scale = float(c_head) ** (-0.5)    # == (c_head**-0.25)**2, applied once
    inv_count = 1.0 / float(hw * c)      # statistics over REAL channels only

    k1_est = (2 * hw * cp * 4                       # x (double-buffered)
              + 2 * 3 * hw * cp * cb                # qkv output
              + 2 * (3 * cp * cp * cb + 8 * cp * 4)  # weights + biases
              + 4 * hw * cp * 4)                    # in-kernel f32 temporaries

    qkv = pl.pallas_call(
        functools.partial(_gn_qkv_kernel, inv_count=inv_count, cp=cp,
                          q_scale=q_scale),
        out_shape=jax.ShapeDtypeStruct((n, 3, hw, cp), cdtype),
        grid_spec=pltpu.PrefetchScalarGridSpec(
            num_scalar_prefetch=0,
            grid=(n,),
            in_specs=[
                pl.BlockSpec((None, hw, cp), lambda i: (i, 0, 0)),     # x
                pl.BlockSpec((1, cp), lambda i: (0, 0)),               # gn w
                pl.BlockSpec((1, cp), lambda i: (0, 0)),               # gn b
                pl.BlockSpec((cp, 3 * cp), lambda i: (0, 0)),          # Wqkv^T
                pl.BlockSpec((1, 3 * cp), lambda i: (0, 0)),           # b_qkv
            ],
            out_specs=pl.BlockSpec((None, 3, hw, cp), lambda i: (i, 0, 0, 0)),
        ),
        compiler_params=pltpu.CompilerParams(
            dimension_semantics=("parallel",),
            vmem_limit_bytes=_vmem_limit(k1_est)),
    )(x, gnw_p, gnb_p, wqkv_c, bqkv_p)

    # ---- kernel 2: flash attention + out projection + residual -------------
    tq = _pick_tile(hw)
    tk = _pick_tile(hw)
    nq, nk = hw // tq, hw // tk

    k2_est = (2 * 2 * tq * cp * 4                        # x in + out (f32)
              + 2 * (tq + 2 * tk) * cp * cb              # q, k, v tiles
              + 2 * (cp * cp * cb + cp * 4)              # Wout^T, b_out
              + tq * cp * 4 + 2 * n_head * tq * LANE * 4  # scratch
              + 3 * tq * tk * 4)                         # score/prob temporaries

    out = pl.pallas_call(
        functools.partial(_flash_attn_kernel, n_head=n_head, chp=chp,
                          approx_recip=bool(cdtype != jnp.dtype(jnp.float32))),
        out_shape=jax.ShapeDtypeStruct((n, hw, cp), f32),
        grid_spec=pltpu.PrefetchScalarGridSpec(
            num_scalar_prefetch=0,
            grid=(n, nq, nk),
            in_specs=[
                pl.BlockSpec((None, tq, cp), lambda i, qi, ki: (i, qi, 0)),          # x
                pl.BlockSpec((None, None, tq, cp), lambda i, qi, ki: (i, 0, qi, 0)),  # q
                pl.BlockSpec((None, None, tk, cp), lambda i, qi, ki: (i, 1, ki, 0)),  # k
                pl.BlockSpec((None, None, tk, cp), lambda i, qi, ki: (i, 2, ki, 0)),  # v
                pl.BlockSpec((cp, cp), lambda i, qi, ki: (0, 0)),                     # Wout^T
                pl.BlockSpec((1, cp), lambda i, qi, ki: (0, 0)),                      # b_out
            ],
            out_specs=pl.BlockSpec((None, tq, cp), lambda i, qi, ki: (i, qi, 0)),
            scratch_shapes=[
                pltpu.VMEM((n_head, tq, 1), jnp.float32),   # m (running max)
                pltpu.VMEM((n_head, tq, 1), jnp.float32),   # l (running sum)
                pltpu.VMEM((tq, cp), jnp.float32),          # attention out acc
            ],
        ),
        compiler_params=pltpu.CompilerParams(
            dimension_semantics=("parallel", "parallel", "arbitrary"),
            vmem_limit_bytes=_vmem_limit(k2_est)),
    )(x, qkv, qkv, qkv, wout_c, bout_p)

    # ---- un-pad & back to NCHW ---------------------------------------------
    if cp != c:
        out = out[:, :, :c]
    return jnp.transpose(out, (0, 2, 1)).reshape(n, c, h, w)


# ---------------------------------------------------------------------------
# Pure-JAX reference matching the PyTorch forward (eval mode).
# ---------------------------------------------------------------------------
def reference(x, params, n_head=1):
    gn_w, gn_b, w_qkv, b_qkv, w_out, b_out = params
    n, c, h, w = x.shape
    mean = x.mean(axis=(1, 2, 3), keepdims=True)
    var = ((x - mean) ** 2).mean(axis=(1, 2, 3), keepdims=True)
    xn = (x - mean) / jnp.sqrt(var + EPS)
    xn = xn * gn_w[None, :, None, None] + gn_b[None, :, None, None]
    qkv = jnp.einsum('oc,nchw->nohw', w_qkv.reshape(3 * c, c), xn) \
        + b_qkv[None, :, None, None]
    qkv = qkv.reshape(n, 3 * n_head, c // n_head, h * w).transpose(0, 1, 3, 2)
    q, k, v = jnp.split(qkv, 3, axis=1)
    scale = (c // n_head) ** (-0.25)
    att = jax.nn.softmax((q * scale) @ (jnp.swapaxes(k, 2, 3) * scale), axis=3)
    y = (att @ v).transpose(0, 1, 3, 2).reshape(n, c, h, w)
    proj = jnp.einsum('oc,nchw->nohw', w_out.reshape(c, c), y) \
        + b_out[None, :, None, None]
    return x + proj


if __name__ == "__main__":
    N, C, H, W = 2, 4, 16, 16
    n_head = 1

    key = jax.random.PRNGKey(0)
    k0, k1, k2, k3, k4, k5 = jax.random.split(key, 6)

    # Deterministic parameter init (shapes from the nn.Module __init__).
    gn_w = 1.0 + 0.05 * jax.random.normal(k0, (C,), jnp.float32)
    gn_b = 0.05 * jax.random.normal(k1, (C,), jnp.float32)
    w_qkv = 0.1 * jax.random.normal(k2, (3 * C, C, 1, 1), jnp.float32)
    b_qkv = 0.05 * jax.random.normal(k3, (3 * C,), jnp.float32)
    w_out = 0.1 * jax.random.normal(k4, (C, C, 1, 1), jnp.float32)
    b_out = 0.05 * jax.random.normal(k5, (C,), jnp.float32)
    params = (gn_w, gn_b, w_qkv, b_qkv, w_out, b_out)

    x = jax.random.normal(jax.random.PRNGKey(42), (N, C, H, W), jnp.float32)

    ref = jax.block_until_ready(reference(x, params, n_head=n_head))

    # Optimized (bf16 matmul operands, f32 accumulation) path.
    out_bf16 = jax.block_until_ready(
        self_attention_2d(x, params, n_head=n_head, compute_dtype=jnp.bfloat16))
    assert out_bf16.shape == (N, C, H, W)
    err_bf16 = jnp.max(jnp.abs(out_bf16 - ref))
    assert jnp.allclose(out_bf16, ref, atol=2e-2, rtol=2e-2), \
        f"bf16 path max abs err {err_bf16}"

    # Full-f32 validation path (exact reciprocal), tight tolerance.
    out_f32 = jax.block_until_ready(
        self_attention_2d(x, params, n_head=n_head, compute_dtype=jnp.float32))
    err_f32 = jnp.max(jnp.abs(out_f32 - ref))
    assert jnp.allclose(out_f32, ref, atol=1e-3, rtol=1e-3), \
        f"f32 path max abs err {err_f32}"

    print("KERNEL_OK")
</pallas_src>

<mosaic_0001>
module attributes {stable_mosaic.version = 11 : i64} {
  func.func @_gn_qkv_kernel(%arg0: i32, %arg1: memref<1x256x128xf32, #tpu.memory_space<vmem>>, %arg2: memref<1x128xf32, #tpu.memory_space<vmem>>, %arg3: memref<1x128xf32, #tpu.memory_space<vmem>>, %arg4: memref<128x384xbf16, #tpu.memory_space<vmem>>, %arg5: memref<1x384xf32, #tpu.memory_space<vmem>>, %arg6: memref<1x3x256x128xbf16, #tpu.memory_space<vmem>>) attributes {dimension_semantics = [#tpu.dimension_semantics<parallel>], iteration_bounds = array<i64: 2>, scalar_prefetch = 0 : i64, scratch_operands = 0 : i64, tpu.core_type = #tpu.core_type<tc>, window_params = [{transform_indices = @transform_0, window_bounds = array<i64: 1, 256, 128>}, {pipeline_mode = #tpu.pipeline_mode<synchronous>, transform_indices = @transform_1, window_bounds = array<i64: 1, 128>}, {pipeline_mode = #tpu.pipeline_mode<synchronous>, transform_indices = @transform_2, window_bounds = array<i64: 1, 128>}, {pipeline_mode = #tpu.pipeline_mode<synchronous>, transform_indices = @transform_3, window_bounds = array<i64: 128, 384>}, {pipeline_mode = #tpu.pipeline_mode<synchronous>, transform_indices = @transform_4, window_bounds = array<i64: 1, 384>}, {transform_indices = @transform_5, window_bounds = array<i64: 1, 3, 256, 128>}]} {
    %c0 = arith.constant 0 : index
    %c0_0 = arith.constant 0 : index
    %c0_1 = arith.constant 0 : index
    %0 = vector.load %arg1[%c0, %c0_0, %c0_1] : memref<1x256x128xf32, #tpu.memory_space<vmem>>, vector<1x256x128xf32>
    %1 = vector.shape_cast %0 : vector<1x256x128xf32> to vector<256x128xf32>
    %2 = vector.shape_cast %1 : vector<256x128xf32> to vector<1x256x128xf32>
    %cst = arith.constant dense<0.000000e+00> : vector<1xf32>
    %3 = vector.multi_reduction <add>, %2, %cst [1, 2] : vector<1x256x128xf32> to vector<1xf32>
    %4 = vector.shape_cast %3 : vector<1xf32> to vector<1x1x1xf32>
    %5 = vector.extract %4[0, 0, 0] : f32 from vector<1x1x1xf32>
    %6 = arith.mulf %1, %1 : vector<256x128xf32>
    %7 = vector.shape_cast %6 : vector<256x128xf32> to vector<1x256x128xf32>
    %cst_2 = arith.constant dense<0.000000e+00> : vector<1xf32>
    %8 = vector.multi_reduction <add>, %7, %cst_2 [1, 2] : vector<1x256x128xf32> to vector<1xf32>
    %9 = vector.shape_cast %8 : vector<1xf32> to vector<1x1x1xf32>
    %10 = vector.extract %9[0, 0, 0] : f32 from vector<1x1x1xf32>
    %cst_3 = arith.constant 9.765625E-4 : f32
    %11 = arith.mulf %5, %cst_3 : f32
    %cst_4 = arith.constant 9.765625E-4 : f32
    %12 = arith.mulf %10, %cst_4 : f32
    %13 = arith.mulf %11, %11 : f32
    %14 = arith.subf %12, %13 : f32
    %15 = vector.broadcast %11 : f32 to vector<256x128xf32>
    %16 = arith.subf %1, %15 : vector<256x128xf32>
    %cst_5 = arith.constant 9.99999974E-6 : f32
    %17 = arith.addf %14, %cst_5 : f32
    %18 = math.rsqrt %17 : f32
    %19 = vector.broadcast %18 : f32 to vector<256x128xf32>
    %20 = arith.mulf %16, %19 : vector<256x128xf32>
    %c0_6 = arith.constant 0 : index
    %c0_7 = arith.constant 0 : index
    %21 = vector.load %arg2[%c0_6, %c0_7] : memref<1x128xf32, #tpu.memory_space<vmem>>, vector<1x128xf32>
    %22 = vector.broadcast %21 : vector<1x128xf32> to vector<256x128xf32>
    %23 = arith.mulf %20, %22 : vector<256x128xf32>
    %c0_8 = arith.constant 0 : index
    %c0_9 = arith.constant 0 : index
    %24 = vector.load %arg3[%c0_8, %c0_9] : memref<1x128xf32, #tpu.memory_space<vmem>>, vector<1x128xf32>
    %25 = vector.broadcast %24 : vector<1x128xf32> to vector<256x128xf32>
    %26 = arith.addf %23, %25 : vector<256x128xf32>
    %27 = arith.truncf %26 : vector<256x128xf32> to vector<256x128xbf16>
    %c0_10 = arith.constant 0 : index
    %c0_11 = arith.constant 0 : index
    %28 = vector.load %arg4[%c0_10, %c0_11] : memref<128x384xbf16, #tpu.memory_space<vmem>>, vector<128x384xbf16>
    %cst_12 = arith.constant dense<0.000000e+00> : vector<256x384xf32>
    %29 = tpu.matmul %27, %28, %cst_12 {dimension_numbers = #tpu.dot_dimension_numbers<[1], [0], [0], [1], [0, 0, 1, 1], [], []>} : vector<256x128xbf16>, vector<128x384xbf16>, vector<256x384xf32> -> vector<256x384xf32>
    %c0_13 = arith.constant 0 : index
    %c0_14 = arith.constant 0 : index
    %30 = vector.load %arg5[%c0_13, %c0_14] : memref<1x384xf32, #tpu.memory_space<vmem>>, vector<1x384xf32>
    %31 = vector.broadcast %30 : vector<1x384xf32> to vector<256x384xf32>
    %32 = arith.addf %29, %31 : vector<256x384xf32>
    %33 = vector.extract_strided_slice %32 {offsets = [0, 0], sizes = [256, 128], strides = [1, 1]} : vector<256x384xf32> to vector<256x128xf32>
    %cst_15 = arith.constant 5.000000e-01 : f32
    %34 = vector.broadcast %cst_15 : f32 to vector<256x128xf32>
    %35 = arith.mulf %33, %34 : vector<256x128xf32>
    %36 = arith.truncf %35 : vector<256x128xf32> to vector<256x128xbf16>
    %c0_16 = arith.constant 0 : index
    %c0_17 = arith.constant 0 : index
    %c0_18 = arith.constant 0 : index
    %c0_19 = arith.constant 0 : index
    %37 = vector.load %arg6[%c0_16, %c0_17, %c0_18, %c0_19] : memref<1x3x256x128xbf16, #tpu.memory_space<vmem>>, vector<1x1x256x128xbf16>
    %38 = vector.shape_cast %37 : vector<1x1x256x128xbf16> to vector<256x128xbf16>
    %39 = vector.shape_cast %36 : vector<256x128xbf16> to vector<1x1x256x128xbf16>
    tpu.vector_store %arg6[%c0_16, %c0_17, %c0_18, %c0_19], %39 {strides = array<i32>} : memref<1x3x256x128xbf16, #tpu.memory_space<vmem>>, vector<1x1x256x128xbf16>,
    %40 = vector.extract_strided_slice %32 {offsets = [0, 128], sizes = [256, 128], strides = [1, 1]} : vector<256x384xf32> to vector<256x128xf32>
    %41 = arith.truncf %40 : vector<256x128xf32> to vector<256x128xbf16>
    %c0_20 = arith.constant 0 : index
    %c1 = arith.constant 1 : index
    %c0_21 = arith.constant 0 : index
    %c0_22 = arith.constant 0 : index
    %42 = vector.load %arg6[%c0_20, %c1, %c0_21, %c0_22] : memref<1x3x256x128xbf16, #tpu.memory_space<vmem>>, vector<1x1x256x128xbf16>
    %43 = vector.shape_cast %42 : vector<1x1x256x128xbf16> to vector<256x128xbf16>
    %44 = vector.shape_cast %41 : vector<256x128xbf16> to vector<1x1x256x128xbf16>
    tpu.vector_store %arg6[%c0_20, %c1, %c0_21, %c0_22], %44 {strides = array<i32>} : memref<1x3x256x128xbf16, #tpu.memory_space<vmem>>, vector<1x1x256x128xbf16>,
    %45 = vector.extract_strided_slice %32 {offsets = [0, 256], sizes = [256, 128], strides = [1, 1]} : vector<256x384xf32> to vector<256x128xf32>
    %46 = arith.truncf %45 : vector<256x128xf32> to vector<256x128xbf16>
    %c0_23 = arith.constant 0 : index
    %c2 = arith.constant 2 : index
    %c0_24 = arith.constant 0 : index
    %c0_25 = arith.constant 0 : index
    %47 = vector.load %arg6[%c0_23, %c2, %c0_24, %c0_25] : memref<1x3x256x128xbf16, #tpu.memory_space<vmem>>, vector<1x1x256x128xbf16>
    %48 = vector.shape_cast %47 : vector<1x1x256x128xbf16> to vector<256x128xbf16>
    %49 = vector.shape_cast %46 : vector<256x128xbf16> to vector<1x1x256x128xbf16>
    tpu.vector_store %arg6[%c0_23, %c2, %c0_24, %c0_25], %49 {strides = array<i32>} : memref<1x3x256x128xbf16, #tpu.memory_space<vmem>>, vector<1x1x256x128xbf16>,
    return
  }
  func.func @transform_0(%arg0: i32) -> (i32, i32, i32) {
    %c0_i32 = arith.constant 0 : i32
    %c0_i32_0 = arith.constant 0 : i32
    %c0_i32_1 = arith.constant 0 : i32
    return %arg0, %c0_i32, %c0_i32_0 : i32, i32, i32
  }
  func.func @transform_1(%arg0: i32) -> (i32, i32) {
    %c0_i32 = arith.constant 0 : i32
    %c0_i32_0 = arith.constant 0 : i32
    %c0_i32_1 = arith.constant 0 : i32
    return %c0_i32, %c0_i32_0 : i32, i32
  }
  func.func @transform_2(%arg0: i32) -> (i32, i32) {
    %c0_i32 = arith.constant 0 : i32
    %c0_i32_0 = arith.constant 0 : i32
    %c0_i32_1 = arith.constant 0 : i32
    return %c0_i32, %c0_i32_0 : i32, i32
  }
  func.func @transform_3(%arg0: i32) -> (i32, i32) {
    %c0_i32 = arith.constant 0 : i32
    %c0_i32_0 = arith.constant 0 : i32
    %c0_i32_1 = arith.constant 0 : i32
    return %c0_i32, %c0_i32_0 : i32, i32
  }
  func.func @transform_4(%arg0: i32) -> (i32, i32) {
    %c0_i32 = arith.constant 0 : i32
    %c0_i32_0 = arith.constant 0 : i32
    %c0_i32_1 = arith.constant 0 : i32
    return %c0_i32, %c0_i32_0 : i32, i32
  }
  func.func @transform_5(%arg0: i32) -> (i32, i32, i32, i32) {
    %c0_i32 = arith.constant 0 : i32
    %c0_i32_0 = arith.constant 0 : i32
    %c0_i32_1 = arith.constant 0 : i32
    %c0_i32_2 = arith.constant 0 : i32
    return %arg0, %c0_i32, %c0_i32_0, %c0_i32_1 : i32, i32, i32, i32
  }
}

module attributes {stable_mosaic.version = 11 : i64} {
  func.func @_flash_attn_kernel(%arg0: i32, %arg1: i32, %arg2: i32, %arg3: memref<1x256x128xf32, #tpu.memory_space<vmem>>, %arg4: memref<1x1x256x128xbf16, #tpu.memory_space<vmem>>, %arg5: memref<1x1x256x128xbf16, #tpu.memory_space<vmem>>, %arg6: memref<1x1x256x128xbf16, #tpu.memory_space<vmem>>, %arg7: memref<128x128xbf16, #tpu.memory_space<vmem>>, %arg8: memref<1x128xf32, #tpu.memory_space<vmem>>, %arg9: memref<1x256x128xf32, #tpu.memory_space<vmem>>, %arg10: memref<1x256x1xf32, #tpu.memory_space<vmem>>, %arg11: memref<1x256x1xf32, #tpu.memory_space<vmem>>, %arg12: memref<256x128xf32, #tpu.memory_space<vmem>>) attributes {dimension_semantics = [#tpu.dimension_semantics<parallel>, #tpu.dimension_semantics<parallel>, #tpu.dimension_semantics<arbitrary>], iteration_bounds = array<i64: 2, 1, 1>, scalar_prefetch = 0 : i64, scratch_operands = 3 : i64, tpu.core_type = #tpu.core_type<tc>, window_params = [{transform_indices = @transform_0, window_bounds = array<i64: 1, 256, 128>}, {transform_indices = @transform_1, window_bounds = array<i64: 1, 1, 256, 128>}, {transform_indices = @transform_2, window_bounds = array<i64: 1, 1, 256, 128>}, {transform_indices = @transform_3, window_bounds = array<i64: 1, 1, 256, 128>}, {pipeline_mode = #tpu.pipeline_mode<synchronous>, transform_indices = @transform_4, window_bounds = array<i64: 128, 128>}, {pipeline_mode = #tpu.pipeline_mode<synchronous>, transform_indices = @transform_5, window_bounds = array<i64: 1, 128>}, {transform_indices = @transform_6, window_bounds = array<i64: 1, 256, 128>}]} {
    %c0_i32 = arith.constant 0 : i32
    %0 = arith.cmpi eq, %arg2, %c0_i32 : i32
    %1 = arith.extui %0 : i1 to i32
    %c0_i32_0 = arith.constant 0 : i32
    %2 = arith.cmpi ne, %1, %c0_i32_0 : i32
    scf.if %2 {
      %cst_33 = arith.constant -1.000000e+30 : f32
      %42 = vector.broadcast %cst_33 : f32 to vector<1x256x1xf32>
      %c0_34 = arith.constant 0 : index
      %c0_35 = arith.constant 0 : index
      %c0_36 = arith.constant 0 : index
      %43 = vector.load %arg10[%c0_34, %c0_35, %c0_36] : memref<1x256x1xf32, #tpu.memory_space<vmem>>, vector<1x256x1xf32>
      tpu.vector_store %arg10[%c0_34, %c0_35, %c0_36], %42 {strides = array<i32>} : memref<1x256x1xf32, #tpu.memory_space<vmem>>, vector<1x256x1xf32>,
      %cst_37 = arith.constant 0.000000e+00 : f32
      %44 = vector.broadcast %cst_37 : f32 to vector<1x256x1xf32>
      %c0_38 = arith.constant 0 : index
      %c0_39 = arith.constant 0 : index
      %c0_40 = arith.constant 0 : index
      %45 = vector.load %arg11[%c0_38, %c0_39, %c0_40] : memref<1x256x1xf32, #tpu.memory_space<vmem>>, vector<1x256x1xf32>
      tpu.vector_store %arg11[%c0_38, %c0_39, %c0_40], %44 {strides = array<i32>} : memref<1x256x1xf32, #tpu.memory_space<vmem>>, vector<1x256x1xf32>,
      %cst_41 = arith.constant 0.000000e+00 : f32
      %46 = vector.broadcast %cst_41 : f32 to vector<256x128xf32>
      %c0_42 = arith.constant 0 : index
      %c0_43 = arith.constant 0 : index
      %47 = vector.load %arg12[%c0_42, %c0_43] : memref<256x128xf32, #tpu.memory_space<vmem>>, vector<256x128xf32>
      tpu.vector_store %arg12[%c0_42, %c0_43], %46 {strides = array<i32>} : memref<256x128xf32, #tpu.memory_space<vmem>>, vector<256x128xf32>,
    } else {
    }
    %c0 = arith.constant 0 : index
    %c0_1 = arith.constant 0 : index
    %c0_2 = arith.constant 0 : index
    %c0_3 = arith.constant 0 : index
    %3 = vector.load %arg4[%c0, %c0_1, %c0_2, %c0_3] : memref<1x1x256x128xbf16, #tpu.memory_space<vmem>>, vector<1x1x256x128xbf16>
    %4 = vector.shape_cast %3 : vector<1x1x256x128xbf16> to vector<256x128xbf16>
    %c0_4 = arith.constant 0 : index
    %c0_5 = arith.constant 0 : index
    %c0_6 = arith.constant 0 : index
    %c0_7 = arith.constant 0 : index
    %5 = vector.load %arg5[%c0_4, %c0_5, %c0_6, %c0_7] : memref<1x1x256x128xbf16, #tpu.memory_space<vmem>>, vector<1x1x256x128xbf16>
    %6 = vector.shape_cast %5 : vector<1x1x256x128xbf16> to vector<256x128xbf16>
    %c0_8 = arith.constant 0 : index
    %c0_9 = arith.constant 0 : index
    %c0_10 = arith.constant 0 : index
    %c0_11 = arith.constant 0 : index
    %7 = vector.load %arg6[%c0_8, %c0_9, %c0_10, %c0_11] : memref<1x1x256x128xbf16, #tpu.memory_space<vmem>>, vector<1x1x256x128xbf16>
    %8 = vector.shape_cast %7 : vector<1x1x256x128xbf16> to vector<256x128xbf16>
    %cst = arith.constant dense<0.000000e+00> : vector<256x256xf32>
    %9 = tpu.matmul %4, %6, %cst {dimension_numbers = #tpu.dot_dimension_numbers<[1], [1], [0], [0], [0, 0, 1, 0], [], []>} : vector<256x128xbf16>, vector<256x128xbf16>, vector<256x256xf32> -> vector<256x256xf32>
    %c0_12 = arith.constant 0 : index
    %c0_13 = arith.constant 0 : index
    %c0_14 = arith.constant 0 : index
    %10 = vector.load %arg10[%c0_12, %c0_13, %c0_14] : memref<1x256x1xf32, #tpu.memory_space<vmem>>, vector<1x256x1xf32>
    %11 = vector.shape_cast %10 : vector<1x256x1xf32> to vector<256x1xf32>
    %cst_15 = arith.constant dense<0xFF800000> : vector<256xf32>
    %12 = vector.multi_reduction <maximumf>, %9, %cst_15 [1] : vector<256x256xf32> to vector<256xf32>
    %13 = vector.shape_cast %12 : vector<256xf32> to vector<256x1xf32>
    %14 = arith.maximumf %11, %13 : vector<256x1xf32>
    %15 = arith.subf %11, %14 : vector<256x1xf32>
    %16 = math.exp %15 : vector<256x1xf32>
    %17 = vector.broadcast %14 : vector<256x1xf32> to vector<256x256xf32>
    %18 = arith.subf %9, %17 : vector<256x256xf32>
    %19 = math.exp %18 : vector<256x256xf32>
    %c0_16 = arith.constant 0 : index
    %c0_17 = arith.constant 0 : index
    %c0_18 = arith.constant 0 : index
    %20 = vector.load %arg11[%c0_16, %c0_17, %c0_18] : memref<1x256x1xf32, #tpu.memory_space<vmem>>, vector<1x256x1xf32>
    %21 = vector.shape_cast %20 : vector<1x256x1xf32> to vector<256x1xf32>
    %22 = arith.mulf %16, %21 : vector<256x1xf32>
    %cst_19 = arith.constant dense<0.000000e+00> : vector<256xf32>
    %23 = vector.multi_reduction <add>, %19, %cst_19 [1] : vector<256x256xf32> to vector<256xf32>
    %24 = vector.shape_cast %23 : vector<256xf32> to vector<256x1xf32>
    %25 = arith.addf %22, %24 : vector<256x1xf32>
    %c0_20 = arith.constant 0 : index
    %c0_21 = arith.constant 0 : index
    %c0_22 = arith.constant 0 : index
    %26 = vector.load %arg11[%c0_20, %c0_21, %c0_22] : memref<1x256x1xf32, #tpu.memory_space<vmem>>, vector<1x256x1xf32>
    %27 = vector.shape_cast %26 : vector<1x256x1xf32> to vector<256x1xf32>
    %28 = vector.shape_cast %25 : vector<256x1xf32> to vector<1x256x1xf32>
    tpu.vector_store %arg11[%c0_20, %c0_21, %c0_22], %28 {strides = array<i32>} : memref<1x256x1xf32, #tpu.memory_space<vmem>>, vector<1x256x1xf32>,
    %c0_23 = arith.constant 0 : index
    %c0_24 = arith.constant 0 : index
    %c0_25 = arith.constant 0 : index
    %29 = vector.load %arg10[%c0_23, %c0_24, %c0_25] : memref<1x256x1xf32, #tpu.memory_space<vmem>>, vector<1x256x1xf32>
    %30 = vector.shape_cast %29 : vector<1x256x1xf32> to vector<256x1xf32>
    %31 = vector.shape_cast %14 : vector<256x1xf32> to vector<1x256x1xf32>
    tpu.vector_store %arg10[%c0_23, %c0_24, %c0_25], %31 {strides = array<i32>} : memref<1x256x1xf32, #tpu.memory_space<vmem>>, vector<1x256x1xf32>,
    %c0_26 = arith.constant 0 : index
    %c0_27 = arith.constant 0 : index
    %32 = vector.load %arg12[%c0_26, %c0_27] : memref<256x128xf32, #tpu.memory_space<vmem>>, vector<256x128xf32>
    %33 = vector.broadcast %16 : vector<256x1xf32> to vector<256x128xf32>
    %34 = arith.mulf %33, %32 : vector<256x128xf32>
    %35 = arith.truncf %19 : vector<256x256xf32> to vector<256x256xbf16>
    %cst_28 = arith.constant dense<0.000000e+00> : vector<256x128xf32>
    %36 = tpu.matmul %35, %8, %cst_28 {dimension_numbers = #tpu.dot_dimension_numbers<[1], [0], [0], [1], [0, 0, 1, 1], [], []>} : vector<256x256xbf16>, vector<256x128xbf16>, vector<256x128xf32> -> vector<256x128xf32>
    %37 = arith.addf %34, %36 : vector<256x128xf32>
    %c0_29 = arith.constant 0 : index
    %c0_30 = arith.constant 0 : index
    %38 = vector.load %arg12[%c0_29, %c0_30] : memref<256x128xf32, #tpu.memory_space<vmem>>, vector<256x128xf32>
    tpu.vector_store %arg12[%c0_29, %c0_30], %37 {strides = array<i32>} : memref<256x128xf32, #tpu.memory_space<vmem>>, vector<256x128xf32>,
    %c0_i32_31 = arith.constant 0 : i32
    %39 = arith.cmpi eq, %arg2, %c0_i32_31 : i32
    %40 = arith.extui %39 : i1 to i32
    %c0_i32_32 = arith.constant 0 : i32
    %41 = arith.cmpi ne, %40, %c0_i32_32 : i32
    scf.if %41 {
      %c0_33 = arith.constant 0 : index
      %c0_34 = arith.constant 0 : index
      %c0_35 = arith.constant 0 : index
      %42 = vector.load %arg11[%c0_33, %c0_34, %c0_35] : memref<1x256x1xf32, #tpu.memory_space<vmem>>, vector<1x256x1xf32>
      %43 = vector.shape_cast %42 : vector<1x256x1xf32> to vector<256x1xf32>
      %44 = tpu.reciprocal %43 {approx = true} : vector<256x1xf32> -> vector<256x1xf32>
      %c0_36 = arith.constant 0 : index
      %c0_37 = arith.constant 0 : index
      %45 = vector.load %arg12[%c0_36, %c0_37] : memref<256x128xf32, #tpu.memory_space<vmem>>, vector<256x128xf32>
      %46 = vector.broadcast %44 : vector<256x1xf32> to vector<256x128xf32>
      %47 = arith.mulf %45, %46 : vector<256x128xf32>
      %c0_38 = arith.constant 0 : index
      %c0_39 = arith.constant 0 : index
      %48 = vector.load %arg12[%c0_38, %c0_39] : memref<256x128xf32, #tpu.memory_space<vmem>>, vector<256x128xf32>
      tpu.vector_store %arg12[%c0_38, %c0_39], %47 {strides = array<i32>} : memref<256x128xf32, #tpu.memory_space<vmem>>, vector<256x128xf32>,
      %c0_40 = arith.constant 0 : index
      %c0_41 = arith.constant 0 : index
      %49 = vector.load %arg12[%c0_40, %c0_41] : memref<256x128xf32, #tpu.memory_space<vmem>>, vector<256x128xf32>
      %50 = arith.truncf %49 : vector<256x128xf32> to vector<256x128xbf16>
      %c0_42 = arith.constant 0 : index
      %c0_43 = arith.constant 0 : index
      %51 = vector.load %arg7[%c0_42, %c0_43] : memref<128x128xbf16, #tpu.memory_space<vmem>>, vector<128x128xbf16>
      %cst_44 = arith.constant dense<0.000000e+00> : vector<256x128xf32>
      %52 = tpu.matmul %50, %51, %cst_44 {dimension_numbers = #tpu.dot_dimension_numbers<[1], [0], [0], [1], [0, 0, 1, 1], [], []>} : vector<256x128xbf16>, vector<128x128xbf16>, vector<256x128xf32> -> vector<256x128xf32>
      %c0_45 = arith.constant 0 : index
      %c0_46 = arith.constant 0 : index
      %c0_47 = arith.constant 0 : index
      %53 = vector.load %arg3[%c0_45, %c0_46, %c0_47] : memref<1x256x128xf32, #tpu.memory_space<vmem>>, vector<1x256x128xf32>
      %54 = vector.shape_cast %53 : vector<1x256x128xf32> to vector<256x128xf32>
      %55 = arith.addf %54, %52 : vector<256x128xf32>
      %c0_48 = arith.constant 0 : index
      %c0_49 = arith.constant 0 : index
      %56 = vector.load %arg8[%c0_48, %c0_49] : memref<1x128xf32, #tpu.memory_space<vmem>>, vector<1x128xf32>
      %57 = vector.broadcast %56 : vector<1x128xf32> to vector<256x128xf32>
      %58 = arith.addf %55, %57 : vector<256x128xf32>
      %c0_50 = arith.constant 0 : index
      %c0_51 = arith.constant 0 : index
      %c0_52 = arith.constant 0 : index
      %59 = vector.load %arg9[%c0_50, %c0_51, %c0_52] : memref<1x256x128xf32, #tpu.memory_space<vmem>>, vector<1x256x128xf32>
      %60 = vector.shape_cast %59 : vector<1x256x128xf32> to vector<256x128xf32>
      %61 = vector.shape_cast %58 : vector<256x128xf32> to vector<1x256x128xf32>
      tpu.vector_store %arg9[%c0_50, %c0_51, %c0_52], %61 {strides = array<i32>} : memref<1x256x128xf32, #tpu.memory_space<vmem>>, vector<1x256x128xf32>,
    } else {
    }
    return
  }
  func.func @transform_0(%arg0: i32, %arg1: i32, %arg2: i32) -> (i32, i32, i32) {
    %c0_i32 = arith.constant 0 : i32
    %c0_i32_0 = arith.constant 0 : i32
    return %arg0, %arg1, %c0_i32 : i32, i32, i32
  }
  func.func @transform_1(%arg0: i32, %arg1: i32, %arg2: i32) -> (i32, i32, i32, i32) {
    %c0_i32 = arith.constant 0 : i32
    %c0_i32_0 = arith.constant 0 : i32
    %c0_i32_1 = arith.constant 0 : i32
    return %arg0, %c0_i32, %arg1, %c0_i32_0 : i32, i32, i32, i32
  }
  func.func @transform_2(%arg0: i32, %arg1: i32, %arg2: i32) -> (i32, i32, i32, i32) {
    %c1_i32 = arith.constant 1 : i32
    %c0_i32 = arith.constant 0 : i32
    %c0_i32_0 = arith.constant 0 : i32
    return %arg0, %c1_i32, %arg2, %c0_i32 : i32, i32, i32, i32
  }
  func.func @transform_3(%arg0: i32, %arg1: i32, %arg2: i32) -> (i32, i32, i32, i32) {
    %c2_i32 = arith.constant 2 : i32
    %c0_i32 = arith.constant 0 : i32
    %c0_i32_0 = arith.constant 0 : i32
    return %arg0, %c2_i32, %arg2, %c0_i32 : i32, i32, i32, i32
  }
  func.func @transform_4(%arg0: i32, %arg1: i32, %arg2: i32) -> (i32, i32) {
    %c0_i32 = arith.constant 0 : i32
    %c0_i32_0 = arith.constant 0 : i32
    %c0_i32_1 = arith.constant 0 : i32
    return %c0_i32, %c0_i32_0 : i32, i32
  }
  func.func @transform_5(%arg0: i32, %arg1: i32, %arg2: i32) -> (i32, i32) {
    %c0_i32 = arith.constant 0 : i32
    %c0_i32_0 = arith.constant 0 : i32
    %c0_i32_1 = arith.constant 0 : i32
    return %c0_i32, %c0_i32_0 : i32, i32
  }
  func.func @transform_6(%arg0: i32, %arg1: i32, %arg2: i32) -> (i32, i32, i32) {
    %c0_i32 = arith.constant 0 : i32
    %c0_i32_0 = arith.constant 0 : i32
    return %arg0, %arg1, %c0_i32 : i32, i32, i32
  }
}

</mosaic_0001>

<llo_original>
// kernel: self_attention_2d.2
$region0: #{self_attention_2d.2}
  #allocation0 [shape = 'u32[]', space=smem, size = 0x4, offset = 0x4, fixed_abs, tag = 'smem constant byte address 0x4 - core index']
  #allocation1 [shape = 'u32[72,128]{1,0:T(1,128)}', space=vmem, size = 0x9000, scoped, tag = 'internal scratch']
  %s0 = inlined_call_operand.vmem [shape: f32[2,256,128], index: 0, kind: input, shape index: {}]
  %s1 = inlined_call_operand.vmem [shape: f32[1,128], index: 1, kind: input, shape index: {}]
  %s2 = inlined_call_operand.vmem [shape: f32[1,128], index: 2, kind: input, shape index: {}]
  %s3 = inlined_call_operand.vmem [shape: bf16[128,384], index: 3, kind: input, shape index: {}]
  %s4 = inlined_call_operand.vmem [shape: f32[1,384], index: 4, kind: input, shape index: {}]
  %s5 = inlined_call_operand.vmem [shape: bf16[2,3,256,128], index: 5, kind: output, shape index: {}]
  %s6 = sld [smem:[#allocation0]]
  $region53: #{self_attention_2d.2} parent=0
    _
  %s8 = ssub.s32 1, %s6
  %s9 = scalar_select 0, %s8, %s6
  loop: start=0, step=1, limit=4
  $region2: #{self_attention_2d.2} parent=0 // loop_pre_header
    _
  $region3: #{self_attention_2d.2} parent=0 // loop_header
    %s11 = sphi 0, %s15
    %p12 = scmp.ge.s32.totalorder %s11, 4
    %s21 = sphi 0, %s23
    %s24 = sphi 0, %s21
    %s25 = sphi 0, %s24
    %s41 = sphi 0, %s25
    %s45 = sphi 0, %s45
    %s47 = sphi 0, %s45
    %s48 = sphi 0, %s47
    %s62 = sphi 0, %s48
    %s66 = sphi 0, %s66
    %s68 = sphi 0, %s66
    %s69 = sphi 0, %s68
    %s83 = sphi 0, %s69
    %s87 = sphi 0, %s87
    %s89 = sphi 0, %s87
    %s90 = sphi 0, %s89
    %s104 = sphi 0, %s90
    %s108 = sphi 0, %s108
    %s110 = sphi 0, %s108
    %s111 = sphi 0, %s110
    %s125 = sphi 0, %s111
    %s131 = sphi 0, %s133
    %s134 = sphi 0, %s131
    %s135 = sphi 0, %s134
    %s151 = sphi 0, %s135
  $region4: #{self_attention_2d.2} parent=0 // loop_header_branch
    %14 = sbr.rel (%p12) target = $region8
  $region5: #{self_attention_2d.2} parent=0 // loop_body
    %s16 = ssub.s32 %s11, 1
    %s17 = ssub.s32 %s11, 2
    %s18 = sadd.s32 %s11, 1
    %s19 = ssub.s32 %s11, %s18
    %p20 = scmp.eq.s32.totalorder %s19, 0
    %s22 = sadd.s32 %s21, 1
    %s23 = scalar_select %p20, %s21, %s22
    %p26 = pneg %p20
    %p27 = scmp.eq.s32.totalorder %s11, 1
    %p28 = por %p26, %p27
    %p29 = scmp.ne.s32.totalorder %s21, %s24
    %p30 = scmp.eq.s32.totalorder %s11, 0
    %p31 = por %p29, %p30
    %p32 = scmp.ne.s32.totalorder %s21, %s24
    %p33 = scmp.eq.s32.totalorder %s16, 1
    %p34 = por %p32, %p33
    %p35 = scmp.ne.s32.totalorder %s24, %s25
    %p36 = scmp.eq.s32.totalorder %s16, 0
    %p37 = por %p35, %p36
    %p38 = scmp.ne.s32.totalorder %s24, %s25
    %p39 = scmp.eq.s32.totalorder %s17, 1
    %p40 = por %p38, %p39
    %p42 = scmp.ne.s32.totalorder %s25, %s41
    %p43 = scmp.eq.s32.totalorder %s17, 0
    %p44 = por %p42, %p43
    %s46 = sadd.s32 %s45, 1
    %p49 = scmp.eq.s32.totalorder %s11, 1
    %p50 = scmp.ne.s32.totalorder %s45, %s47
    %p51 = scmp.eq.s32.totalorder %s11, 0
    %p52 = por %p50, %p51
    %p53 = scmp.ne.s32.totalorder %s45, %s47
    %p54 = scmp.eq.s32.totalorder %s16, 1
    %p55 = por %p53, %p54
    %p56 = scmp.ne.s32.totalorder %s47, %s48
    %p57 = scmp.eq.s32.totalorder %s16, 0
    %p58 = por %p56, %p57
    %p59 = scmp.ne.s32.totalorder %s47, %s48
    %p60 = scmp.eq.s32.totalorder %s17, 1
    %p61 = por %p59, %p60
    %p63 = scmp.ne.s32.totalorder %s48, %s62
    %p64 = scmp.eq.s32.totalorder %s17, 0
    %p65 = por %p63, %p64
    %s67 = sadd.s32 %s66, 1
    %p70 = scmp.eq.s32.totalorder %s11, 1
    %p71 = scmp.ne.s32.totalorder %s66, %s68
    %p72 = scmp.eq.s32.totalorder %s11, 0
    %p73 = por %p71, %p72
    %p74 = scmp.ne.s32.totalorder %s66, %s68
    %p75 = scmp.eq.s32.totalorder %s16, 1
    %p76 = por %p74, %p75
    %p77 = scmp.ne.s32.totalorder %s68, %s69
    %p78 = scmp.eq.s32.totalorder %s16, 0
    %p79 = por %p77, %p78
    %p80 = scmp.ne.s32.totalorder %s68, %s69
    %p81 = scmp.eq.s32.totalorder %s17, 1
    %p82 = por %p80, %p81
    %p84 = scmp.ne.s32.totalorder %s69, %s83
    %p85 = scmp.eq.s32.totalorder %s17, 0
    %p86 = por %p84, %p85
    %s88 = sadd.s32 %s87, 1
    %p91 = scmp.eq.s32.totalorder %s11, 1
    %p92 = scmp.ne.s32.totalorder %s87, %s89
    %p93 = scmp.eq.s32.totalorder %s11, 0
    %p94 = por %p92, %p93
    %p95 = scmp.ne.s32.totalorder %s87, %s89
    %p96 = scmp.eq.s32.totalorder %s16, 1
    %p97 = por %p95, %p96
    %p98 = scmp.ne.s32.totalorder %s89, %s90
    %p99 = scmp.eq.s32.totalorder %s16, 0
    %p100 = por %p98, %p99
    %p101 = scmp.ne.s32.totalorder %s89, %s90
    %p102 = scmp.eq.s32.totalorder %s17, 1
    %p103 = por %p101, %p102
    %p105 = scmp.ne.s32.totalorder %s90, %s104
    %p106 = scmp.eq.s32.totalorder %s17, 0
    %p107 = por %p105, %p106
    %s109 = sadd.s32 %s108, 1
    %p112 = scmp.eq.s32.totalorder %s11, 1
    %p113 = scmp.ne.s32.totalorder %s108, %s110
    %p114 = scmp.eq.s32.totalorder %s11, 0
    %p115 = por %p113, %p114
    %p116 = scmp.ne.s32.totalorder %s108, %s110
    %p117 = scmp.eq.s32.totalorder %s16, 1
    %p118 = por %p116, %p117
    %p119 = scmp.ne.s32.totalorder %s110, %s111
    %p120 = scmp.eq.s32.totalorder %s16, 0
    %p121 = por %p119, %p120
    %p122 = scmp.ne.s32.totalorder %s110, %s111
    %p123 = scmp.eq.s32.totalorder %s17, 1
    %p124 = por %p122, %p123
    %p126 = scmp.ne.s32.totalorder %s111, %s125
    %p127 = scmp.eq.s32.totalorder %s17, 0
    %p128 = por %p126, %p127
    %s129 = ssub.s32 %s11, %s18
    %p130 = scmp.eq.s32.totalorder %s129, 0
    %s132 = sadd.s32 %s131, 1
    %s133 = scalar_select %p130, %s131, %s132
    %p136 = pneg %p130
    %p137 = scmp.eq.s32.totalorder %s11, 1
    %p138 = por %p136, %p137
    %p139 = scmp.ne.s32.totalorder %s131, %s134
    %p140 = scmp.eq.s32.totalorder %s11, 0
    %p141 = por %p139, %p140
    %p142 = scmp.ne.s32.totalorder %s131, %s134
    %p143 = scmp.eq.s32.totalorder %s16, 1
    %p144 = por %p142, %p143
    %p145 = scmp.ne.s32.totalorder %s134, %s135
    %p146 = scmp.eq.s32.totalorder %s16, 0
    %p147 = por %p145, %p146
    %p148 = scmp.ne.s32.totalorder %s134, %s135
    %p149 = scmp.eq.s32.totalorder %s17, 1
    %p150 = por %p148, %p149
    %p152 = scmp.ne.s32.totalorder %s135, %s151
    %p153 = scmp.eq.s32.totalorder %s17, 0
    %p154 = por %p152, %p153
    %p155 = scmp.le.s32.totalorder 1, %s11
    %p156 = scmp.lt.s32.totalorder %s11, 3
    %p157 = pnand %p155, %p156
    %p158 = pneg %p157
    // Predicated region
    $region9: #{self_attention_2d.2} parent=5 // pred_check
      _
    $region10: #{self_attention_2d.2} parent=5 // pred_check_branch
      %160 = sbr.rel (%p157) target = $region12
    $region11: #{self_attention_2d.2} parent=5 // pred_region
      %s161 = ssub.s32 %s11, 1
      // Predicated region
      $region13: #{self_attention_2d.2} parent=11 // pred_check
        %p162 = pneg %p58
      $region14: #{self_attention_2d.2} parent=11 // pred_check_branch
        %164 = sbr.rel (%p162) target = $region16
      $region15: #{self_attention_2d.2} parent=11 // pred_region
        _
      $region16: #{self_attention_2d.2} parent=11 // pred_fallthru
        _
      // Predicated region
      $region17: #{self_attention_2d.2} parent=11 // pred_check
        %p165 = pneg %p79
      $region18: #{self_attention_2d.2} parent=11 // pred_check_branch
        %167 = sbr.rel (%p165) target = $region20
      $region19: #{self_attention_2d.2} parent=11 // pred_region
        _
      $region20: #{self_attention_2d.2} parent=11 // pred_fallthru
        _
      // Predicated region
      $region21: #{self_attention_2d.2} parent=11 // pred_check
        %p168 = pneg %p100
      $region22: #{self_attention_2d.2} parent=11 // pred_check_branch
        %170 = sbr.rel (%p168) target = $region24
      $region23: #{self_attention_2d.2} parent=11 // pred_region
        _
      $region24: #{self_attention_2d.2} parent=11 // pred_fallthru
        _
      // Predicated region
      $region25: #{self_attention_2d.2} parent=11 // pred_check
        %p171 = pneg %p121
      $region26: #{self_attention_2d.2} parent=11 // pred_check_branch
        %173 = sbr.rel (%p171) target = $region28
      $region27: #{self_attention_2d.2} parent=11 // pred_region
        _
      $region28: #{self_attention_2d.2} parent=11 // pred_fallthru
        _
    $region12: #{self_attention_2d.2} parent=5 // pred_fallthru
      _
    %p174 = scmp.lt.s32.totalorder %s11, 2
    // Predicated region
    $region29: #{self_attention_2d.2} parent=5 // pred_check
      %p175 = pneg %p174
    $region30: #{self_attention_2d.2} parent=5 // pred_check_branch
      %177 = sbr.rel (%p175) target = $region32
    $region31: #{self_attention_2d.2} parent=5 // pred_region
      // Predicated region
      $region33: #{self_attention_2d.2} parent=31 // pred_check
        %p178 = pneg %p31
      $region34: #{self_attention_2d.2} parent=31 // pred_check_branch
        %180 = sbr.rel (%p178) target = $region36
      $region35: #{self_attention_2d.2} parent=31 // pred_region
        %p181 = scmp.lt.s32.totalorder %s11, 1
        %s182 = scalar_select %p181, %s11, 1
        %s183 = smul.addr %s182, 32
        %s184 = smul.addr %s183, 8
        %s185 = scalar_lea.vmem %s0, %s184
      $region36: #{self_attention_2d.2} parent=31 // pred_fallthru
        _
    $region32: #{self_attention_2d.2} parent=5 // pred_fallthru
      _
    %p186 = scmp.le.s32.totalorder 1, %s11
    %p187 = scmp.lt.s32.totalorder %s11, 3
    %p188 = pnand %p186, %p187
    %p189 = pneg %p188
    // Predicated region
    $region37: #{self_attention_2d.2} parent=5 // pred_check
      _
    $region38: #{self_attention_2d.2} parent=5 // pred_check_branch
      %191 = sbr.rel (%p188) target = $region40
    $region39: #{self_attention_2d.2} parent=5 // pred_region
      %s192 = ssub.s32 %s11, 1
      %p193 = scmp.lt.s32.totalorder %s16, 1
      %s194 = scalar_select %p193, %s16, 1
      %s195 = smul.addr %s194, 32
      %s196 = smul.addr %s195, 8
      %s197 = scalar_lea.vmem %s0, %s196
      %p198 = pneg %p37
      %p199 = pneg %p34
      %p200 = pneg %p58
      %p201 = pneg %p55
      %p202 = pneg %p79
      %p203 = pneg %p76
      %p204 = pneg %p100
      %p205 = pneg %p97
      %p206 = pneg %p121
      %p207 = pneg %p118
      %p208 = pneg %p147
      %p209 = pneg %p144
      %p210 = scmp.lt.s32.totalorder %s16, 1
      %s211 = scalar_select %p210, %s16, 1
      %s212 = smul.addr %s211, 96
      %s213 = smul.addr %s212, 4
      %s214 = scalar_lea.vmem %s5, %s213
      %p215 = scmp.lt.s32.totalorder %s16, 1
      %s216 = scalar_select %p215, %s16, 1
      %s217 = smul.addr %s216, 32
      %s218 = smul.addr %s217, 8
      %s219 = scalar_lea.vmem %s0, %s218
      %p220 = scmp.lt.s32.totalorder %s16, 1
      %s221 = scalar_select %p220, %s16, 1
      %s222 = smul.addr %s221, 96
      %s223 = smul.addr %s222, 4
      %s224 = scalar_lea.vmem %s5, %s223
      %v225 = vld [vmem:[%s219] sm:$0xff]
      %v226 = vld [vmem:[%s219 + $0x8] sm:$0xff]
      %v227 = vld [vmem:[%s219 + $0x10] sm:$0xff]
      %v228 = vld [vmem:[%s219 + $0x18] sm:$0xff]
      %v229 = vld [vmem:[%s219 + $0x20] sm:$0xff]
      %v230 = vld [vmem:[%s219 + $0x28] sm:$0xff]
      %v231 = vld [vmem:[%s219 + $0x30] sm:$0xff]
      %v232 = vld [vmem:[%s219 + $0x38] sm:$0xff]
      %v233 = vld [vmem:[%s219 + $0x40] sm:$0xff]
      %v234 = vld [vmem:[%s219 + $0x48] sm:$0xff]
      %v235 = vld [vmem:[%s219 + $0x50] sm:$0xff]
      %v236 = vld [vmem:[%s219 + $0x58] sm:$0xff]
      %v237 = vld [vmem:[%s219 + $0x60] sm:$0xff]
      %v238 = vld [vmem:[%s219 + $0x68] sm:$0xff]
      %v239 = vld [vmem:[%s219 + $0x70] sm:$0xff]
      %v240 = vld [vmem:[%s219 + $0x78] sm:$0xff]
      %v241 = vld [vmem:[%s219 + $0x80] sm:$0xff]
      %v242 = vld [vmem:[%s219 + $0x88] sm:$0xff]
      %v243 = vld [vmem:[%s219 + $0x90] sm:$0xff]
      %v244 = vld [vmem:[%s219 + $0x98] sm:$0xff]
      %v245 = vld [vmem:[%s219 + $0xa0] sm:$0xff]
      %v246 = vld [vmem:[%s219 + $0xa8] sm:$0xff]
      %v247 = vld [vmem:[%s219 + $0xb0] sm:$0xff]
      %v248 = vld [vmem:[%s219 + $0xb8] sm:$0xff]
      %v249 = vld [vmem:[%s219 + $0xc0] sm:$0xff]
      %v250 = vld [vmem:[%s219 + $0xc8] sm:$0xff]
      %v251 = vld [vmem:[%s219 + $0xd0] sm:$0xff]
      %v252 = vld [vmem:[%s219 + $0xd8] sm:$0xff]
      %v253 = vld [vmem:[%s219 + $0xe0] sm:$0xff]
      %v254 = vld [vmem:[%s219 + $0xe8] sm:$0xff]
      %v255 = vld [vmem:[%s219 + $0xf0] sm:$0xff]
      %v256 = vld [vmem:[%s219 + $0xf8] sm:$0xff]
      %v257 = vadd.f32 %v225, %v226
      %v258 = vadd.f32 %v257, %v227
      %v259 = vadd.f32 %v258, %v228
      %v260 = vadd.f32 %v259, %v229
      %v261 = vadd.f32 %v260, %v230
      %v262 = vadd.f32 %v261, %v231
      %v263 = vadd.f32 %v262, %v232
      %v264 = vadd.f32 %v263, %v233
      %v265 = vadd.f32 %v264, %v234
      %v266 = vadd.f32 %v265, %v235
      %v267 = vadd.f32 %v266, %v236
      %v268 = vadd.f32 %v267, %v237
      %v269 = vadd.f32 %v268, %v238
      %v270 = vadd.f32 %v269, %v239
      %v271 = vadd.f32 %v270, %v240
      %v272 = vadd.f32 %v271, %v241
      %v273 = vadd.f32 %v272, %v242
      %v274 = vadd.f32 %v273, %v243
      %v275 = vadd.f32 %v274, %v244
      %v276 = vadd.f32 %v275, %v245
      %v277 = vadd.f32 %v276, %v246
      %v278 = vadd.f32 %v277, %v247
      %v279 = vadd.f32 %v278, %v248
      %v280 = vadd.f32 %v279, %v249
      %v281 = vadd.f32 %v280, %v250
      %v282 = vadd.f32 %v281, %v251
      %v283 = vadd.f32 %v282, %v252
      %v284 = vadd.f32 %v283, %v253
      %v285 = vadd.f32 %v284, %v254
      %v286 = vadd.f32 %v285, %v255
      %v287 = vadd.f32 %v286, %v256
      %288 = vadd.xlane.f32.xlu0 %v287
      %v289 = vpop.xlane.xlu0 %288
      %v290 = vrot.slane %v289, 4
      %v291 = vadd.f32 %v289, %v290
      %v292 = vrot.slane %v291, 2
      %v293 = vadd.f32 %v291, %v292
      %v294 = vrot.slane %v293, 1
      %v295 = vadd.f32 %v293, %v294
      %s296 = vtos %v295
      %v297 = vmul.f32 %v225, %v225
      %v298 = vmul.f32 %v226, %v226
      %v299 = vmul.f32 %v227, %v227
      %v300 = vmul.f32 %v228, %v228
      %v301 = vmul.f32 %v229, %v229
      %v302 = vmul.f32 %v230, %v230
      %v303 = vmul.f32 %v231, %v231
      %v304 = vmul.f32 %v232, %v232
      %v305 = vmul.f32 %v233, %v233
      %v306 = vmul.f32 %v234, %v234
      %v307 = vmul.f32 %v235, %v235
      %v308 = vmul.f32 %v236, %v236
      %v309 = vmul.f32 %v237, %v237
      %v310 = vmul.f32 %v238, %v238
      %v311 = vmul.f32 %v239, %v239
      %v312 = vmul.f32 %v240, %v240
      %v313 = vmul.f32 %v241, %v241
      %v314 = vmul.f32 %v242, %v242
      %v315 = vmul.f32 %v243, %v243
      %v316 = vmul.f32 %v244, %v244
      %v317 = vmul.f32 %v245, %v245
      %v318 = vmul.f32 %v246, %v246
      %v319 = vmul.f32 %v247, %v247
      %v320 = vmul.f32 %v248, %v248
      %v321 = vmul.f32 %v249, %v249
      %v322 = vmul.f32 %v250, %v250
      %v323 = vmul.f32 %v251, %v251
      %v324 = vmul.f32 %v252, %v252
      %v325 = vmul.f32 %v253, %v253
      %v326 = vmul.f32 %v254, %v254
      %v327 = vmul.f32 %v255, %v255
      %v328 = vmul.f32 %v256, %v256
      %v329 = vadd.f32 %v297, %v298
      %v330 = vadd.f32 %v329, %v299
      %v331 = vadd.f32 %v330, %v300
      %v332 = vadd.f32 %v331, %v301
      %v333 = vadd.f32 %v332, %v302
      %v334 = vadd.f32 %v333, %v303
      %v335 = vadd.f32 %v334, %v304
      %v336 = vadd.f32 %v335, %v305
      %v337 = vadd.f32 %v336, %v306
      %v338 = vadd.f32 %v337, %v307
      %v339 = vadd.f32 %v338, %v308
      %v340 = vadd.f32 %v339, %v309
      %v341 = vadd.f32 %v340, %v310
      %v342 = vadd.f32 %v341, %v311
      %v343 = vadd.f32 %v342, %v312
      %v344 = vadd.f32 %v343, %v313
      %v345 = vadd.f32 %v344, %v314
      %v346 = vadd.f32 %v345, %v315
      %v347 = vadd.f32 %v346, %v316
      %v348 = vadd.f32 %v347, %v317
      %v349 = vadd.f32 %v348, %v318
      %v350 = vadd.f32 %v349, %v319
      %v351 = vadd.f32 %v350, %v320
      %v352 = vadd.f32 %v351, %v321
      %v353 = vadd.f32 %v352, %v322
      %v354 = vadd.f32 %v353, %v323
      %v355 = vadd.f32 %v354, %v324
      %v356 = vadd.f32 %v355, %v325
      %v357 = vadd.f32 %v356, %v326
      %v358 = vadd.f32 %v357, %v327
      %v359 = vadd.f32 %v358, %v328
      %360 = vadd.xlane.f32.xlu0 %v359
      %v361 = vpop.xlane.xlu0 %360
      %v362 = vrot.slane %v361, 4
      %v363 = vadd.f32 %v361, %v362
      %v364 = vrot.slane %v363, 2
      %v365 = vadd.f32 %v363, %v364
      %v366 = vrot.slane %v365, 1
      %v367 = vadd.f32 %v365, %v366
      %s368 = vtos %v367
      %s369 = smul.f32 %s296, 0.0009765625
      %s370 = smul.f32 %s368, 0.0009765625
      %s371 = smul.f32 %s369, %s369
      %s372 = ssub.f32 %s370, %s371
      %v373 = vstv %s369
      %v374 = vsub.f32 %v225, %v373
      %v375 = vsub.f32 %v226, %v373
      %v376 = vsub.f32 %v227, %v373
      %v377 = vsub.f32 %v228, %v373
      %v378 = vsub.f32 %v229, %v373
      %v379 = vsub.f32 %v230, %v373
      %v380 = vsub.f32 %v231, %v373
      %v381 = vsub.f32 %v232, %v373
      %v382 = vsub.f32 %v233, %v373
      %v383 = vsub.f32 %v234, %v373
      %v384 = vsub.f32 %v235, %v373
      %v385 = vsub.f32 %v236, %v373
      %v386 = vsub.f32 %v237, %v373
      %v387 = vsub.f32 %v238, %v373
      %v388 = vsub.f32 %v239, %v373
      %v389 = vsub.f32 %v240, %v373
      %v390 = vsub.f32 %v241, %v373
      %v391 = vsub.f32 %v242, %v373
      %v392 = vsub.f32 %v243, %v373
      %v393 = vsub.f32 %v244, %v373
      %v394 = vsub.f32 %v245, %v373
      %v395 = vsub.f32 %v246, %v373
      %v396 = vsub.f32 %v247, %v373
      %v397 = vsub.f32 %v248, %v373
      %v398 = vsub.f32 %v249, %v373
      %v399 = vsub.f32 %v250, %v373
      %v400 = vsub.f32 %v251, %v373
      %v401 = vsub.f32 %v252, %v373
      %v402 = vsub.f32 %v253, %v373
      %v403 = vsub.f32 %v254, %v373
      %v404 = vsub.f32 %v255, %v373
      %v405 = vsub.f32 %v256, %v373
      %s406 = sadd.f32 %s372, 1e-05
      %v407 = vstv %s406
      %v408 = vrsqrt.pop %v407
      %v409 = vmul.f32 %v408, %v407
      %v410 = vmul.f32 %v409, %v408
      %v411 = vmul.f32 0.5, %v410
      %v412 = vsub.f32 1.5, %v411
      %v413 = vmul.f32 %v408, %v412
      %vm414 = vweird.f32 %v407
      %vm415 = vweird.f32 %v408
      %vm416 = vmor %vm414, %vm415
      %v417 = vsel %vm416, %v408, %v413
      %s418 = vtos %v417
      %v419 = vstv %s418
      %v420 = vmul.f32 %v374, %v419
      %v421 = vmul.f32 %v375, %v419
      %v422 = vmul.f32 %v376, %v419
      %v423 = vmul.f32 %v377, %v419
      %v424 = vmul.f32 %v378, %v419
      %v425 = vmul.f32 %v379, %v419
      %v426 = vmul.f32 %v380, %v419
      %v427 = vmul.f32 %v381, %v419
      %v428 = vmul.f32 %v382, %v419
      %v429 = vmul.f32 %v383, %v419
      %v430 = vmul.f32 %v384, %v419
      %v431 = vmul.f32 %v385, %v419
      %v432 = vmul.f32 %v386, %v419
      %v433 = vmul.f32 %v387, %v419
      %v434 = vmul.f32 %v388, %v419
      %v435 = vmul.f32 %v389, %v419
      %v436 = vmul.f32 %v390, %v419
      %v437 = vmul.f32 %v391, %v419
      %v438 = vmul.f32 %v392, %v419
      %v439 = vmul.f32 %v393, %v419
      %v440 = vmul.f32 %v394, %v419
      %v441 = vmul.f32 %v395, %v419
      %v442 = vmul.f32 %v396, %v419
      %v443 = vmul.f32 %v397, %v419
      %v444 = vmul.f32 %v398, %v419
      %v445 = vmul.f32 %v399, %v419
      %v446 = vmul.f32 %v400, %v419
      %v447 = vmul.f32 %v401, %v419
      %v448 = vmul.f32 %v402, %v419
      %v449 = vmul.f32 %v403, %v419
      %v450 = vmul.f32 %v404, %v419
      %v451 = vmul.f32 %v405, %v419
      %v452 = vld [vmem:[%s1] sm:$0x1]
      %v454 = vperm.slane %v452, 0
      %v456 = vmul.f32 %v420, %v454
      %v457 = vmul.f32 %v421, %v454
      %v458 = vmul.f32 %v422, %v454
      %v459 = vmul.f32 %v423, %v454
      %v460 = vmul.f32 %v424, %v454
      %v461 = vmul.f32 %v425, %v454
      %v462 = vmul.f32 %v426, %v454
      %v463 = vmul.f32 %v427, %v454
      %v464 = vmul.f32 %v428, %v454
      %v465 = vmul.f32 %v429, %v454
      %v466 = vmul.f32 %v430, %v454
      %v467 = vmul.f32 %v431, %v454
      %v468 = vmul.f32 %v432, %v454
      %v469 = vmul.f32 %v433, %v454
      %v470 = vmul.f32 %v434, %v454
      %v471 = vmul.f32 %v435, %v454
      %v472 = vmul.f32 %v436, %v454
      %v473 = vmul.f32 %v437, %v454
      %v474 = vmul.f32 %v438, %v454
      %v475 = vmul.f32 %v439, %v454
      %v476 = vmul.f32 %v440, %v454
      %v477 = vmul.f32 %v441, %v454
      %v478 = vmul.f32 %v442, %v454
      %v479 = vmul.f32 %v443, %v454
      %v480 = vmul.f32 %v444, %v454
      %v481 = vmul.f32 %v445, %v454
      %v482 = vmul.f32 %v446, %v454
      %v483 = vmul.f32 %v447, %v454
      %v484 = vmul.f32 %v448, %v454
      %v485 = vmul.f32 %v449, %v454
      %v486 = vmul.f32 %v450, %v454
      %v487 = vmul.f32 %v451, %v454
      %v488 = vld [vmem:[%s2] sm:$0x1]
      %v490 = vperm.slane %v488, 0
      %v492 = vadd.f32 %v456, %v490
      %v493 = vadd.f32 %v457, %v490
      %v494 = vadd.f32 %v458, %v490
      %v495 = vadd.f32 %v459, %v490
      %v496 = vadd.f32 %v460, %v490
      %v497 = vadd.f32 %v461, %v490
      %v498 = vadd.f32 %v462, %v490
      %v499 = vadd.f32 %v463, %v490
      %v500 = vadd.f32 %v464, %v490
      %v501 = vadd.f32 %v465, %v490
      %v502 = vadd.f32 %v466, %v490
      %v503 = vadd.f32 %v467, %v490
      %v504 = vadd.f32 %v468, %v490
      %v505 = vadd.f32 %v469, %v490
      %v506 = vadd.f32 %v470, %v490
      %v507 = vadd.f32 %v471, %v490
      %v508 = vadd.f32 %v472, %v490
      %v509 = vadd.f32 %v473, %v490
      %v510 = vadd.f32 %v474, %v490
      %v511 = vadd.f32 %v475, %v490
      %v512 = vadd.f32 %v476, %v490
      %v513 = vadd.f32 %v477, %v490
      %v514 = vadd.f32 %v478, %v490
      %v515 = vadd.f32 %v479, %v490
      %v516 = vadd.f32 %v480, %v490
      %v517 = vadd.f32 %v481, %v490
      %v518 = vadd.f32 %v482, %v490
      %v519 = vadd.f32 %v483, %v490
      %v520 = vadd.f32 %v484, %v490
      %v521 = vadd.f32 %v485, %v490
      %v522 = vadd.f32 %v486, %v490
      %v523 = vadd.f32 %v487, %v490
      %v524 = vpack.c.bf16 %v493, %v492
      %v525 = vpack.c.bf16 %v495, %v494
      %v526 = vpack.c.bf16 %v497, %v496
      %v527 = vpack.c.bf16 %v499, %v498
      %v528 = vpack.c.bf16 %v501, %v500
      %v529 = vpack.c.bf16 %v503, %v502
      %v530 = vpack.c.bf16 %v505, %v504
      %v531 = vpack.c.bf16 %v507, %v506
      %v532 = vpack.c.bf16 %v509, %v508
      %v533 = vpack.c.bf16 %v511, %v510
      %v534 = vpack.c.bf16 %v513, %v512
      %v535 = vpack.c.bf16 %v515, %v514
      %v536 = vpack.c.bf16 %v517, %v516
      %v537 = vpack.c.bf16 %v519, %v518
      %v538 = vpack.c.bf16 %v521, %v520
      %v539 = vpack.c.bf16 %v523, %v522
      %v540 = vld [vmem:[%s3] sm:$0xff]
      %v541 = vld [vmem:[%s3 + $0x8] sm:$0xf]
      %v542 = vld [vmem:[%s3 + $0xc] sm:$0xff]
      %v543 = vld [vmem:[%s3 + $0x14] sm:$0xf]
      %v544 = vld [vmem:[%s3 + $0x18] sm:$0xff]
      %v545 = vld [vmem:[%s3 + $0x20] sm:$0xf]
      %v546 = vld [vmem:[%s3 + $0x24] sm:$0xff]
      %v547 = vld [vmem:[%s3 + $0x2c] sm:$0xf]
      %v548 = vld [vmem:[%s3 + $0x30] sm:$0xff]
      %v549 = vld [vmem:[%s3 + $0x38] sm:$0xf]
      %v550 = vld [vmem:[%s3 + $0x3c] sm:$0xff]
      %v551 = vld [vmem:[%s3 + $0x44] sm:$0xf]
      %v552 = vld [vmem:[%s3 + $0x48] sm:$0xff]
      %v553 = vld [vmem:[%s3 + $0x50] sm:$0xf]
      %v554 = vld [vmem:[%s3 + $0x54] sm:$0xff]
      %v555 = vld [vmem:[%s3 + $0x5c] sm:$0xf]
      %v556 = vld [vmem:[%s3 + $0x60] sm:$0xff]
      %v557 = vld [vmem:[%s3 + $0x68] sm:$0xf]
      %v558 = vld [vmem:[%s3 + $0x6c] sm:$0xff]
      %v559 = vld [vmem:[%s3 + $0x74] sm:$0xf]
      %v560 = vld [vmem:[%s3 + $0x78] sm:$0xff]
      %v561 = vld [vmem:[%s3 + $0x80] sm:$0xf]
      %v562 = vld [vmem:[%s3 + $0x84] sm:$0xff]
      %v563 = vld [vmem:[%s3 + $0x8c] sm:$0xf]
      %v564 = vld [vmem:[%s3 + $0x90] sm:$0xff]
      %v565 = vld [vmem:[%s3 + $0x98] sm:$0xf]
      %v566 = vld [vmem:[%s3 + $0x9c] sm:$0xff]
      %v567 = vld [vmem:[%s3 + $0xa4] sm:$0xf]
      %v568 = vld [vmem:[%s3 + $0xa8] sm:$0xff]
      %v569 = vld [vmem:[%s3 + $0xb0] sm:$0xf]
      %v570 = vld [vmem:[%s3 + $0xb4] sm:$0xff]
      %v571 = vld [vmem:[%s3 + $0xbc] sm:$0xf]
      %v572 = vld [vmem:[%s4] sm:$0x7]
      %v574 = vperm.slane %v572, 0
      %v575 = vperm.slane %v572, 1
      %v576 = vperm.slane %v572, 2
      %v612 = vunpack.c.l.b16 %v540
      %v613 = vunpack.c.h.b16 %v540
      %v614 = vunpack.c.l.b16 %v541
      %v615 = vunpack.c.l.b16 %v542
      %v616 = vunpack.c.h.b16 %v542
      %v617 = vunpack.c.l.b16 %v543
      %v618 = vunpack.c.l.b16 %v544
      %v619 = vunpack.c.h.b16 %v544
      %v620 = vunpack.c.l.b16 %v545
      %v621 = vunpack.c.l.b16 %v546
      %v622 = vunpack.c.h.b16 %v546
      %v623 = vunpack.c.l.b16 %v547
      %v624 = vunpack.c.l.b16 %v548
      %v625 = vunpack.c.h.b16 %v548
      %v626 = vunpack.c.l.b16 %v549
      %v627 = vunpack.c.l.b16 %v550
      %v628 = vunpack.c.h.b16 %v550
      %v629 = vunpack.c.l.b16 %v551
      %v630 = vunpack.c.l.b16 %v552
      %v631 = vunpack.c.h.b16 %v552
      %v632 = vunpack.c.l.b16 %v553
      %v633 = vunpack.c.l.b16 %v554
      %v634 = vunpack.c.h.b16 %v554
      %v635 = vunpack.c.l.b16 %v555
      %v636 = vunpack.c.l.b16 %v556
      %v637 = vunpack.c.h.b16 %v556
      %v638 = vunpack.c.l.b16 %v557
      %v639 = vunpack.c.l.b16 %v558
      %v640 = vunpack.c.h.b16 %v558
      %v641 = vunpack.c.l.b16 %v559
      %v642 = vunpack.c.l.b16 %v560
      %v643 = vunpack.c.h.b16 %v560
      %v644 = vunpack.c.l.b16 %v561
      %v645 = vunpack.c.l.b16 %v562
      %v646 = vunpack.c.h.b16 %v562
      %v647 = vunpack.c.l.b16 %v563
      %v648 = vunpack.c.l.b16 %v564
      %v649 = vunpack.c.h.b16 %v564
      %v650 = vunpack.c.l.b16 %v565
      %v651 = vunpack.c.l.b16 %v566
      %v652 = vunpack.c.h.b16 %v566
      %v653 = vunpack.c.l.b16 %v567
      %v654 = vunpack.c.l.b16 %v568
      %v655 = vunpack.c.h.b16 %v568
      %v656 = vunpack.c.l.b16 %v569
      %v657 = vunpack.c.l.b16 %v570
      %v658 = vunpack.c.h.b16 %v570
      %v659 = vunpack.c.l.b16 %v571
      %v660 = vpack.c.b16 %v615, %v612
      %v661 = vpack.c.b16 %v616, %v613
      %v662 = vpack.c.b16 %v617, %v614
      %v663 = vpack.c.b16 %v621, %v618
      %v664 = vpack.c.b16 %v622, %v619
      %v665 = vpack.c.b16 %v623, %v620
      %v666 = vpack.c.b16 %v627, %v624
      %v667 = vpack.c.b16 %v628, %v625
      %v668 = vpack.c.b16 %v629, %v626
      %v669 = vpack.c.b16 %v633, %v630
      %v670 = vpack.c.b16 %v634, %v631
      %v671 = vpack.c.b16 %v635, %v632
      %v672 = vpack.c.b16 %v639, %v636
      %v673 = vpack.c.b16 %v640, %v637
      %v674 = vpack.c.b16 %v641, %v638
      %v675 = vpack.c.b16 %v645, %v642
      %v676 = vpack.c.b16 %v646, %v643
      %v677 = vpack.c.b16 %v647, %v644
      %v678 = vpack.c.b16 %v651, %v648
      %v679 = vpack.c.b16 %v652, %v649
      %v680 = vpack.c.b16 %v653, %v650
      %v681 = vpack.c.b16 %v657, %v654
      %v682 = vpack.c.b16 %v658, %v655
      %v683 = vpack.c.b16 %v659, %v656
      %708 = vmatpush.bf16.msra.mxu0 %v681
      %709 = vmatpush.bf16.msra.mxu0 %v678
      %710 = vmatpush.bf16.msra.mxu0 %v675
      %711 = vmatpush.bf16.msra.mxu0 %v672
      %712 = vmatpush.bf16.msra.mxu0 %v669
      %713 = vmatpush.bf16.msra.mxu0 %v666
      %714 = vmatpush.bf16.msra.mxu0 %v663
      %715 = vmatpush.bf16.msra.mxu0 %v660
      %716 = vmatmul.bf16.gmra.mxu0 %v524
      %v717 = vpop.f32.mrf.mxu0
      %v718 = vadd.f32 %v574, %v717
      %v719 = vpop.f32.mrf.mxu0
      %v720 = vadd.f32 %v574, %v719
      %721 = vmatmul.bf16.gmra.mxu0 %v525
      %v722 = vpop.f32.mrf.mxu0
      %v723 = vadd.f32 %v574, %v722
      %v724 = vpop.f32.mrf.mxu0
      %v725 = vadd.f32 %v574, %v724
      %726 = vmatmul.bf16.gmra.mxu0 %v526
      %v727 = vpop.f32.mrf.mxu0
      %v728 = vadd.f32 %v574, %v727
      %v729 = vpop.f32.mrf.mxu0
      %v730 = vadd.f32 %v574, %v729
      %731 = vmatmul.bf16.gmra.mxu0 %v527
      %v732 = vpop.f32.mrf.mxu0
      %v733 = vadd.f32 %v574, %v732
      %v734 = vpop.f32.mrf.mxu0
      %v735 = vadd.f32 %v574, %v734
      %736 = vmatmul.bf16.gmra.mxu0 %v528
      %v737 = vpop.f32.mrf.mxu0
      %v738 = vadd.f32 %v574, %v737
      %v739 = vpop.f32.mrf.mxu0
      %v740 = vadd.f32 %v574, %v739
      %741 = vmatmul.bf16.gmra.mxu0 %v529
      %v742 = vpop.f32.mrf.mxu0
      %v743 = vadd.f32 %v574, %v742
      %v744 = vpop.f32.mrf.mxu0
      %v745 = vadd.f32 %v574, %v744
      %746 = vmatmul.bf16.gmra.mxu0 %v530
      %v747 = vpop.f32.mrf.mxu0
      %v748 = vadd.f32 %v574, %v747
      %v749 = vpop.f32.mrf.mxu0
      %v750 = vadd.f32 %v574, %v749
      %751 = vmatmul.bf16.gmra.mxu0 %v531
      %v752 = vpop.f32.mrf.mxu0
      %v753 = vadd.f32 %v574, %v752
      %v754 = vpop.f32.mrf.mxu0
      %v755 = vadd.f32 %v574, %v754
      %756 = vmatmul.bf16.gmra.mxu0 %v532
      %v757 = vpop.f32.mrf.mxu0
      %v758 = vadd.f32 %v574, %v757
      %v759 = vpop.f32.mrf.mxu0
      %v760 = vadd.f32 %v574, %v759
      %761 = vmatmul.bf16.gmra.mxu0 %v533
      %v762 = vpop.f32.mrf.mxu0
      %v763 = vadd.f32 %v574, %v762
      %v764 = vpop.f32.mrf.mxu0
      %v765 = vadd.f32 %v574, %v764
      %766 = vmatmul.bf16.gmra.mxu0 %v534
      %v767 = vpop.f32.mrf.mxu0
      %v768 = vadd.f32 %v574, %v767
      %v769 = vpop.f32.mrf.mxu0
      %v770 = vadd.f32 %v574, %v769
      %771 = vmatmul.bf16.gmra.mxu0 %v535
      %v772 = vpop.f32.mrf.mxu0
      %v773 = vadd.f32 %v574, %v772
      %v774 = vpop.f32.mrf.mxu0
      %v775 = vadd.f32 %v574, %v774
      %776 = vmatmul.bf16.gmra.mxu0 %v536
      %v777 = vpop.f32.mrf.mxu0
      %v778 = vadd.f32 %v574, %v777
      %v779 = vpop.f32.mrf.mxu0
      %v780 = vadd.f32 %v574, %v779
      %781 = vmatmul.bf16.gmra.mxu0 %v537
      %v782 = vpop.f32.mrf.mxu0
      %v783 = vadd.f32 %v574, %v782
      %v784 = vpop.f32.mrf.mxu0
      %v785 = vadd.f32 %v574, %v784
      %786 = vmatmul.bf16.gmra.mxu0 %v538
      %v787 = vpop.f32.mrf.mxu0
      %v788 = vadd.f32 %v574, %v787
      %v789 = vpop.f32.mrf.mxu0
      %v790 = vadd.f32 %v574, %v789
      %791 = vmatmul.bf16.gmra.mxu0 %v539
      %v792 = vpop.f32.mrf.mxu0
      %v793 = vadd.f32 %v574, %v792
      %v794 = vpop.f32.mrf.mxu0
      %v795 = vadd.f32 %v574, %v794
      %796 = vdwg.mxu0
      %797 = vmatpush.bf16.msra.mxu0 %v682
      %798 = vmatpush.bf16.msra.mxu0 %v679
      %799 = vmatpush.bf16.msra.mxu0 %v676
      %800 = vmatpush.bf16.msra.mxu0 %v673
      %801 = vmatpush.bf16.msra.mxu0 %v670
      %802 = vmatpush.bf16.msra.mxu0 %v667
      %803 = vmatpush.bf16.msra.mxu0 %v664
      %804 = vmatpush.bf16.msra.mxu0 %v661
      %805 = vmatmul.bf16.gmra.mxu0 %v524
      %v806 = vpop.f32.mrf.mxu0
      %v807 = vadd.f32 %v575, %v806
      %v808 = vpop.f32.mrf.mxu0
      %v809 = vadd.f32 %v575, %v808
      %810 = vmatmul.bf16.gmra.mxu0 %v525
      %v811 = vpop.f32.mrf.mxu0
      %v812 = vadd.f32 %v575, %v811
      %v813 = vpop.f32.mrf.mxu0
      %v814 = vadd.f32 %v575, %v813
      %815 = vmatmul.bf16.gmra.mxu0 %v526
      %v816 = vpop.f32.mrf.mxu0
      %v817 = vadd.f32 %v575, %v816
      %v818 = vpop.f32.mrf.mxu0
      %v819 = vadd.f32 %v575, %v818
      %820 = vmatmul.bf16.gmra.mxu0 %v527
      %v821 = vpop.f32.mrf.mxu0
      %v822 = vadd.f32 %v575, %v821
      %v823 = vpop.f32.mrf.mxu0
      %v824 = vadd.f32 %v575, %v823
      %825 = vmatmul.bf16.gmra.mxu0 %v528
      %v826 = vpop.f32.mrf.mxu0
      %v827 = vadd.f32 %v575, %v826
      %v828 = vpop.f32.mrf.mxu0
      %v829 = vadd.f32 %v575, %v828
      %830 = vmatmul.bf16.gmra.mxu0 %v529
      %v831 = vpop.f32.mrf.mxu0
      %v832 = vadd.f32 %v575, %v831
      %v833 = vpop.f32.mrf.mxu0
      %v834 = vadd.f32 %v575, %v833
      %835 = vmatmul.bf16.gmra.mxu0 %v530
      %v836 = vpop.f32.mrf.mxu0
      %v837 = vadd.f32 %v575, %v836
      %v838 = vpop.f32.mrf.mxu0
      %v839 = vadd.f32 %v575, %v838
      %840 = vmatmul.bf16.gmra.mxu0 %v531
      %v841 = vpop.f32.mrf.mxu0
      %v842 = vadd.f32 %v575, %v841
      %v843 = vpop.f32.mrf.mxu0
      %v844 = vadd.f32 %v575, %v843
      %845 = vmatmul.bf16.gmra.mxu0 %v532
      %v846 = vpop.f32.mrf.mxu0
      %v847 = vadd.f32 %v575, %v846
      %v848 = vpop.f32.mrf.mxu0
      %v849 = vadd.f32 %v575, %v848
      %850 = vmatmul.bf16.gmra.mxu0 %v533
      %v851 = vpop.f32.mrf.mxu0
      %v852 = vadd.f32 %v575, %v851
      %v853 = vpop.f32.mrf.mxu0
      %v854 = vadd.f32 %v575, %v853
      %855 = vmatmul.bf16.gmra.mxu0 %v534
      %v856 = vpop.f32.mrf.mxu0
      %v857 = vadd.f32 %v575, %v856
      %v858 = vpop.f32.mrf.mxu0
      %v859 = vadd.f32 %v575, %v858
      %860 = vmatmul.bf16.gmra.mxu0 %v535
      %v861 = vpop.f32.mrf.mxu0
      %v862 = vadd.f32 %v575, %v861
      %v863 = vpop.f32.mrf.mxu0
      %v864 = vadd.f32 %v575, %v863
      %865 = vmatmul.bf16.gmra.mxu0 %v536
      %v866 = vpop.f32.mrf.mxu0
      %v867 = vadd.f32 %v575, %v866
      %v868 = vpop.f32.mrf.mxu0
      %v869 = vadd.f32 %v575, %v868
      %870 = vmatmul.bf16.gmra.mxu0 %v537
      %v871 = vpop.f32.mrf.mxu0
      %v872 = vadd.f32 %v575, %v871
      %v873 = vpop.f32.mrf.mxu0
      %v874 = vadd.f32 %v575, %v873
      %875 = vmatmul.bf16.gmra.mxu0 %v538
      %v876 = vpop.f32.mrf.mxu0
      %v877 = vadd.f32 %v575, %v876
      %v878 = vpop.f32.mrf.mxu0
      %v879 = vadd.f32 %v575, %v878
      %880 = vmatmul.bf16.gmra.mxu0 %v539
      %v881 = vpop.f32.mrf.mxu0
      %v882 = vadd.f32 %v575, %v881
      %v883 = vpop.f32.mrf.mxu0
      %v884 = vadd.f32 %v575, %v883
      %885 = vdwg.mxu0
      %886 = vmatpush.bf16.msra.mxu0 %v683
      %887 = vmatpush.bf16.msra.mxu0 %v680
      %888 = vmatpush.bf16.msra.mxu0 %v677
      %889 = vmatpush.bf16.msra.mxu0 %v674
      %890 = vmatpush.bf16.msra.mxu0 %v671
      %891 = vmatpush.bf16.msra.mxu0 %v668
      %892 = vmatpush.bf16.msra.mxu0 %v665
      %893 = vmatpush.bf16.msra.mxu0 %v662
      %894 = vmatmul.bf16.gmra.mxu0 %v524
      %v895 = vpop.f32.mrf.mxu0
      %v896 = vadd.f32 %v576, %v895
      %v897 = vpop.f32.mrf.mxu0
      %v898 = vadd.f32 %v576, %v897
      %899 = vmatmul.bf16.gmra.mxu0 %v525
      %v900 = vpop.f32.mrf.mxu0
      %v901 = vadd.f32 %v576, %v900
      %v902 = vpop.f32.mrf.mxu0
      %v903 = vadd.f32 %v576, %v902
      %904 = vmatmul.bf16.gmra.mxu0 %v526
      %v905 = vpop.f32.mrf.mxu0
      %v906 = vadd.f32 %v576, %v905
      %v907 = vpop.f32.mrf.mxu0
      %v908 = vadd.f32 %v576, %v907
      %909 = vmatmul.bf16.gmra.mxu0 %v527
      %v910 = vpop.f32.mrf.mxu0
      %v911 = vadd.f32 %v576, %v910
      %v912 = vpop.f32.mrf.mxu0
      %v913 = vadd.f32 %v576, %v912
      %914 = vmatmul.bf16.gmra.mxu0 %v528
      %v915 = vpop.f32.mrf.mxu0
      %v916 = vadd.f32 %v576, %v915
      %v917 = vpop.f32.mrf.mxu0
      %v918 = vadd.f32 %v576, %v917
      %919 = vmatmul.bf16.gmra.mxu0 %v529
      %v920 = vpop.f32.mrf.mxu0
      %v921 = vadd.f32 %v576, %v920
      %v922 = vpop.f32.mrf.mxu0
      %v923 = vadd.f32 %v576, %v922
      %924 = vmatmul.bf16.gmra.mxu0 %v530
      %v925 = vpop.f32.mrf.mxu0
      %v926 = vadd.f32 %v576, %v925
      %v927 = vpop.f32.mrf.mxu0
      %v928 = vadd.f32 %v576, %v927
      %929 = vmatmul.bf16.gmra.mxu0 %v531
      %v930 = vpop.f32.mrf.mxu0
      %v931 = vadd.f32 %v576, %v930
      %v932 = vpop.f32.mrf.mxu0
      %v933 = vadd.f32 %v576, %v932
      %934 = vmatmul.bf16.gmra.mxu0 %v532
      %v935 = vpop.f32.mrf.mxu0
      %v936 = vadd.f32 %v576, %v935
      %v937 = vpop.f32.mrf.mxu0
      %v938 = vadd.f32 %v576, %v937
      %939 = vmatmul.bf16.gmra.mxu0 %v533
      %v940 = vpop.f32.mrf.mxu0
      %v941 = vadd.f32 %v576, %v940
      %v942 = vpop.f32.mrf.mxu0
      %v943 = vadd.f32 %v576, %v942
      %944 = vmatmul.bf16.gmra.mxu0 %v534
      %v945 = vpop.f32.mrf.mxu0
      %v946 = vadd.f32 %v576, %v945
      %v947 = vpop.f32.mrf.mxu0
      %v948 = vadd.f32 %v576, %v947
      %949 = vmatmul.bf16.gmra.mxu0 %v535
      %v950 = vpop.f32.mrf.mxu0
      %v951 = vadd.f32 %v576, %v950
      %v952 = vpop.f32.mrf.mxu0
      %v953 = vadd.f32 %v576, %v952
      %954 = vmatmul.bf16.gmra.mxu0 %v536
      %v955 = vpop.f32.mrf.mxu0
      %v956 = vadd.f32 %v576, %v955
      %v957 = vpop.f32.mrf.mxu0
      %v958 = vadd.f32 %v576, %v957
      %959 = vmatmul.bf16.gmra.mxu0 %v537
      %v960 = vpop.f32.mrf.mxu0
      %v961 = vadd.f32 %v576, %v960
      %v962 = vpop.f32.mrf.mxu0
      %v963 = vadd.f32 %v576, %v962
      %964 = vmatmul.bf16.gmra.mxu0 %v538
      %v965 = vpop.f32.mrf.mxu0
      %v966 = vadd.f32 %v576, %v965
      %v967 = vpop.f32.mrf.mxu0
      %v968 = vadd.f32 %v576, %v967
      %969 = vmatmul.bf16.gmra.mxu0 %v539
      %v970 = vpop.f32.mrf.mxu0
      %v971 = vadd.f32 %v576, %v970
      %v972 = vpop.f32.mrf.mxu0
      %v973 = vadd.f32 %v576, %v972
      %974 = vdwg.mxu0
      %v975 = vmul.f32 %v718, 0.5
      %v976 = vmul.f32 %v720, 0.5
      %v977 = vmul.f32 %v723, 0.5
      %v978 = vmul.f32 %v725, 0.5
      %v979 = vmul.f32 %v728, 0.5
      %v980 = vmul.f32 %v730, 0.5
      %v981 = vmul.f32 %v733, 0.5
      %v982 = vmul.f32 %v735, 0.5
      %v983 = vmul.f32 %v738, 0.5
      %v984 = vmul.f32 %v740, 0.5
      %v985 = vmul.f32 %v743, 0.5
      %v986 = vmul.f32 %v745, 0.5
      %v987 = vmul.f32 %v748, 0.5
      %v988 = vmul.f32 %v750, 0.5
      %v989 = vmul.f32 %v753, 0.5
      %v990 = vmul.f32 %v755, 0.5
      %v991 = vmul.f32 %v758, 0.5
      %v992 = vmul.f32 %v760, 0.5
      %v993 = vmul.f32 %v763, 0.5
      %v994 = vmul.f32 %v765, 0.5
      %v995 = vmul.f32 %v768, 0.5
      %v996 = vmul.f32 %v770, 0.5
      %v997 = vmul.f32 %v773, 0.5
      %v998 = vmul.f32 %v775, 0.5
      %v999 = vmul.f32 %v778, 0.5
      %v1000 = vmul.f32 %v780, 0.5
      %v1001 = vmul.f32 %v783, 0.5
      %v1002 = vmul.f32 %v785, 0.5
      %v1003 = vmul.f32 %v788, 0.5
      %v1004 = vmul.f32 %v790, 0.5
      %v1005 = vmul.f32 %v793, 0.5
      %v1006 = vmul.f32 %v795, 0.5
      %v1007 = vpack.c.bf16 %v975, %v975
      %v1008 = vpack.c.bf16 %v976, %v976
      %v1009 = vpack.c.bf16 %v977, %v977
      %v1010 = vpack.c.bf16 %v978, %v978
      %v1011 = vpack.c.bf16 %v979, %v979
      %v1012 = vpack.c.bf16 %v980, %v980
      %v1013 = vpack.c.bf16 %v981, %v981
      %v1014 = vpack.c.bf16 %v982, %v982
      %v1015 = vpack.c.bf16 %v983, %v983
      %v1016 = vpack.c.bf16 %v984, %v984
      %v1017 = vpack.c.bf16 %v985, %v985
      %v1018 = vpack.c.bf16 %v986, %v986
      %v1019 = vpack.c.bf16 %v987, %v987
      %v1020 = vpack.c.bf16 %v988, %v988
      %v1021 = vpack.c.bf16 %v989, %v989
      %v1022 = vpack.c.bf16 %v990, %v990
      %v1023 = vpack.c.bf16 %v991, %v991
      %v1024 = vpack.c.bf16 %v992, %v992
      %v1025 = vpack.c.bf16 %v993, %v993
      %v1026 = vpack.c.bf16 %v994, %v994
      %v1027 = vpack.c.bf16 %v995, %v995
      %v1028 = vpack.c.bf16 %v996, %v996
      %v1029 = vpack.c.bf16 %v997, %v997
      %v1030 = vpack.c.bf16 %v998, %v998
      %v1031 = vpack.c.bf16 %v999, %v999
      %v1032 = vpack.c.bf16 %v1000, %v1000
      %v1033 = vpack.c.bf16 %v1001, %v1001
      %v1034 = vpack.c.bf16 %v1002, %v1002
      %v1035 = vpack.c.bf16 %v1003, %v1003
      %v1036 = vpack.c.bf16 %v1004, %v1004
      %v1037 = vpack.c.bf16 %v1005, %v1005
      %v1038 = vpack.c.bf16 %v1006, %v1006
      %1039 = vst [vmem:[%s224] sm:$0xf] %v1007
      %1040 = vst [vmem:[%s224 + $0x4] sm:$0xf] %v1008
      %1041 = vst [vmem:[%s224 + $0x8] sm:$0xf] %v1009
      %1042 = vst [vmem:[%s224 + $0xc] sm:$0xf] %v1010
      %1043 = vst [vmem:[%s224 + $0x10] sm:$0xf] %v1011
      %1044 = vst [vmem:[%s224 + $0x14] sm:$0xf] %v1012
      %1045 = vst [vmem:[%s224 + $0x18] sm:$0xf] %v1013
      %1046 = vst [vmem:[%s224 + $0x1c] sm:$0xf] %v1014
      %1047 = vst [vmem:[%s224 + $0x20] sm:$0xf] %v1015
      %1048 = vst [vmem:[%s224 + $0x24] sm:$0xf] %v1016
      %1049 = vst [vmem:[%s224 + $0x28] sm:$0xf] %v1017
      %1050 = vst [vmem:[%s224 + $0x2c] sm:$0xf] %v1018
      %1051 = vst [vmem:[%s224 + $0x30] sm:$0xf] %v1019
      %1052 = vst [vmem:[%s224 + $0x34] sm:$0xf] %v1020
      %1053 = vst [vmem:[%s224 + $0x38] sm:$0xf] %v1021
      %1054 = vst [vmem:[%s224 + $0x3c] sm:$0xf] %v1022
      %1055 = vst [vmem:[%s224 + $0x40] sm:$0xf] %v1023
      %1056 = vst [vmem:[%s224 + $0x44] sm:$0xf] %v1024
      %1057 = vst [vmem:[%s224 + $0x48] sm:$0xf] %v1025
      %1058 = vst [vmem:[%s224 + $0x4c] sm:$0xf] %v1026
      %1059 = vst [vmem:[%s224 + $0x50] sm:$0xf] %v1027
      %1060 = vst [vmem:[%s224 + $0x54] sm:$0xf] %v1028
      %1061 = vst [vmem:[%s224 + $0x58] sm:$0xf] %v1029
      %1062 = vst [vmem:[%s224 + $0x5c] sm:$0xf] %v1030
      %1063 = vst [vmem:[%s224 + $0x60] sm:$0xf] %v1031
      %1064 = vst [vmem:[%s224 + $0x64] sm:$0xf] %v1032
      %1065 = vst [vmem:[%s224 + $0x68] sm:$0xf] %v1033
      %1066 = vst [vmem:[%s224 + $0x6c] sm:$0xf] %v1034
      %1067 = vst [vmem:[%s224 + $0x70] sm:$0xf] %v1035
      %1068 = vst [vmem:[%s224 + $0x74] sm:$0xf] %v1036
      %1069 = vst [vmem:[%s224 + $0x78] sm:$0xf] %v1037
      %1070 = vst [vmem:[%s224 + $0x7c] sm:$0xf] %v1038
      %v1071 = vpack.c.bf16 %v807, %v807
      %v1072 = vpack.c.bf16 %v809, %v809
      %v1073 = vpack.c.bf16 %v812, %v812
      %v1074 = vpack.c.bf16 %v814, %v814
      %v1075 = vpack.c.bf16 %v817, %v817
      %v1076 = vpack.c.bf16 %v819, %v819
      %v1077 = vpack.c.bf16 %v822, %v822
      %v1078 = vpack.c.bf16 %v824, %v824
      %v1079 = vpack.c.bf16 %v827, %v827
      %v1080 = vpack.c.bf16 %v829, %v829
      %v1081 = vpack.c.bf16 %v832, %v832
      %v1082 = vpack.c.bf16 %v834, %v834
      %v1083 = vpack.c.bf16 %v837, %v837
      %v1084 = vpack.c.bf16 %v839, %v839
      %v1085 = vpack.c.bf16 %v842, %v842
      %v1086 = vpack.c.bf16 %v844, %v844
      %v1087 = vpack.c.bf16 %v847, %v847
      %v1088 = vpack.c.bf16 %v849, %v849
      %v1089 = vpack.c.bf16 %v852, %v852
      %v1090 = vpack.c.bf16 %v854, %v854
      %v1091 = vpack.c.bf16 %v857, %v857
      %v1092 = vpack.c.bf16 %v859, %v859
      %v1093 = vpack.c.bf16 %v862, %v862
      %v1094 = vpack.c.bf16 %v864, %v864
      %v1095 = vpack.c.bf16 %v867, %v867
      %v1096 = vpack.c.bf16 %v869, %v869
      %v1097 = vpack.c.bf16 %v872, %v872
      %v1098 = vpack.c.bf16 %v874, %v874
      %v1099 = vpack.c.bf16 %v877, %v877
      %v1100 = vpack.c.bf16 %v879, %v879
      %v1101 = vpack.c.bf16 %v882, %v882
      %v1102 = vpack.c.bf16 %v884, %v884
      %s1103 = scalar_lea.vmem %s224, 128
      %1104 = vst [vmem:[%s1103] sm:$0xf] %v1071
      %1105 = vst [vmem:[%s1103 + $0x4] sm:$0xf] %v1072
      %1106 = vst [vmem:[%s1103 + $0x8] sm:$0xf] %v1073
      %1107 = vst [vmem:[%s1103 + $0xc] sm:$0xf] %v1074
      %1108 = vst [vmem:[%s1103 + $0x10] sm:$0xf] %v1075
      %1109 = vst [vmem:[%s1103 + $0x14] sm:$0xf] %v1076
      %1110 = vst [vmem:[%s1103 + $0x18] sm:$0xf] %v1077
      %1111 = vst [vmem:[%s1103 + $0x1c] sm:$0xf] %v1078
      %1112 = vst [vmem:[%s1103 + $0x20] sm:$0xf] %v1079
      %1113 = vst [vmem:[%s1103 + $0x24] sm:$0xf] %v1080
      %1114 = vst [vmem:[%s1103 + $0x28] sm:$0xf] %v1081
      %1115 = vst [vmem:[%s1103 + $0x2c] sm:$0xf] %v1082
      %1116 = vst [vmem:[%s1103 + $0x30] sm:$0xf] %v1083
      %1117 = vst [vmem:[%s1103 + $0x34] sm:$0xf] %v1084
      %1118 = vst [vmem:[%s1103 + $0x38] sm:$0xf] %v1085
      %1119 = vst [vmem:[%s1103 + $0x3c] sm:$0xf] %v1086
      %1120 = vst [vmem:[%s1103 + $0x40] sm:$0xf] %v1087
      %1121 = vst [vmem:[%s1103 + $0x44] sm:$0xf] %v1088
      %1122 = vst [vmem:[%s1103 + $0x48] sm:$0xf] %v1089
      %1123 = vst [vmem:[%s1103 + $0x4c] sm:$0xf] %v1090
      %1124 = vst [vmem:[%s1103 + $0x50] sm:$0xf] %v1091
      %1125 = vst [vmem:[%s1103 + $0x54] sm:$0xf] %v1092
      %1126 = vst [vmem:[%s1103 + $0x58] sm:$0xf] %v1093
      %1127 = vst [vmem:[%s1103 + $0x5c] sm:$0xf] %v1094
      %1128 = vst [vmem:[%s1103 + $0x60] sm:$0xf] %v1095
      %1129 = vst [vmem:[%s1103 + $0x64] sm:$0xf] %v1096
      %1130 = vst [vmem:[%s1103 + $0x68] sm:$0xf] %v1097
      %1131 = vst [vmem:[%s1103 + $0x6c] sm:$0xf] %v1098
      %1132 = vst [vmem:[%s1103 + $0x70] sm:$0xf] %v1099
      %1133 = vst [vmem:[%s1103 + $0x74] sm:$0xf] %v1100
      %1134 = vst [vmem:[%s1103 + $0x78] sm:$0xf] %v1101
      %1135 = vst [vmem:[%s1103 + $0x7c] sm:$0xf] %v1102
      %v1136 = vpack.c.bf16 %v896, %v896
      %v1137 = vpack.c.bf16 %v898, %v898
      %v1138 = vpack.c.bf16 %v901, %v901
      %v1139 = vpack.c.bf16 %v903, %v903
      %v1140 = vpack.c.bf16 %v906, %v906
      %v1141 = vpack.c.bf16 %v908, %v908
      %v1142 = vpack.c.bf16 %v911, %v911
      %v1143 = vpack.c.bf16 %v913, %v913
      %v1144 = vpack.c.bf16 %v916, %v916
      %v1145 = vpack.c.bf16 %v918, %v918
      %v1146 = vpack.c.bf16 %v921, %v921
      %v1147 = vpack.c.bf16 %v923, %v923
      %v1148 = vpack.c.bf16 %v926, %v926
      %v1149 = vpack.c.bf16 %v928, %v928
      %v1150 = vpack.c.bf16 %v931, %v931
      %v1151 = vpack.c.bf16 %v933, %v933
      %v1152 = vpack.c.bf16 %v936, %v936
      %v1153 = vpack.c.bf16 %v938, %v938
      %v1154 = vpack.c.bf16 %v941, %v941
      %v1155 = vpack.c.bf16 %v943, %v943
      %v1156 = vpack.c.bf16 %v946, %v946
      %v1157 = vpack.c.bf16 %v948, %v948
      %v1158 = vpack.c.bf16 %v951, %v951
      %v1159 = vpack.c.bf16 %v953, %v953
      %v1160 = vpack.c.bf16 %v956, %v956
      %v1161 = vpack.c.bf16 %v958, %v958
      %v1162 = vpack.c.bf16 %v961, %v961
      %v1163 = vpack.c.bf16 %v963, %v963
      %v1164 = vpack.c.bf16 %v966, %v966
      %v1165 = vpack.c.bf16 %v968, %v968
      %v1166 = vpack.c.bf16 %v971, %v971
      %v1167 = vpack.c.bf16 %v973, %v973
      %s1168 = scalar_lea.vmem %s224, 256
      %1169 = vst [vmem:[%s1168] sm:$0xf] %v1136
      %1170 = vst [vmem:[%s1168 + $0x4] sm:$0xf] %v1137
      %1171 = vst [vmem:[%s1168 + $0x8] sm:$0xf] %v1138
      %1172 = vst [vmem:[%s1168 + $0xc] sm:$0xf] %v1139
      %1173 = vst [vmem:[%s1168 + $0x10] sm:$0xf] %v1140
      %1174 = vst [vmem:[%s1168 + $0x14] sm:$0xf] %v1141
      %1175 = vst [vmem:[%s1168 + $0x18] sm:$0xf] %v1142
      %1176 = vst [vmem:[%s1168 + $0x1c] sm:$0xf] %v1143
      %1177 = vst [vmem:[%s1168 + $0x20] sm:$0xf] %v1144
      %1178 = vst [vmem:[%s1168 + $0x24] sm:$0xf] %v1145
      %1179 = vst [vmem:[%s1168 + $0x28] sm:$0xf] %v1146
      %1180 = vst [vmem:[%s1168 + $0x2c] sm:$0xf] %v1147
      %1181 = vst [vmem:[%s1168 + $0x30] sm:$0xf] %v1148
      %1182 = vst [vmem:[%s1168 + $0x34] sm:$0xf] %v1149
      %1183 = vst [vmem:[%s1168 + $0x38] sm:$0xf] %v1150
      %1184 = vst [vmem:[%s1168 + $0x3c] sm:$0xf] %v1151
      %1185 = vst [vmem:[%s1168 + $0x40] sm:$0xf] %v1152
      %1186 = vst [vmem:[%s1168 + $0x44] sm:$0xf] %v1153
      %1187 = vst [vmem:[%s1168 + $0x48] sm:$0xf] %v1154
      %1188 = vst [vmem:[%s1168 + $0x4c] sm:$0xf] %v1155
      %1189 = vst [vmem:[%s1168 + $0x50] sm:$0xf] %v1156
      %1190 = vst [vmem:[%s1168 + $0x54] sm:$0xf] %v1157
      %1191 = vst [vmem:[%s1168 + $0x58] sm:$0xf] %v1158
      %1192 = vst [vmem:[%s1168 + $0x5c] sm:$0xf] %v1159
      %1193 = vst [vmem:[%s1168 + $0x60] sm:$0xf] %v1160
      %1194 = vst [vmem:[%s1168 + $0x64] sm:$0xf] %v1161
      %1195 = vst [vmem:[%s1168 + $0x68] sm:$0xf] %v1162
      %1196 = vst [vmem:[%s1168 + $0x6c] sm:$0xf] %v1163
      %1197 = vst [vmem:[%s1168 + $0x70] sm:$0xf] %v1164
      %1198 = vst [vmem:[%s1168 + $0x74] sm:$0xf] %v1165
      %1199 = vst [vmem:[%s1168 + $0x78] sm:$0xf] %v1166
      %1200 = vst [vmem:[%s1168 + $0x7c] sm:$0xf] %v1167
      %p1201 = scmp.lt.s32.totalorder %s16, 1
      %s1202 = scalar_select %p1201, %s16, 1
      %s1203 = smul.addr %s1202, 96
      %s1204 = smul.addr %s1203, 4
      %s1205 = scalar_lea.vmem %s5, %s1204
      // Predicated region
      $region41: #{self_attention_2d.2} parent=39 // pred_check
        %p1206 = pneg %p144
      $region42: #{self_attention_2d.2} parent=39 // pred_check_branch
        %1208 = sbr.rel (%p1206) target = $region44
      $region43: #{self_attention_2d.2} parent=39 // pred_region
        _
      $region44: #{self_attention_2d.2} parent=39 // pred_fallthru
        _
    $region40: #{self_attention_2d.2} parent=5 // pred_fallthru
      _
    %p1209 = scmp.le.s32.totalorder 2, %s11
    // Predicated region
    $region45: #{self_attention_2d.2} parent=5 // pred_check
      %p1210 = pneg %p1209
    $region46: #{self_attention_2d.2} parent=5 // pred_check_branch
      %1212 = sbr.rel (%p1210) target = $region48
    $region47: #{self_attention_2d.2} parent=5 // pred_region
      %s1213 = ssub.s32 %s11, 2
      // Predicated region
      $region49: #{self_attention_2d.2} parent=47 // pred_check
        %p1214 = pneg %p150
      $region50: #{self_attention_2d.2} parent=47 // pred_check_branch
        %1216 = sbr.rel (%p1214) target = $region52
      $region51: #{self_attention_2d.2} parent=47 // pred_region
        %p1217 = scmp.lt.s32.totalorder %s17, 1
        %s1218 = scalar_select %p1217, %s17, 1
        %s1219 = smul.addr %s1218, 96
        %s1220 = smul.addr %s1219, 4
        %s1221 = scalar_lea.vmem %s5, %s1220
      $region52: #{self_attention_2d.2} parent=47 // pred_fallthru
        _
    $region48: #{self_attention_2d.2} parent=5 // pred_fallthru
      _
  $region6: #{self_attention_2d.2} parent=0 // loop_footer
    %s15 = sadd.s32 1, %s11
  $region7: #{self_attention_2d.2} parent=0 // loop_footer_branch
    %10 = sbr.rel target = $region3
  $region8: #{self_attention_2d.2} parent=0 // loop_exit
    _

// kernel: self_attention_2d.3
$region0: #{self_attention_2d.3}
  #allocation0 [shape = 'u32[]', space=smem, size = 0x4, offset = 0x4, fixed_abs, tag = 'smem constant byte address 0x4 - core index']
  #allocation1 [shape = 'u32[72,128]{1,0:T(1,128)}', space=vmem, size = 0x9000, scoped, tag = 'internal scratch']
  #allocation2 [shape = 'f32[1,256,1]{2,1,0:T(8,128)}', space=vmem, size = 0x20000, scoped, tag = 'scratch operand']
  #allocation3 [shape = 'f32[1,256,1]{2,1,0:T(8,128)}', space=vmem, size = 0x20000, scoped, tag = 'scratch operand']
  #allocation4 [shape = 'f32[256,128]{1,0:T(8,128)}', space=vmem, size = 0x20000, scoped, tag = 'scratch operand']
  %s0 = inlined_call_operand.vmem [shape: f32[2,256,128], index: 0, kind: input, shape index: {}]
  %s1 = inlined_call_operand.vmem [shape: bf16[2,3,256,128], index: 1, kind: input, shape index: {}, may-alias: {1,2,3}]
  %s2 = inlined_call_operand.vmem [shape: bf16[2,3,256,128], index: 2, kind: input, shape index: {}, may-alias: {1,2,3}]
  %s3 = inlined_call_operand.vmem [shape: bf16[2,3,256,128], index: 3, kind: input, shape index: {}, may-alias: {1,2,3}]
  %s4 = inlined_call_operand.vmem [shape: bf16[128,128], index: 4, kind: input, shape index: {}]
  %s5 = inlined_call_operand.vmem [shape: f32[1,128], index: 5, kind: input, shape index: {}]
  %s6 = inlined_call_operand.vmem [shape: f32[2,256,128], index: 6, kind: output, shape index: {}]
  %s7 = sld [smem:[#allocation0]]
  $region65: #{self_attention_2d.3} parent=0
    _
  %s9 = ssub.s32 1, %s7
  %s10 = scalar_select 0, %s9, %s7
  loop: start=0, step=1, limit=4
  $region2: #{self_attention_2d.3} parent=0 // loop_pre_header
    _
  $region3: #{self_attention_2d.3} parent=0 // loop_header
    %s12 = sphi 0, %s16
    %p13 = scmp.ge.s32.totalorder %s12, 4
    %s19 = sphi 0, %s38
    %s20 = sphi 0, %s34
    %s21 = sphi 0, %s30
    %s22 = sphi 0, %s19
    %s23 = sphi 0, %s20
    %s24 = sphi 0, %s21
    %s25 = sphi 0, %s22
    %s26 = sphi 0, %s23
    %s27 = sphi 0, %s24
    %s43 = sphi 0, %s45
    %s46 = sphi 0, %s43
    %s47 = sphi 0, %s46
    %s63 = sphi 0, %s47
    %s71 = sphi 0, %s73
    %s74 = sphi 0, %s71
    %s75 = sphi 0, %s74
    %s91 = sphi 0, %s75
    %s99 = sphi 0, %s101
    %s102 = sphi 0, %s99
    %s103 = sphi 0, %s102
    %s119 = sphi 0, %s103
    %s127 = sphi 0, %s129
    %s130 = sphi 0, %s127
    %s131 = sphi 0, %s130
    %s147 = sphi 0, %s131
    %s151 = sphi 0, %s151
    %s153 = sphi 0, %s151
    %s154 = sphi 0, %s153
    %s168 = sphi 0, %s154
    %s172 = sphi 0, %s172
    %s174 = sphi 0, %s172
    %s175 = sphi 0, %s174
    %s189 = sphi 0, %s175
    %s197 = sphi 0, %s199
    %s200 = sphi 0, %s197
    %s201 = sphi 0, %s200
    %s217 = sphi 0, %s201
  $region4: #{self_attention_2d.3} parent=0 // loop_header_branch
    %15 = sbr.rel (%p13) target = $region8
  $region5: #{self_attention_2d.3} parent=0 // loop_body
    %s17 = ssub.s32 %s12, 1
    %s18 = ssub.s32 %s12, 2
    %s28 = sadd.s32 1, %s21
    %p29 = scmp.ge.s32.totalorder %s28, 1
    %s30 = scalar_select %p29, 0, %s28
    %s31 = sadd.s32 1, %s20
    %s32 = scalar_select %p29, %s31, %s20
    %p33 = scmp.ge.s32.totalorder %s32, 1
    %s34 = scalar_select %p33, 0, %s32
    %s35 = sadd.s32 1, %s19
    %s36 = scalar_select %p33, %s35, %s19
    %p37 = scmp.ge.s32.totalorder %s36, 2
    %s38 = scalar_select %p37, 0, %s36
    %s39 = ssub.s32 %s19, %s38
    %s40 = ssub.s32 %s20, %s34
    %s41 = sor.u32 %s39, %s40
    %p42 = scmp.eq.s32.totalorder %s41, 0
    %s44 = sadd.s32 %s43, 1
    %s45 = scalar_select %p42, %s43, %s44
    %p48 = pneg %p42
    %p49 = scmp.eq.s32.totalorder %s12, 1
    %p50 = por %p48, %p49
    %p51 = scmp.ne.s32.totalorder %s43, %s46
    %p52 = scmp.eq.s32.totalorder %s12, 0
    %p53 = por %p51, %p52
    %p54 = scmp.ne.s32.totalorder %s43, %s46
    %p55 = scmp.eq.s32.totalorder %s17, 1
    %p56 = por %p54, %p55
    %p57 = scmp.ne.s32.totalorder %s46, %s47
    %p58 = scmp.eq.s32.totalorder %s17, 0
    %p59 = por %p57, %p58
    %p60 = scmp.ne.s32.totalorder %s46, %s47
    %p61 = scmp.eq.s32.totalorder %s18, 1
    %p62 = por %p60, %p61
    %p64 = scmp.ne.s32.totalorder %s47, %s63
    %p65 = scmp.eq.s32.totalorder %s18, 0
    %p66 = por %p64, %p65
    %s67 = ssub.s32 %s19, %s38
    %s68 = ssub.s32 %s20, %s34
    %s69 = sor.u32 %s67, %s68
    %p70 = scmp.eq.s32.totalorder %s69, 0
    %s72 = sadd.s32 %s71, 1
    %s73 = scalar_select %p70, %s71, %s72
    %p76 = pneg %p70
    %p77 = scmp.eq.s32.totalorder %s12, 1
    %p78 = por %p76, %p77
    %p79 = scmp.ne.s32.totalorder %s71, %s74
    %p80 = scmp.eq.s32.totalorder %s12, 0
    %p81 = por %p79, %p80
    %p82 = scmp.ne.s32.totalorder %s71, %s74
    %p83 = scmp.eq.s32.totalorder %s17, 1
    %p84 = por %p82, %p83
    %p85 = scmp.ne.s32.totalorder %s74, %s75
    %p86 = scmp.eq.s32.totalorder %s17, 0
    %p87 = por %p85, %p86
    %p88 = scmp.ne.s32.totalorder %s74, %s75
    %p89 = scmp.eq.s32.totalorder %s18, 1
    %p90 = por %p88, %p89
    %p92 = scmp.ne.s32.totalorder %s75, %s91
    %p93 = scmp.eq.s32.totalorder %s18, 0
    %p94 = por %p92, %p93
    %s95 = ssub.s32 %s19, %s38
    %s96 = ssub.s32 %s21, %s30
    %s97 = sor.u32 %s95, %s96
    %p98 = scmp.eq.s32.totalorder %s97, 0
    %s100 = sadd.s32 %s99, 1
    %s101 = scalar_select %p98, %s99, %s100
    %p104 = pneg %p98
    %p105 = scmp.eq.s32.totalorder %s12, 1
    %p106 = por %p104, %p105
    %p107 = scmp.ne.s32.totalorder %s99, %s102
    %p108 = scmp.eq.s32.totalorder %s12, 0
    %p109 = por %p107, %p108
    %p110 = scmp.ne.s32.totalorder %s99, %s102
    %p111 = scmp.eq.s32.totalorder %s17, 1
    %p112 = por %p110, %p111
    %p113 = scmp.ne.s32.totalorder %s102, %s103
    %p114 = scmp.eq.s32.totalorder %s17, 0
    %p115 = por %p113, %p114
    %p116 = scmp.ne.s32.totalorder %s102, %s103
    %p117 = scmp.eq.s32.totalorder %s18, 1
    %p118 = por %p116, %p117
    %p120 = scmp.ne.s32.totalorder %s103, %s119
    %p121 = scmp.eq.s32.totalorder %s18, 0
    %p122 = por %p120, %p121
    %s123 = ssub.s32 %s19, %s38
    %s124 = ssub.s32 %s21, %s30
    %s125 = sor.u32 %s123, %s124
    %p126 = scmp.eq.s32.totalorder %s125, 0
    %s128 = sadd.s32 %s127, 1
    %s129 = scalar_select %p126, %s127, %s128
    %p132 = pneg %p126
    %p133 = scmp.eq.s32.totalorder %s12, 1
    %p134 = por %p132, %p133
    %p135 = scmp.ne.s32.totalorder %s127, %s130
    %p136 = scmp.eq.s32.totalorder %s12, 0
    %p137 = por %p135, %p136
    %p138 = scmp.ne.s32.totalorder %s127, %s130
    %p139 = scmp.eq.s32.totalorder %s17, 1
    %p140 = por %p138, %p139
    %p141 = scmp.ne.s32.totalorder %s130, %s131
    %p142 = scmp.eq.s32.totalorder %s17, 0
    %p143 = por %p141, %p142
    %p144 = scmp.ne.s32.totalorder %s130, %s131
    %p145 = scmp.eq.s32.totalorder %s18, 1
    %p146 = por %p144, %p145
    %p148 = scmp.ne.s32.totalorder %s131, %s147
    %p149 = scmp.eq.s32.totalorder %s18, 0
    %p150 = por %p148, %p149
    %s152 = sadd.s32 %s151, 1
    %p155 = scmp.eq.s32.totalorder %s12, 1
    %p156 = scmp.ne.s32.totalorder %s151, %s153
    %p157 = scmp.eq.s32.totalorder %s12, 0
    %p158 = por %p156, %p157
    %p159 = scmp.ne.s32.totalorder %s151, %s153
    %p160 = scmp.eq.s32.totalorder %s17, 1
    %p161 = por %p159, %p160
    %p162 = scmp.ne.s32.totalorder %s153, %s154
    %p163 = scmp.eq.s32.totalorder %s17, 0
    %p164 = por %p162, %p163
    %p165 = scmp.ne.s32.totalorder %s153, %s154
    %p166 = scmp.eq.s32.totalorder %s18, 1
    %p167 = por %p165, %p166
    %p169 = scmp.ne.s32.totalorder %s154, %s168
    %p170 = scmp.eq.s32.totalorder %s18, 0
    %p171 = por %p169, %p170
    %s173 = sadd.s32 %s172, 1
    %p176 = scmp.eq.s32.totalorder %s12, 1
    %p177 = scmp.ne.s32.totalorder %s172, %s174
    %p178 = scmp.eq.s32.totalorder %s12, 0
    %p179 = por %p177, %p178
    %p180 = scmp.ne.s32.totalorder %s172, %s174
    %p181 = scmp.eq.s32.totalorder %s17, 1
    %p182 = por %p180, %p181
    %p183 = scmp.ne.s32.totalorder %s174, %s175
    %p184 = scmp.eq.s32.totalorder %s17, 0
    %p185 = por %p183, %p184
    %p186 = scmp.ne.s32.totalorder %s174, %s175
    %p187 = scmp.eq.s32.totalorder %s18, 1
    %p188 = por %p186, %p187
    %p190 = scmp.ne.s32.totalorder %s175, %s189
    %p191 = scmp.eq.s32.totalorder %s18, 0
    %p192 = por %p190, %p191
    %s193 = ssub.s32 %s19, %s38
    %s194 = ssub.s32 %s20, %s34
    %s195 = sor.u32 %s193, %s194
    %p196 = scmp.eq.s32.totalorder %s195, 0
    %s198 = sadd.s32 %s197, 1
    %s199 = scalar_select %p196, %s197, %s198
    %p202 = pneg %p196
    %p203 = scmp.eq.s32.totalorder %s12, 1
    %p204 = por %p202, %p203
    %p205 = scmp.ne.s32.totalorder %s197, %s200
    %p206 = scmp.eq.s32.totalorder %s12, 0
    %p207 = por %p205, %p206
    %p208 = scmp.ne.s32.totalorder %s197, %s200
    %p209 = scmp.eq.s32.totalorder %s17, 1
    %p210 = por %p208, %p209
    %p211 = scmp.ne.s32.totalorder %s200, %s201
    %p212 = scmp.eq.s32.totalorder %s17, 0
    %p213 = por %p211, %p212
    %p214 = scmp.ne.s32.totalorder %s200, %s201
    %p215 = scmp.eq.s32.totalorder %s18, 1
    %p216 = por %p214, %p215
    %p218 = scmp.ne.s32.totalorder %s201, %s217
    %p219 = scmp.eq.s32.totalorder %s18, 0
    %p220 = por %p218, %p219
    %p221 = scmp.le.s32.totalorder 1, %s12
    %p222 = scmp.lt.s32.totalorder %s12, 3
    %p223 = pnand %p221, %p222
    %p224 = pneg %p223
    // Predicated region
    $region9: #{self_attention_2d.3} parent=5 // pred_check
      _
    $region10: #{self_attention_2d.3} parent=5 // pred_check_branch
      %226 = sbr.rel (%p223) target = $region12
    $region11: #{self_attention_2d.3} parent=5 // pred_region
      %s227 = ssub.s32 %s12, 1
      // Predicated region
      $region13: #{self_attention_2d.3} parent=11 // pred_check
        %p228 = pneg %p164
      $region14: #{self_attention_2d.3} parent=11 // pred_check_branch
        %230 = sbr.rel (%p228) target = $region16
      $region15: #{self_attention_2d.3} parent=11 // pred_region
        _
      $region16: #{self_attention_2d.3} parent=11 // pred_fallthru
        _
      // Predicated region
      $region17: #{self_attention_2d.3} parent=11 // pred_check
        %p231 = pneg %p185
      $region18: #{self_attention_2d.3} parent=11 // pred_check_branch
        %233 = sbr.rel (%p231) target = $region20
      $region19: #{self_attention_2d.3} parent=11 // pred_region
        _
      $region20: #{self_attention_2d.3} parent=11 // pred_fallthru
        _
    $region12: #{self_attention_2d.3} parent=5 // pred_fallthru
      _
    %p234 = scmp.lt.s32.totalorder %s12, 2
    // Predicated region
    $region21: #{self_attention_2d.3} parent=5 // pred_check
      %p235 = pneg %p234
    $region22: #{self_attention_2d.3} parent=5 // pred_check_branch
      %237 = sbr.rel (%p235) target = $region24
    $region23: #{self_attention_2d.3} parent=5 // pred_region
      // Predicated region
      $region25: #{self_attention_2d.3} parent=23 // pred_check
        %p238 = pneg %p53
      $region26: #{self_attention_2d.3} parent=23 // pred_check_branch
        %240 = sbr.rel (%p238) target = $region28
      $region27: #{self_attention_2d.3} parent=23 // pred_region
        %s241 = smul.u32 32, %s20
        %p242 = scmp.lt.s32.totalorder %s19, 1
        %s243 = scalar_select %p242, %s19, 1
        %p244 = scmp.lt.s32.totalorder %s241, 31
        %s245 = scalar_select %p244, %s241, 31
        %s246 = smul.addr %s243, 32
        %s247 = sadd.s32 %s245, %s246
        %s248 = smul.addr %s247, 8
        %s249 = scalar_lea.vmem %s0, %s248
        %s250 = smul.u32 32, %s20
      $region28: #{self_attention_2d.3} parent=23 // pred_fallthru
        _
      // Predicated region
      $region29: #{self_attention_2d.3} parent=23 // pred_check
        %p251 = pneg %p81
      $region30: #{self_attention_2d.3} parent=23 // pred_check_branch
        %253 = sbr.rel (%p251) target = $region32
      $region31: #{self_attention_2d.3} parent=23 // pred_region
        %s254 = smul.u32 32, %s20
        %p255 = scmp.lt.s32.totalorder %s19, 1
        %s256 = scalar_select %p255, %s19, 1
        %p257 = scmp.lt.s32.totalorder %s254, 31
        %s258 = scalar_select %p257, %s254, 31
        %s259 = smul.addr %s256, 96
        %s260 = sadd.s32 %s258, %s259
        %s261 = smul.addr %s260, 4
        %s262 = scalar_lea.vmem %s1, %s261
        %s263 = smul.u32 32, %s20
      $region32: #{self_attention_2d.3} parent=23 // pred_fallthru
        _
      // Predicated region
      $region33: #{self_attention_2d.3} parent=23 // pred_check
        %p264 = pneg %p109
      $region34: #{self_attention_2d.3} parent=23 // pred_check_branch
        %266 = sbr.rel (%p264) target = $region36
      $region35: #{self_attention_2d.3} parent=23 // pred_region
        %s267 = smul.u32 32, %s21
        %p268 = scmp.lt.s32.totalorder %s19, 1
        %s269 = scalar_select %p268, %s19, 1
        %p270 = scmp.lt.s32.totalorder %s267, 31
        %s271 = scalar_select %p270, %s267, 31
        %s272 = sadd.s32 %s271, 32
        %s273 = smul.addr %s269, 96
        %s274 = sadd.s32 %s272, %s273
        %s275 = smul.addr %s274, 4
        %s276 = scalar_lea.vmem %s2, %s275
        %s277 = smul.u32 32, %s21
      $region36: #{self_attention_2d.3} parent=23 // pred_fallthru
        _
      // Predicated region
      $region37: #{self_attention_2d.3} parent=23 // pred_check
        %p278 = pneg %p137
      $region38: #{self_attention_2d.3} parent=23 // pred_check_branch
        %280 = sbr.rel (%p278) target = $region40
      $region39: #{self_attention_2d.3} parent=23 // pred_region
        %s281 = smul.u32 32, %s21
        %p282 = scmp.lt.s32.totalorder %s19, 1
        %s283 = scalar_select %p282, %s19, 1
        %p284 = scmp.lt.s32.totalorder %s281, 31
        %s285 = scalar_select %p284, %s281, 31
        %s286 = sadd.s32 %s285, 64
        %s287 = smul.addr %s283, 96
        %s288 = sadd.s32 %s286, %s287
        %s289 = smul.addr %s288, 4
        %s290 = scalar_lea.vmem %s3, %s289
        %s291 = smul.u32 32, %s21
      $region40: #{self_attention_2d.3} parent=23 // pred_fallthru
        _
    $region24: #{self_attention_2d.3} parent=5 // pred_fallthru
      _
    %p292 = scmp.le.s32.totalorder 1, %s12
    %p293 = scmp.lt.s32.totalorder %s12, 3
    %p294 = pnand %p292, %p293
    %p295 = pneg %p294
    // Predicated region
    $region41: #{self_attention_2d.3} parent=5 // pred_check
      _
    $region42: #{self_attention_2d.3} parent=5 // pred_check_branch
      %297 = sbr.rel (%p294) target = $region44
    $region43: #{self_attention_2d.3} parent=5 // pred_region
      %s298 = ssub.s32 %s12, 1
      %s299 = smul.u32 32, %s23
      %p300 = scmp.lt.s32.totalorder %s22, 1
      %s301 = scalar_select %p300, %s22, 1
      %p302 = scmp.lt.s32.totalorder %s299, 31
      %s303 = scalar_select %p302, %s299, 31
      %s304 = smul.addr %s301, 32
      %s305 = sadd.s32 %s303, %s304
      %s306 = smul.addr %s305, 8
      %s307 = scalar_lea.vmem %s0, %s306
      %p308 = pneg %p59
      %p309 = pneg %p56
      %s310 = smul.u32 32, %s23
      %p311 = scmp.lt.s32.totalorder %s22, 1
      %s312 = scalar_select %p311, %s22, 1
      %p313 = scmp.lt.s32.totalorder %s310, 31
      %s314 = scalar_select %p313, %s310, 31
      %s315 = smul.addr %s312, 96
      %s316 = sadd.s32 %s314, %s315
      %s317 = smul.addr %s316, 4
      %s318 = scalar_lea.vmem %s1, %s317
      %p319 = pneg %p87
      %p320 = pneg %p84
      %s321 = smul.u32 32, %s24
      %p322 = scmp.lt.s32.totalorder %s22, 1
      %s323 = scalar_select %p322, %s22, 1
      %p324 = scmp.lt.s32.totalorder %s321, 31
      %s325 = scalar_select %p324, %s321, 31
      %s326 = sadd.s32 %s325, 32
      %s327 = smul.addr %s323, 96
      %s328 = sadd.s32 %s326, %s327
      %s329 = smul.addr %s328, 4
      %s330 = scalar_lea.vmem %s2, %s329
      %p331 = pneg %p115
      %p332 = pneg %p112
      %s333 = smul.u32 32, %s24
      %p334 = scmp.lt.s32.totalorder %s22, 1
      %s335 = scalar_select %p334, %s22, 1
      %p336 = scmp.lt.s32.totalorder %s333, 31
      %s337 = scalar_select %p336, %s333, 31
      %s338 = sadd.s32 %s337, 64
      %s339 = smul.addr %s335, 96
      %s340 = sadd.s32 %s338, %s339
      %s341 = smul.addr %s340, 4
      %s342 = scalar_lea.vmem %s3, %s341
      %p343 = pneg %p143
      %p344 = pneg %p140
      %p345 = pneg %p164
      %p346 = pneg %p161
      %p347 = pneg %p185
      %p348 = pneg %p182
      %p349 = pneg %p213
      %p350 = pneg %p210
      %s351 = smul.u32 32, %s23
      %p352 = scmp.lt.s32.totalorder %s22, 1
      %s353 = scalar_select %p352, %s22, 1
      %p354 = scmp.lt.s32.totalorder %s351, 31
      %s355 = scalar_select %p354, %s351, 31
      %s356 = smul.addr %s353, 32
      %s357 = sadd.s32 %s355, %s356
      %s358 = smul.addr %s357, 8
      %s359 = scalar_lea.vmem %s6, %s358
      %s360 = smul.u32 32, %s23
      %p361 = scmp.lt.s32.totalorder %s22, 1
      %s362 = scalar_select %p361, %s22, 1
      %p363 = scmp.lt.s32.totalorder %s360, 31
      %s364 = scalar_select %p363, %s360, 31
      %s365 = smul.addr %s362, 32
      %s366 = sadd.s32 %s364, %s365
      %s367 = smul.addr %s366, 8
      %s368 = scalar_lea.vmem %s0, %s367
      %s369 = smul.u32 32, %s23
      %s370 = smul.u32 32, %s23
      %p371 = scmp.lt.s32.totalorder %s22, 1
      %s372 = scalar_select %p371, %s22, 1
      %p373 = scmp.lt.s32.totalorder %s370, 31
      %s374 = scalar_select %p373, %s370, 31
      %s375 = smul.addr %s372, 96
      %s376 = sadd.s32 %s374, %s375
      %s377 = smul.addr %s376, 4
      %s378 = scalar_lea.vmem %s1, %s377
      %s379 = smul.u32 32, %s23
      %s380 = smul.u32 32, %s24
      %p381 = scmp.lt.s32.totalorder %s22, 1
      %s382 = scalar_select %p381, %s22, 1
      %p383 = scmp.lt.s32.totalorder %s380, 31
      %s384 = scalar_select %p383, %s380, 31
      %s385 = sadd.s32 %s384, 32
      %s386 = smul.addr %s382, 96
      %s387 = sadd.s32 %s385, %s386
      %s388 = smul.addr %s387, 4
      %s389 = scalar_lea.vmem %s2, %s388
      %s390 = smul.u32 32, %s24
      %s391 = smul.u32 32, %s24
      %p392 = scmp.lt.s32.totalorder %s22, 1
      %s393 = scalar_select %p392, %s22, 1
      %p394 = scmp.lt.s32.totalorder %s391, 31
      %s395 = scalar_select %p394, %s391, 31
      %s396 = sadd.s32 %s395, 64
      %s397 = smul.addr %s393, 96
      %s398 = sadd.s32 %s396, %s397
      %s399 = smul.addr %s398, 4
      %s400 = scalar_lea.vmem %s3, %s399
      %s401 = smul.u32 32, %s24
      %s402 = smul.u32 32, %s23
      %p403 = scmp.lt.s32.totalorder %s22, 1
      %s404 = scalar_select %p403, %s22, 1
      %p405 = scmp.lt.s32.totalorder %s402, 31
      %s406 = scalar_select %p405, %s402, 31
      %s407 = smul.addr %s404, 32
      %s408 = sadd.s32 %s406, %s407
      %s409 = smul.addr %s408, 8
      %s410 = scalar_lea.vmem %s6, %s409
      %s411 = smul.u32 32, %s23
      %p412 = scmp.eq.s32.totalorder %s24, 0
      // Predicated region
      $region45: #{self_attention_2d.3} parent=43 // pred_check
        %p413 = pneg %p412
      $region46: #{self_attention_2d.3} parent=43 // pred_check_branch
        %415 = sbr.rel (%p413) target = $region48
      $region47: #{self_attention_2d.3} parent=43 // pred_region
        %vm416 = vcmask 7168
        %417 = vst.msk [vmem:[#allocation2] sm:$0xff] %vm416, -1e+30
        %418 = vst.msk [vmem:[#allocation2 + $0x8] sm:$0xff] %vm416, -1e+30
        %419 = vst.msk [vmem:[#allocation2 + $0x10] sm:$0xff] %vm416, -1e+30
        %420 = vst.msk [vmem:[#allocation2 + $0x18] sm:$0xff] %vm416, -1e+30
        %421 = vst.msk [vmem:[#allocation2 + $0x20] sm:$0xff] %vm416, -1e+30
        %422 = vst.msk [vmem:[#allocation2 + $0x28] sm:$0xff] %vm416, -1e+30
        %423 = vst.msk [vmem:[#allocation2 + $0x30] sm:$0xff] %vm416, -1e+30
        %424 = vst.msk [vmem:[#allocation2 + $0x38] sm:$0xff] %vm416, -1e+30
        %425 = vst.msk [vmem:[#allocation2 + $0x40] sm:$0xff] %vm416, -1e+30
        %426 = vst.msk [vmem:[#allocation2 + $0x48] sm:$0xff] %vm416, -1e+30
        %427 = vst.msk [vmem:[#allocation2 + $0x50] sm:$0xff] %vm416, -1e+30
        %428 = vst.msk [vmem:[#allocation2 + $0x58] sm:$0xff] %vm416, -1e+30
        %429 = vst.msk [vmem:[#allocation2 + $0x60] sm:$0xff] %vm416, -1e+30
        %430 = vst.msk [vmem:[#allocation2 + $0x68] sm:$0xff] %vm416, -1e+30
        %431 = vst.msk [vmem:[#allocation2 + $0x70] sm:$0xff] %vm416, -1e+30
        %432 = vst.msk [vmem:[#allocation2 + $0x78] sm:$0xff] %vm416, -1e+30
        %433 = vst.msk [vmem:[#allocation2 + $0x80] sm:$0xff] %vm416, -1e+30
        %434 = vst.msk [vmem:[#allocation2 + $0x88] sm:$0xff] %vm416, -1e+30
        %435 = vst.msk [vmem:[#allocation2 + $0x90] sm:$0xff] %vm416, -1e+30
        %436 = vst.msk [vmem:[#allocation2 + $0x98] sm:$0xff] %vm416, -1e+30
        %437 = vst.msk [vmem:[#allocation2 + $0xa0] sm:$0xff] %vm416, -1e+30
        %438 = vst.msk [vmem:[#allocation2 + $0xa8] sm:$0xff] %vm416, -1e+30
        %439 = vst.msk [vmem:[#allocation2 + $0xb0] sm:$0xff] %vm416, -1e+30
        %440 = vst.msk [vmem:[#allocation2 + $0xb8] sm:$0xff] %vm416, -1e+30
        %441 = vst.msk [vmem:[#allocation2 + $0xc0] sm:$0xff] %vm416, -1e+30
        %442 = vst.msk [vmem:[#allocation2 + $0xc8] sm:$0xff] %vm416, -1e+30
        %443 = vst.msk [vmem:[#allocation2 + $0xd0] sm:$0xff] %vm416, -1e+30
        %444 = vst.msk [vmem:[#allocation2 + $0xd8] sm:$0xff] %vm416, -1e+30
        %445 = vst.msk [vmem:[#allocation2 + $0xe0] sm:$0xff] %vm416, -1e+30
        %446 = vst.msk [vmem:[#allocation2 + $0xe8] sm:$0xff] %vm416, -1e+30
        %447 = vst.msk [vmem:[#allocation2 + $0xf0] sm:$0xff] %vm416, -1e+30
        %448 = vst.msk [vmem:[#allocation2 + $0xf8] sm:$0xff] %vm416, -1e+30
        %449 = vst.msk [vmem:[#allocation3] sm:$0xff] %vm416, 0.0
        %450 = vst.msk [vmem:[#allocation3 + $0x8] sm:$0xff] %vm416, 0.0
        %451 = vst.msk [vmem:[#allocation3 + $0x10] sm:$0xff] %vm416, 0.0
        %452 = vst.msk [vmem:[#allocation3 + $0x18] sm:$0xff] %vm416, 0.0
        %453 = vst.msk [vmem:[#allocation3 + $0x20] sm:$0xff] %vm416, 0.0
        %454 = vst.msk [vmem:[#allocation3 + $0x28] sm:$0xff] %vm416, 0.0
        %455 = vst.msk [vmem:[#allocation3 + $0x30] sm:$0xff] %vm416, 0.0
        %456 = vst.msk [vmem:[#allocation3 + $0x38] sm:$0xff] %vm416, 0.0
        %457 = vst.msk [vmem:[#allocation3 + $0x40] sm:$0xff] %vm416, 0.0
        %458 = vst.msk [vmem:[#allocation3 + $0x48] sm:$0xff] %vm416, 0.0
        %459 = vst.msk [vmem:[#allocation3 + $0x50] sm:$0xff] %vm416, 0.0
        %460 = vst.msk [vmem:[#allocation3 + $0x58] sm:$0xff] %vm416, 0.0
        %461 = vst.msk [vmem:[#allocation3 + $0x60] sm:$0xff] %vm416, 0.0
        %462 = vst.msk [vmem:[#allocation3 + $0x68] sm:$0xff] %vm416, 0.0
        %463 = vst.msk [vmem:[#allocation3 + $0x70] sm:$0xff] %vm416, 0.0
        %464 = vst.msk [vmem:[#allocation3 + $0x78] sm:$0xff] %vm416, 0.0
        %465 = vst.msk [vmem:[#allocation3 + $0x80] sm:$0xff] %vm416, 0.0
        %466 = vst.msk [vmem:[#allocation3 + $0x88] sm:$0xff] %vm416, 0.0
        %467 = vst.msk [vmem:[#allocation3 + $0x90] sm:$0xff] %vm416, 0.0
        %468 = vst.msk [vmem:[#allocation3 + $0x98] sm:$0xff] %vm416, 0.0
        %469 = vst.msk [vmem:[#allocation3 + $0xa0] sm:$0xff] %vm416, 0.0
        %470 = vst.msk [vmem:[#allocation3 + $0xa8] sm:$0xff] %vm416, 0.0
        %471 = vst.msk [vmem:[#allocation3 + $0xb0] sm:$0xff] %vm416, 0.0
        %472 = vst.msk [vmem:[#allocation3 + $0xb8] sm:$0xff] %vm416, 0.0
        %473 = vst.msk [vmem:[#allocation3 + $0xc0] sm:$0xff] %vm416, 0.0
        %474 = vst.msk [vmem:[#allocation3 + $0xc8] sm:$0xff] %vm416, 0.0
        %475 = vst.msk [vmem:[#allocation3 + $0xd0] sm:$0xff] %vm416, 0.0
        %476 = vst.msk [vmem:[#allocation3 + $0xd8] sm:$0xff] %vm416, 0.0
        %477 = vst.msk [vmem:[#allocation3 + $0xe0] sm:$0xff] %vm416, 0.0
        %478 = vst.msk [vmem:[#allocation3 + $0xe8] sm:$0xff] %vm416, 0.0
        %479 = vst.msk [vmem:[#allocation3 + $0xf0] sm:$0xff] %vm416, 0.0
        %480 = vst.msk [vmem:[#allocation3 + $0xf8] sm:$0xff] %vm416, 0.0
        %481 = vst [vmem:[#allocation4] sm:$0xff] 0.0
        %482 = vst [vmem:[#allocation4 + $0x8] sm:$0xff] 0.0
        %483 = vst [vmem:[#allocation4 + $0x10] sm:$0xff] 0.0
        %484 = vst [vmem:[#allocation4 + $0x18] sm:$0xff] 0.0
        %485 = vst [vmem:[#allocation4 + $0x20] sm:$0xff] 0.0
        %486 = vst [vmem:[#allocation4 + $0x28] sm:$0xff] 0.0
        %487 = vst [vmem:[#allocation4 + $0x30] sm:$0xff] 0.0
        %488 = vst [vmem:[#allocation4 + $0x38] sm:$0xff] 0.0
        %489 = vst [vmem:[#allocation4 + $0x40] sm:$0xff] 0.0
        %490 = vst [vmem:[#allocation4 + $0x48] sm:$0xff] 0.0
        %491 = vst [vmem:[#allocation4 + $0x50] sm:$0xff] 0.0
        %492 = vst [vmem:[#allocation4 + $0x58] sm:$0xff] 0.0
        %493 = vst [vmem:[#allocation4 + $0x60] sm:$0xff] 0.0
        %494 = vst [vmem:[#allocation4 + $0x68] sm:$0xff] 0.0
        %495 = vst [vmem:[#allocation4 + $0x70] sm:$0xff] 0.0
        %496 = vst [vmem:[#allocation4 + $0x78] sm:$0xff] 0.0
        %497 = vst [vmem:[#allocation4 + $0x80] sm:$0xff] 0.0
        %498 = vst [vmem:[#allocation4 + $0x88] sm:$0xff] 0.0
        %499 = vst [vmem:[#allocation4 + $0x90] sm:$0xff] 0.0
        %500 = vst [vmem:[#allocation4 + $0x98] sm:$0xff] 0.0
        %501 = vst [vmem:[#allocation4 + $0xa0] sm:$0xff] 0.0
        %502 = vst [vmem:[#allocation4 + $0xa8] sm:$0xff] 0.0
        %503 = vst [vmem:[#allocation4 + $0xb0] sm:$0xff] 0.0
        %504 = vst [vmem:[#allocation4 + $0xb8] sm:$0xff] 0.0
        %505 = vst [vmem:[#allocation4 + $0xc0] sm:$0xff] 0.0
        %506 = vst [vmem:[#allocation4 + $0xc8] sm:$0xff] 0.0
        %507 = vst [vmem:[#allocation4 + $0xd0] sm:$0xff] 0.0
        %508 = vst [vmem:[#allocation4 + $0xd8] sm:$0xff] 0.0
        %509 = vst [vmem:[#allocation4 + $0xe0] sm:$0xff] 0.0
        %510 = vst [vmem:[#allocation4 + $0xe8] sm:$0xff] 0.0
        %511 = vst [vmem:[#allocation4 + $0xf0] sm:$0xff] 0.0
        %512 = vst [vmem:[#allocation4 + $0xf8] sm:$0xff] 0.0
      $region48: #{self_attention_2d.3} parent=43 // pred_fallthru
        _
      %v513 = vld [vmem:[%s378] sm:$0xf]
      %v514 = vld [vmem:[%s378 + $0x4] sm:$0xf]
      %v515 = vld [vmem:[%s378 + $0x8] sm:$0xf]
      %v516 = vld [vmem:[%s378 + $0xc] sm:$0xf]
      %v517 = vld [vmem:[%s378 + $0x10] sm:$0xf]
      %v518 = vld [vmem:[%s378 + $0x14] sm:$0xf]
      %v519 = vld [vmem:[%s378 + $0x18] sm:$0xf]
      %v520 = vld [vmem:[%s378 + $0x1c] sm:$0xf]
      %v521 = vld [vmem:[%s378 + $0x20] sm:$0xf]
      %v522 = vld [vmem:[%s378 + $0x24] sm:$0xf]
      %v523 = vld [vmem:[%s378 + $0x28] sm:$0xf]
      %v524 = vld [vmem:[%s378 + $0x2c] sm:$0xf]
      %v525 = vld [vmem:[%s378 + $0x30] sm:$0xf]
      %v526 = vld [vmem:[%s378 + $0x34] sm:$0xf]
      %v527 = vld [vmem:[%s378 + $0x38] sm:$0xf]
      %v528 = vld [vmem:[%s378 + $0x3c] sm:$0xf]
      %v529 = vld [vmem:[%s378 + $0x40] sm:$0xf]
      %v530 = vld [vmem:[%s378 + $0x44] sm:$0xf]
      %v531 = vld [vmem:[%s378 + $0x48] sm:$0xf]
      %v532 = vld [vmem:[%s378 + $0x4c] sm:$0xf]
      %v533 = vld [vmem:[%s378 + $0x50] sm:$0xf]
      %v534 = vld [vmem:[%s378 + $0x54] sm:$0xf]
      %v535 = vld [vmem:[%s378 + $0x58] sm:$0xf]
      %v536 = vld [vmem:[%s378 + $0x5c] sm:$0xf]
      %v537 = vld [vmem:[%s378 + $0x60] sm:$0xf]
      %v538 = vld [vmem:[%s378 + $0x64] sm:$0xf]
      %v539 = vld [vmem:[%s378 + $0x68] sm:$0xf]
      %v540 = vld [vmem:[%s378 + $0x6c] sm:$0xf]
      %v541 = vld [vmem:[%s378 + $0x70] sm:$0xf]
      %v542 = vld [vmem:[%s378 + $0x74] sm:$0xf]
      %v543 = vld [vmem:[%s378 + $0x78] sm:$0xf]
      %v544 = vld [vmem:[%s378 + $0x7c] sm:$0xf]
      %v545 = vld [vmem:[%s389] sm:$0xf]
      %v546 = vld [vmem:[%s389 + $0x4] sm:$0xf]
      %v547 = vld [vmem:[%s389 + $0x8] sm:$0xf]
      %v548 = vld [vmem:[%s389 + $0xc] sm:$0xf]
      %v549 = vld [vmem:[%s389 + $0x10] sm:$0xf]
      %v550 = vld [vmem:[%s389 + $0x14] sm:$0xf]
      %v551 = vld [vmem:[%s389 + $0x18] sm:$0xf]
      %v552 = vld [vmem:[%s389 + $0x1c] sm:$0xf]
      %v553 = vld [vmem:[%s389 + $0x20] sm:$0xf]
      %v554 = vld [vmem:[%s389 + $0x24] sm:$0xf]
      %v555 = vld [vmem:[%s389 + $0x28] sm:$0xf]
      %v556 = vld [vmem:[%s389 + $0x2c] sm:$0xf]
      %v557 = vld [vmem:[%s389 + $0x30] sm:$0xf]
      %v558 = vld [vmem:[%s389 + $0x34] sm:$0xf]
      %v559 = vld [vmem:[%s389 + $0x38] sm:$0xf]
      %v560 = vld [vmem:[%s389 + $0x3c] sm:$0xf]
      %v561 = vld [vmem:[%s389 + $0x40] sm:$0xf]
      %v562 = vld [vmem:[%s389 + $0x44] sm:$0xf]
      %v563 = vld [vmem:[%s389 + $0x48] sm:$0xf]
      %v564 = vld [vmem:[%s389 + $0x4c] sm:$0xf]
      %v565 = vld [vmem:[%s389 + $0x50] sm:$0xf]
      %v566 = vld [vmem:[%s389 + $0x54] sm:$0xf]
      %v567 = vld [vmem:[%s389 + $0x58] sm:$0xf]
      %v568 = vld [vmem:[%s389 + $0x5c] sm:$0xf]
      %v569 = vld [vmem:[%s389 + $0x60] sm:$0xf]
      %v570 = vld [vmem:[%s389 + $0x64] sm:$0xf]
      %v571 = vld [vmem:[%s389 + $0x68] sm:$0xf]
      %v572 = vld [vmem:[%s389 + $0x6c] sm:$0xf]
      %v573 = vld [vmem:[%s389 + $0x70] sm:$0xf]
      %v574 = vld [vmem:[%s389 + $0x74] sm:$0xf]
      %v575 = vld [vmem:[%s389 + $0x78] sm:$0xf]
      %v576 = vld [vmem:[%s389 + $0x7c] sm:$0xf]
      %v577 = vld [vmem:[%s400] sm:$0xf]
      %v578 = vld [vmem:[%s400 + $0x4] sm:$0xf]
      %v579 = vld [vmem:[%s400 + $0x8] sm:$0xf]
      %v580 = vld [vmem:[%s400 + $0xc] sm:$0xf]
      %v581 = vld [vmem:[%s400 + $0x10] sm:$0xf]
      %v582 = vld [vmem:[%s400 + $0x14] sm:$0xf]
      %v583 = vld [vmem:[%s400 + $0x18] sm:$0xf]
      %v584 = vld [vmem:[%s400 + $0x1c] sm:$0xf]
      %v585 = vld [vmem:[%s400 + $0x20] sm:$0xf]
      %v586 = vld [vmem:[%s400 + $0x24] sm:$0xf]
      %v587 = vld [vmem:[%s400 + $0x28] sm:$0xf]
      %v588 = vld [vmem:[%s400 + $0x2c] sm:$0xf]
      %v589 = vld [vmem:[%s400 + $0x30] sm:$0xf]
      %v590 = vld [vmem:[%s400 + $0x34] sm:$0xf]
      %v591 = vld [vmem:[%s400 + $0x38] sm:$0xf]
      %v592 = vld [vmem:[%s400 + $0x3c] sm:$0xf]
      %v593 = vld [vmem:[%s400 + $0x40] sm:$0xf]
      %v594 = vld [vmem:[%s400 + $0x44] sm:$0xf]
      %v595 = vld [vmem:[%s400 + $0x48] sm:$0xf]
      %v596 = vld [vmem:[%s400 + $0x4c] sm:$0xf]
      %v597 = vld [vmem:[%s400 + $0x50] sm:$0xf]
      %v598 = vld [vmem:[%s400 + $0x54] sm:$0xf]
      %v599 = vld [vmem:[%s400 + $0x58] sm:$0xf]
      %v600 = vld [vmem:[%s400 + $0x5c] sm:$0xf]
      %v601 = vld [vmem:[%s400 + $0x60] sm:$0xf]
      %v602 = vld [vmem:[%s400 + $0x64] sm:$0xf]
      %v603 = vld [vmem:[%s400 + $0x68] sm:$0xf]
      %v604 = vld [vmem:[%s400 + $0x6c] sm:$0xf]
      %v605 = vld [vmem:[%s400 + $0x70] sm:$0xf]
      %v606 = vld [vmem:[%s400 + $0x74] sm:$0xf]
      %v607 = vld [vmem:[%s400 + $0x78] sm:$0xf]
      %v608 = vld [vmem:[%s400 + $0x7c] sm:$0xf]
      %v641 = vunpack.c.l.b16 %v513
      %v642 = vunpack.c.l.b16 %v514
      %v643 = vunpack.c.l.b16 %v515
      %v644 = vunpack.c.l.b16 %v516
      %v645 = vunpack.c.l.b16 %v517
      %v646 = vunpack.c.l.b16 %v518
      %v647 = vunpack.c.l.b16 %v519
      %v648 = vunpack.c.l.b16 %v520
      %v649 = vunpack.c.l.b16 %v521
      %v650 = vunpack.c.l.b16 %v522
      %v651 = vunpack.c.l.b16 %v523
      %v652 = vunpack.c.l.b16 %v524
      %v653 = vunpack.c.l.b16 %v525
      %v654 = vunpack.c.l.b16 %v526
      %v655 = vunpack.c.l.b16 %v527
      %v656 = vunpack.c.l.b16 %v528
      %v657 = vunpack.c.l.b16 %v529
      %v658 = vunpack.c.l.b16 %v530
      %v659 = vunpack.c.l.b16 %v531
      %v660 = vunpack.c.l.b16 %v532
      %v661 = vunpack.c.l.b16 %v533
      %v662 = vunpack.c.l.b16 %v534
      %v663 = vunpack.c.l.b16 %v535
      %v664 = vunpack.c.l.b16 %v536
      %v665 = vunpack.c.l.b16 %v537
      %v666 = vunpack.c.l.b16 %v538
      %v667 = vunpack.c.l.b16 %v539
      %v668 = vunpack.c.l.b16 %v540
      %v669 = vunpack.c.l.b16 %v541
      %v670 = vunpack.c.l.b16 %v542
      %v671 = vunpack.c.l.b16 %v543
      %v672 = vunpack.c.l.b16 %v544
      %v673 = vpack.c.b16 %v642, %v641
      %v674 = vpack.c.b16 %v644, %v643
      %v675 = vpack.c.b16 %v646, %v645
      %v676 = vpack.c.b16 %v648, %v647
      %v677 = vpack.c.b16 %v650, %v649
      %v678 = vpack.c.b16 %v652, %v651
      %v679 = vpack.c.b16 %v654, %v653
      %v680 = vpack.c.b16 %v656, %v655
      %v681 = vpack.c.b16 %v658, %v657
      %v682 = vpack.c.b16 %v660, %v659
      %v683 = vpack.c.b16 %v662, %v661
      %v684 = vpack.c.b16 %v664, %v663
      %v685 = vpack.c.b16 %v666, %v665
      %v686 = vpack.c.b16 %v668, %v667
      %v687 = vpack.c.b16 %v670, %v669
      %v688 = vpack.c.b16 %v672, %v671
      %v737 = vunpack.c.l.b16 %v545
      %v738 = vunpack.c.l.b16 %v546
      %v739 = vunpack.c.l.b16 %v547
      %v740 = vunpack.c.l.b16 %v548
      %v741 = vunpack.c.l.b16 %v549
      %v742 = vunpack.c.l.b16 %v550
      %v743 = vunpack.c.l.b16 %v551
      %v744 = vunpack.c.l.b16 %v552
      %v745 = vunpack.c.l.b16 %v553
      %v746 = vunpack.c.l.b16 %v554
      %v747 = vunpack.c.l.b16 %v555
      %v748 = vunpack.c.l.b16 %v556
      %v749 = vunpack.c.l.b16 %v557
      %v750 = vunpack.c.l.b16 %v558
      %v751 = vunpack.c.l.b16 %v559
      %v752 = vunpack.c.l.b16 %v560
      %v753 = vunpack.c.l.b16 %v561
      %v754 = vunpack.c.l.b16 %v562
      %v755 = vunpack.c.l.b16 %v563
      %v756 = vunpack.c.l.b16 %v564
      %v757 = vunpack.c.l.b16 %v565
      %v758 = vunpack.c.l.b16 %v566
      %v759 = vunpack.c.l.b16 %v567
      %v760 = vunpack.c.l.b16 %v568
      %v761 = vunpack.c.l.b16 %v569
      %v762 = vunpack.c.l.b16 %v570
      %v763 = vunpack.c.l.b16 %v571
      %v764 = vunpack.c.l.b16 %v572
      %v765 = vunpack.c.l.b16 %v573
      %v766 = vunpack.c.l.b16 %v574
      %v767 = vunpack.c.l.b16 %v575
      %v768 = vunpack.c.l.b16 %v576
      %v769 = vpack.c.b16 %v738, %v737
      %v770 = vpack.c.b16 %v740, %v739
      %v771 = vpack.c.b16 %v742, %v741
      %v772 = vpack.c.b16 %v744, %v743
      %v773 = vpack.c.b16 %v746, %v745
      %v774 = vpack.c.b16 %v748, %v747
      %v775 = vpack.c.b16 %v750, %v749
      %v776 = vpack.c.b16 %v752, %v751
      %v777 = vpack.c.b16 %v754, %v753
      %v778 = vpack.c.b16 %v756, %v755
      %v779 = vpack.c.b16 %v758, %v757
      %v780 = vpack.c.b16 %v760, %v759
      %v781 = vpack.c.b16 %v762, %v761
      %v782 = vpack.c.b16 %v764, %v763
      %v783 = vpack.c.b16 %v766, %v765
      %v784 = vpack.c.b16 %v768, %v767
      %801 = vmatpush.bf16.xpose.msra.mxu0 %v776
      %802 = vmatpush.bf16.xpose.msra.mxu0 %v775
      %803 = vmatpush.bf16.xpose.msra.mxu0 %v774
      %804 = vmatpush.bf16.xpose.msra.mxu0 %v773
      %805 = vmatpush.bf16.xpose.msra.mxu0 %v772
      %806 = vmatpush.bf16.xpose.msra.mxu0 %v771
      %807 = vmatpush.bf16.xpose.msra.mxu0 %v770
      %808 = vmatpush.bf16.xpose.msra.mxu0 %v769
      %809 = vmatmul.bf16.gmra.mxu0 %v673
      %v810 = vpop.f32.mrf.mxu0
      %v811 = vadd.f32 0.0, %v810
      %v812 = vpop.f32.mrf.mxu0
      %v813 = vadd.f32 0.0, %v812
      %814 = vmatmul.bf16.gmra.mxu0 %v674
      %v815 = vpop.f32.mrf.mxu0
      %v816 = vadd.f32 0.0, %v815
      %v817 = vpop.f32.mrf.mxu0
      %v818 = vadd.f32 0.0, %v817
      %819 = vmatmul.bf16.gmra.mxu0 %v675
      %v820 = vpop.f32.mrf.mxu0
      %v821 = vadd.f32 0.0, %v820
      %v822 = vpop.f32.mrf.mxu0
      %v823 = vadd.f32 0.0, %v822
      %824 = vmatmul.bf16.gmra.mxu0 %v676
      %v825 = vpop.f32.mrf.mxu0
      %v826 = vadd.f32 0.0, %v825
      %v827 = vpop.f32.mrf.mxu0
      %v828 = vadd.f32 0.0, %v827
      %829 = vmatmul.bf16.gmra.mxu0 %v677
      %v830 = vpop.f32.mrf.mxu0
      %v831 = vadd.f32 0.0, %v830
      %v832 = vpop.f32.mrf.mxu0
      %v833 = vadd.f32 0.0, %v832
      %834 = vmatmul.bf16.gmra.mxu0 %v678
      %v835 = vpop.f32.mrf.mxu0
      %v836 = vadd.f32 0.0, %v835
      %v837 = vpop.f32.mrf.mxu0
      %v838 = vadd.f32 0.0, %v837
      %839 = vmatmul.bf16.gmra.mxu0 %v679
      %v840 = vpop.f32.mrf.mxu0
      %v841 = vadd.f32 0.0, %v840
      %v842 = vpop.f32.mrf.mxu0
      %v843 = vadd.f32 0.0, %v842
      %844 = vmatmul.bf16.gmra.mxu0 %v680
      %v845 = vpop.f32.mrf.mxu0
      %v846 = vadd.f32 0.0, %v845
      %v847 = vpop.f32.mrf.mxu0
      %v848 = vadd.f32 0.0, %v847
      %849 = vmatmul.bf16.gmra.mxu0 %v681
      %v850 = vpop.f32.mrf.mxu0
      %v851 = vadd.f32 0.0, %v850
      %v852 = vpop.f32.mrf.mxu0
      %v853 = vadd.f32 0.0, %v852
      %854 = vmatmul.bf16.gmra.mxu0 %v682
      %v855 = vpop.f32.mrf.mxu0
      %v856 = vadd.f32 0.0, %v855
      %v857 = vpop.f32.mrf.mxu0
      %v858 = vadd.f32 0.0, %v857
      %859 = vmatmul.bf16.gmra.mxu0 %v683
      %v860 = vpop.f32.mrf.mxu0
      %v861 = vadd.f32 0.0, %v860
      %v862 = vpop.f32.mrf.mxu0
      %v863 = vadd.f32 0.0, %v862
      %864 = vmatmul.bf16.gmra.mxu0 %v684
      %v865 = vpop.f32.mrf.mxu0
      %v866 = vadd.f32 0.0, %v865
      %v867 = vpop.f32.mrf.mxu0
      %v868 = vadd.f32 0.0, %v867
      %869 = vmatmul.bf16.gmra.mxu0 %v685
      %v870 = vpop.f32.mrf.mxu0
      %v871 = vadd.f32 0.0, %v870
      %v872 = vpop.f32.mrf.mxu0
      %v873 = vadd.f32 0.0, %v872
      %874 = vmatmul.bf16.gmra.mxu0 %v686
      %v875 = vpop.f32.mrf.mxu0
      %v876 = vadd.f32 0.0, %v875
      %v877 = vpop.f32.mrf.mxu0
      %v878 = vadd.f32 0.0, %v877
      %879 = vmatmul.bf16.gmra.mxu0 %v687
      %v880 = vpop.f32.mrf.mxu0
      %v881 = vadd.f32 0.0, %v880
      %v882 = vpop.f32.mrf.mxu0
      %v883 = vadd.f32 0.0, %v882
      %884 = vmatmul.bf16.gmra.mxu0 %v688
      %v885 = vpop.f32.mrf.mxu0
      %v886 = vadd.f32 0.0, %v885
      %v887 = vpop.f32.mrf.mxu0
      %v888 = vadd.f32 0.0, %v887
      %889 = vdwg.mxu0
      %890 = vmatpush.bf16.xpose.msra.mxu0 %v784
      %891 = vmatpush.bf16.xpose.msra.mxu0 %v783
      %892 = vmatpush.bf16.xpose.msra.mxu0 %v782
      %893 = vmatpush.bf16.xpose.msra.mxu0 %v781
      %894 = vmatpush.bf16.xpose.msra.mxu0 %v780
      %895 = vmatpush.bf16.xpose.msra.mxu0 %v779
      %896 = vmatpush.bf16.xpose.msra.mxu0 %v778
      %897 = vmatpush.bf16.xpose.msra.mxu0 %v777
      %898 = vmatmul.bf16.gmra.mxu0 %v673
      %v899 = vpop.f32.mrf.mxu0
      %v900 = vadd.f32 0.0, %v899
      %v901 = vpop.f32.mrf.mxu0
      %v902 = vadd.f32 0.0, %v901
      %903 = vmatmul.bf16.gmra.mxu0 %v674
      %v904 = vpop.f32.mrf.mxu0
      %v905 = vadd.f32 0.0, %v904
      %v906 = vpop.f32.mrf.mxu0
      %v907 = vadd.f32 0.0, %v906
      %908 = vmatmul.bf16.gmra.mxu0 %v675
      %v909 = vpop.f32.mrf.mxu0
      %v910 = vadd.f32 0.0, %v909
      %v911 = vpop.f32.mrf.mxu0
      %v912 = vadd.f32 0.0, %v911
      %913 = vmatmul.bf16.gmra.mxu0 %v676
      %v914 = vpop.f32.mrf.mxu0
      %v915 = vadd.f32 0.0, %v914
      %v916 = vpop.f32.mrf.mxu0
      %v917 = vadd.f32 0.0, %v916
      %918 = vmatmul.bf16.gmra.mxu0 %v677
      %v919 = vpop.f32.mrf.mxu0
      %v920 = vadd.f32 0.0, %v919
      %v921 = vpop.f32.mrf.mxu0
      %v922 = vadd.f32 0.0, %v921
      %923 = vmatmul.bf16.gmra.mxu0 %v678
      %v924 = vpop.f32.mrf.mxu0
      %v925 = vadd.f32 0.0, %v924
      %v926 = vpop.f32.mrf.mxu0
      %v927 = vadd.f32 0.0, %v926
      %928 = vmatmul.bf16.gmra.mxu0 %v679
      %v929 = vpop.f32.mrf.mxu0
      %v930 = vadd.f32 0.0, %v929
      %v931 = vpop.f32.mrf.mxu0
      %v932 = vadd.f32 0.0, %v931
      %933 = vmatmul.bf16.gmra.mxu0 %v680
      %v934 = vpop.f32.mrf.mxu0
      %v935 = vadd.f32 0.0, %v934
      %v936 = vpop.f32.mrf.mxu0
      %v937 = vadd.f32 0.0, %v936
      %938 = vmatmul.bf16.gmra.mxu0 %v681
      %v939 = vpop.f32.mrf.mxu0
      %v940 = vadd.f32 0.0, %v939
      %v941 = vpop.f32.mrf.mxu0
      %v942 = vadd.f32 0.0, %v941
      %943 = vmatmul.bf16.gmra.mxu0 %v682
      %v944 = vpop.f32.mrf.mxu0
      %v945 = vadd.f32 0.0, %v944
      %v946 = vpop.f32.mrf.mxu0
      %v947 = vadd.f32 0.0, %v946
      %948 = vmatmul.bf16.gmra.mxu0 %v683
      %v949 = vpop.f32.mrf.mxu0
      %v950 = vadd.f32 0.0, %v949
      %v951 = vpop.f32.mrf.mxu0
      %v952 = vadd.f32 0.0, %v951
      %953 = vmatmul.bf16.gmra.mxu0 %v684
      %v954 = vpop.f32.mrf.mxu0
      %v955 = vadd.f32 0.0, %v954
      %v956 = vpop.f32.mrf.mxu0
      %v957 = vadd.f32 0.0, %v956
      %958 = vmatmul.bf16.gmra.mxu0 %v685
      %v959 = vpop.f32.mrf.mxu0
      %v960 = vadd.f32 0.0, %v959
      %v961 = vpop.f32.mrf.mxu0
      %v962 = vadd.f32 0.0, %v961
      %963 = vmatmul.bf16.gmra.mxu0 %v686
      %v964 = vpop.f32.mrf.mxu0
      %v965 = vadd.f32 0.0, %v964
      %v966 = vpop.f32.mrf.mxu0
      %v967 = vadd.f32 0.0, %v966
      %968 = vmatmul.bf16.gmra.mxu0 %v687
      %v969 = vpop.f32.mrf.mxu0
      %v970 = vadd.f32 0.0, %v969
      %v971 = vpop.f32.mrf.mxu0
      %v972 = vadd.f32 0.0, %v971
      %973 = vmatmul.bf16.gmra.mxu0 %v688
      %v974 = vpop.f32.mrf.mxu0
      %v975 = vadd.f32 0.0, %v974
      %v976 = vpop.f32.mrf.mxu0
      %v977 = vadd.f32 0.0, %v976
      %978 = vdwg.mxu0
      %v979 = vld [vmem:[#allocation2] sm:$0xff]
      %v980 = vld [vmem:[#allocation2 + $0x8] sm:$0xff]
      %v981 = vld [vmem:[#allocation2 + $0x10] sm:$0xff]
      %v982 = vld [vmem:[#allocation2 + $0x18] sm:$0xff]
      %v983 = vld [vmem:[#allocation2 + $0x20] sm:$0xff]
      %v984 = vld [vmem:[#allocation2 + $0x28] sm:$0xff]
      %v985 = vld [vmem:[#allocation2 + $0x30] sm:$0xff]
      %v986 = vld [vmem:[#allocation2 + $0x38] sm:$0xff]
      %v987 = vld [vmem:[#allocation2 + $0x40] sm:$0xff]
      %v988 = vld [vmem:[#allocation2 + $0x48] sm:$0xff]
      %v989 = vld [vmem:[#allocation2 + $0x50] sm:$0xff]
      %v990 = vld [vmem:[#allocation2 + $0x58] sm:$0xff]
      %v991 = vld [vmem:[#allocation2 + $0x60] sm:$0xff]
      %v992 = vld [vmem:[#allocation2 + $0x68] sm:$0xff]
      %v993 = vld [vmem:[#allocation2 + $0x70] sm:$0xff]
      %v994 = vld [vmem:[#allocation2 + $0x78] sm:$0xff]
      %v995 = vld [vmem:[#allocation2 + $0x80] sm:$0xff]
      %v996 = vld [vmem:[#allocation2 + $0x88] sm:$0xff]
      %v997 = vld [vmem:[#allocation2 + $0x90] sm:$0xff]
      %v998 = vld [vmem:[#allocation2 + $0x98] sm:$0xff]
      %v999 = vld [vmem:[#allocation2 + $0xa0] sm:$0xff]
      %v1000 = vld [vmem:[#allocation2 + $0xa8] sm:$0xff]
      %v1001 = vld [vmem:[#allocation2 + $0xb0] sm:$0xff]
      %v1002 = vld [vmem:[#allocation2 + $0xb8] sm:$0xff]
      %v1003 = vld [vmem:[#allocation2 + $0xc0] sm:$0xff]
      %v1004 = vld [vmem:[#allocation2 + $0xc8] sm:$0xff]
      %v1005 = vld [vmem:[#allocation2 + $0xd0] sm:$0xff]
      %v1006 = vld [vmem:[#allocation2 + $0xd8] sm:$0xff]
      %v1007 = vld [vmem:[#allocation2 + $0xe0] sm:$0xff]
      %v1008 = vld [vmem:[#allocation2 + $0xe8] sm:$0xff]
      %v1009 = vld [vmem:[#allocation2 + $0xf0] sm:$0xff]
      %v1010 = vld [vmem:[#allocation2 + $0xf8] sm:$0xff]
      %v1011 = vmax.f32 %v811, %v900
      %1012 = vmax.xlane.f32.xlu0 %v1011
      %v1013 = vpop.xlane.xlu0 %1012
      %v1014 = vmax.f32 %v813, %v902
      %1015 = vmax.xlane.f32.xlu0 %v1014
      %v1016 = vpop.xlane.xlu0 %1015
      %v1017 = vmax.f32 %v816, %v905
      %1018 = vmax.xlane.f32.xlu0 %v1017
      %v1019 = vpop.xlane.xlu0 %1018
      %v1020 = vmax.f32 %v818, %v907
      %1021 = vmax.xlane.f32.xlu0 %v1020
      %v1022 = vpop.xlane.xlu0 %1021
      %v1023 = vmax.f32 %v821, %v910
      %1024 = vmax.xlane.f32.xlu0 %v1023
      %v1025 = vpop.xlane.xlu0 %1024
      %v1026 = vmax.f32 %v823, %v912
      %1027 = vmax.xlane.f32.xlu0 %v1026
      %v1028 = vpop.xlane.xlu0 %1027
      %v1029 = vmax.f32 %v826, %v915
      %1030 = vmax.xlane.f32.xlu0 %v1029
      %v1031 = vpop.xlane.xlu0 %1030
      %v1032 = vmax.f32 %v828, %v917
      %1033 = vmax.xlane.f32.xlu0 %v1032
      %v1034 = vpop.xlane.xlu0 %1033
      %v1035 = vmax.f32 %v831, %v920
      %1036 = vmax.xlane.f32.xlu0 %v1035
      %v1037 = vpop.xlane.xlu0 %1036
      %v1038 = vmax.f32 %v833, %v922
      %1039 = vmax.xlane.f32.xlu0 %v1038
      %v1040 = vpop.xlane.xlu0 %1039
      %v1041 = vmax.f32 %v836, %v925
      %1042 = vmax.xlane.f32.xlu0 %v1041
      %v1043 = vpop.xlane.xlu0 %1042
      %v1044 = vmax.f32 %v838, %v927
      %1045 = vmax.xlane.f32.xlu0 %v1044
      %v1046 = vpop.xlane.xlu0 %1045
      %v1047 = vmax.f32 %v841, %v930
      %1048 = vmax.xlane.f32.xlu0 %v1047
      %v1049 = vpop.xlane.xlu0 %1048
      %v1050 = vmax.f32 %v843, %v932
      %1051 = vmax.xlane.f32.xlu0 %v1050
      %v1052 = vpop.xlane.xlu0 %1051
      %v1053 = vmax.f32 %v846, %v935
      %1054 = vmax.xlane.f32.xlu0 %v1053
      %v1055 = vpop.xlane.xlu0 %1054
      %v1056 = vmax.f32 %v848, %v937
      %1057 = vmax.xlane.f32.xlu0 %v1056
      %v1058 = vpop.xlane.xlu0 %1057
      %v1059 = vmax.f32 %v851, %v940
      %1060 = vmax.xlane.f32.xlu0 %v1059
      %v1061 = vpop.xlane.xlu0 %1060
      %v1062 = vmax.f32 %v853, %v942
      %1063 = vmax.xlane.f32.xlu0 %v1062
      %v1064 = vpop.xlane.xlu0 %1063
      %v1065 = vmax.f32 %v856, %v945
      %1066 = vmax.xlane.f32.xlu0 %v1065
      %v1067 = vpop.xlane.xlu0 %1066
      %v1068 = vmax.f32 %v858, %v947
      %1069 = vmax.xlane.f32.xlu0 %v1068
      %v1070 = vpop.xlane.xlu0 %1069
      %v1071 = vmax.f32 %v861, %v950
      %1072 = vmax.xlane.f32.xlu0 %v1071
      %v1073 = vpop.xlane.xlu0 %1072
      %v1074 = vmax.f32 %v863, %v952
      %1075 = vmax.xlane.f32.xlu0 %v1074
      %v1076 = vpop.xlane.xlu0 %1075
      %v1077 = vmax.f32 %v866, %v955
      %1078 = vmax.xlane.f32.xlu0 %v1077
      %v1079 = vpop.xlane.xlu0 %1078
      %v1080 = vmax.f32 %v868, %v957
      %1081 = vmax.xlane.f32.xlu0 %v1080
      %v1082 = vpop.xlane.xlu0 %1081
      %v1083 = vmax.f32 %v871, %v960
      %1084 = vmax.xlane.f32.xlu0 %v1083
      %v1085 = vpop.xlane.xlu0 %1084
      %v1086 = vmax.f32 %v873, %v962
      %1087 = vmax.xlane.f32.xlu0 %v1086
      %v1088 = vpop.xlane.xlu0 %1087
      %v1089 = vmax.f32 %v876, %v965
      %1090 = vmax.xlane.f32.xlu0 %v1089
      %v1091 = vpop.xlane.xlu0 %1090
      %v1092 = vmax.f32 %v878, %v967
      %1093 = vmax.xlane.f32.xlu0 %v1092
      %v1094 = vpop.xlane.xlu0 %1093
      %v1095 = vmax.f32 %v881, %v970
      %1096 = vmax.xlane.f32.xlu0 %v1095
      %v1097 = vpop.xlane.xlu0 %1096
      %v1098 = vmax.f32 %v883, %v972
      %1099 = vmax.xlane.f32.xlu0 %v1098
      %v1100 = vpop.xlane.xlu0 %1099
      %v1101 = vmax.f32 %v886, %v975
      %1102 = vmax.xlane.f32.xlu0 %v1101
      %v1103 = vpop.xlane.xlu0 %1102
      %v1104 = vmax.f32 %v888, %v977
      %1105 = vmax.xlane.f32.xlu0 %v1104
      %v1106 = vpop.xlane.xlu0 %1105
      %v1107 = vmax.f32 %v979, %v1013
      %v1108 = vmax.f32 %v980, %v1016
      %v1109 = vmax.f32 %v981, %v1019
      %v1110 = vmax.f32 %v982, %v1022
      %v1111 = vmax.f32 %v983, %v1025
      %v1112 = vmax.f32 %v984, %v1028
      %v1113 = vmax.f32 %v985, %v1031
      %v1114 = vmax.f32 %v986, %v1034
      %v1115 = vmax.f32 %v987, %v1037
      %v1116 = vmax.f32 %v988, %v1040
      %v1117 = vmax.f32 %v989, %v1043
      %v1118 = vmax.f32 %v990, %v1046
      %v1119 = vmax.f32 %v991, %v1049
      %v1120 = vmax.f32 %v992, %v1052
      %v1121 = vmax.f32 %v993, %v1055
      %v1122 = vmax.f32 %v994, %v1058
      %v1123 = vmax.f32 %v995, %v1061
      %v1124 = vmax.f32 %v996, %v1064
      %v1125 = vmax.f32 %v997, %v1067
      %v1126 = vmax.f32 %v998, %v1070
      %v1127 = vmax.f32 %v999, %v1073
      %v1128 = vmax.f32 %v1000, %v1076
      %v1129 = vmax.f32 %v1001, %v1079
      %v1130 = vmax.f32 %v1002, %v1082
      %v1131 = vmax.f32 %v1003, %v1085
      %v1132 = vmax.f32 %v1004, %v1088
      %v1133 = vmax.f32 %v1005, %v1091
      %v1134 = vmax.f32 %v1006, %v1094
      %v1135 = vmax.f32 %v1007, %v1097
      %v1136 = vmax.f32 %v1008, %v1100
      %v1137 = vmax.f32 %v1009, %v1103
      %v1138 = vmax.f32 %v1010, %v1106
      %v1139 = vsub.f32 %v979, %v1107
      %v1140 = vsub.f32 %v980, %v1108
      %v1141 = vsub.f32 %v981, %v1109
      %v1142 = vsub.f32 %v982, %v1110
      %v1143 = vsub.f32 %v983, %v1111
      %v1144 = vsub.f32 %v984, %v1112
      %v1145 = vsub.f32 %v985, %v1113
      %v1146 = vsub.f32 %v986, %v1114
      %v1147 = vsub.f32 %v987, %v1115
      %v1148 = vsub.f32 %v988, %v1116
      %v1149 = vsub.f32 %v989, %v1117
      %v1150 = vsub.f32 %v990, %v1118
      %v1151 = vsub.f32 %v991, %v1119
      %v1152 = vsub.f32 %v992, %v1120
      %v1153 = vsub.f32 %v993, %v1121
      %v1154 = vsub.f32 %v994, %v1122
      %v1155 = vsub.f32 %v995, %v1123
      %v1156 = vsub.f32 %v996, %v1124
      %v1157 = vsub.f32 %v997, %v1125
      %v1158 = vsub.f32 %v998, %v1126
      %v1159 = vsub.f32 %v999, %v1127
      %v1160 = vsub.f32 %v1000, %v1128
      %v1161 = vsub.f32 %v1001, %v1129
      %v1162 = vsub.f32 %v1002, %v1130
      %v1163 = vsub.f32 %v1003, %v1131
      %v1164 = vsub.f32 %v1004, %v1132
      %v1165 = vsub.f32 %v1005, %v1133
      %v1166 = vsub.f32 %v1006, %v1134
      %v1167 = vsub.f32 %v1007, %v1135
      %v1168 = vsub.f32 %v1008, %v1136
      %v1169 = vsub.f32 %v1009, %v1137
      %v1170 = vsub.f32 %v1010, %v1138
      %v1171 = vmul.f32 %v1139, 1.442695
      %v1172 = vpow.pop %v1171
      %v1173 = vmul.f32 %v1140, 1.442695
      %v1174 = vpow.pop %v1173
      %v1175 = vmul.f32 %v1141, 1.442695
      %v1176 = vpow.pop %v1175
      %v1177 = vmul.f32 %v1142, 1.442695
      %v1178 = vpow.pop %v1177
      %v1179 = vmul.f32 %v1143, 1.442695
      %v1180 = vpow.pop %v1179
      %v1181 = vmul.f32 %v1144, 1.442695
      %v1182 = vpow.pop %v1181
      %v1183 = vmul.f32 %v1145, 1.442695
      %v1184 = vpow.pop %v1183
      %v1185 = vmul.f32 %v1146, 1.442695
      %v1186 = vpow.pop %v1185
      %v1187 = vmul.f32 %v1147, 1.442695
      %v1188 = vpow.pop %v1187
      %v1189 = vmul.f32 %v1148, 1.442695
      %v1190 = vpow.pop %v1189
      %v1191 = vmul.f32 %v1149, 1.442695
      %v1192 = vpow.pop %v1191
      %v1193 = vmul.f32 %v1150, 1.442695
      %v1194 = vpow.pop %v1193
      %v1195 = vmul.f32 %v1151, 1.442695
      %v1196 = vpow.pop %v1195
      %v1197 = vmul.f32 %v1152, 1.442695
      %v1198 = vpow.pop %v1197
      %v1199 = vmul.f32 %v1153, 1.442695
      %v1200 = vpow.pop %v1199
      %v1201 = vmul.f32 %v1154, 1.442695
      %v1202 = vpow.pop %v1201
      %v1203 = vmul.f32 %v1155, 1.442695
      %v1204 = vpow.pop %v1203
      %v1205 = vmul.f32 %v1156, 1.442695
      %v1206 = vpow.pop %v1205
      %v1207 = vmul.f32 %v1157, 1.442695
      %v1208 = vpow.pop %v1207
      %v1209 = vmul.f32 %v1158, 1.442695
      %v1210 = vpow.pop %v1209
      %v1211 = vmul.f32 %v1159, 1.442695
      %v1212 = vpow.pop %v1211
      %v1213 = vmul.f32 %v1160, 1.442695
      %v1214 = vpow.pop %v1213
      %v1215 = vmul.f32 %v1161, 1.442695
      %v1216 = vpow.pop %v1215
      %v1217 = vmul.f32 %v1162, 1.442695
      %v1218 = vpow.pop %v1217
      %v1219 = vmul.f32 %v1163, 1.442695
      %v1220 = vpow.pop %v1219
      %v1221 = vmul.f32 %v1164, 1.442695
      %v1222 = vpow.pop %v1221
      %v1223 = vmul.f32 %v1165, 1.442695
      %v1224 = vpow.pop %v1223
      %v1225 = vmul.f32 %v1166, 1.442695
      %v1226 = vpow.pop %v1225
      %v1227 = vmul.f32 %v1167, 1.442695
      %v1228 = vpow.pop %v1227
      %v1229 = vmul.f32 %v1168, 1.442695
      %v1230 = vpow.pop %v1229
      %v1231 = vmul.f32 %v1169, 1.442695
      %v1232 = vpow.pop %v1231
      %v1233 = vmul.f32 %v1170, 1.442695
      %v1234 = vpow.pop %v1233
      %1236 = vset.pattern.permute.xlu0 0
      %1237 = vperm.xlu0 %1236, %v1107
      %v1238 = vpop.permute.xlu0 %1237
      %1241 = vset.pattern.permute.xlu0 0
      %1242 = vperm.xlu0 %1241, %v1108
      %v1243 = vpop.permute.xlu0 %1242
      %1246 = vset.pattern.permute.xlu0 0
      %1247 = vperm.xlu0 %1246, %v1109
      %v1248 = vpop.permute.xlu0 %1247
      %1251 = vset.pattern.permute.xlu0 0
      %1252 = vperm.xlu0 %1251, %v1110
      %v1253 = vpop.permute.xlu0 %1252
      %1256 = vset.pattern.permute.xlu0 0
      %1257 = vperm.xlu0 %1256, %v1111
      %v1258 = vpop.permute.xlu0 %1257
      %1261 = vset.pattern.permute.xlu0 0
      %1262 = vperm.xlu0 %1261, %v1112
      %v1263 = vpop.permute.xlu0 %1262
      %1266 = vset.pattern.permute.xlu0 0
      %1267 = vperm.xlu0 %1266, %v1113
      %v1268 = vpop.permute.xlu0 %1267
      %1271 = vset.pattern.permute.xlu0 0
      %1272 = vperm.xlu0 %1271, %v1114
      %v1273 = vpop.permute.xlu0 %1272
      %1276 = vset.pattern.permute.xlu0 0
      %1277 = vperm.xlu0 %1276, %v1115
      %v1278 = vpop.permute.xlu0 %1277
      %1281 = vset.pattern.permute.xlu0 0
      %1282 = vperm.xlu0 %1281, %v1116
      %v1283 = vpop.permute.xlu0 %1282
      %1286 = vset.pattern.permute.xlu0 0
      %1287 = vperm.xlu0 %1286, %v1117
      %v1288 = vpop.permute.xlu0 %1287
      %1291 = vset.pattern.permute.xlu0 0
      %1292 = vperm.xlu0 %1291, %v1118
      %v1293 = vpop.permute.xlu0 %1292
      %1296 = vset.pattern.permute.xlu0 0
      %1297 = vperm.xlu0 %1296, %v1119
      %v1298 = vpop.permute.xlu0 %1297
      %1301 = vset.pattern.permute.xlu0 0
      %1302 = vperm.xlu0 %1301, %v1120
      %v1303 = vpop.permute.xlu0 %1302
      %1306 = vset.pattern.permute.xlu0 0
      %1307 = vperm.xlu0 %1306, %v1121
      %v1308 = vpop.permute.xlu0 %1307
      %1311 = vset.pattern.permute.xlu0 0
      %1312 = vperm.xlu0 %1311, %v1122
      %v1313 = vpop.permute.xlu0 %1312
      %1316 = vset.pattern.permute.xlu0 0
      %1317 = vperm.xlu0 %1316, %v1123
      %v1318 = vpop.permute.xlu0 %1317
      %1321 = vset.pattern.permute.xlu0 0
      %1322 = vperm.xlu0 %1321, %v1124
      %v1323 = vpop.permute.xlu0 %1322
      %1326 = vset.pattern.permute.xlu0 0
      %1327 = vperm.xlu0 %1326, %v1125
      %v1328 = vpop.permute.xlu0 %1327
      %1331 = vset.pattern.permute.xlu0 0
      %1332 = vperm.xlu0 %1331, %v1126
      %v1333 = vpop.permute.xlu0 %1332
      %1336 = vset.pattern.permute.xlu0 0
      %1337 = vperm.xlu0 %1336, %v1127
      %v1338 = vpop.permute.xlu0 %1337
      %1341 = vset.pattern.permute.xlu0 0
      %1342 = vperm.xlu0 %1341, %v1128
      %v1343 = vpop.permute.xlu0 %1342
      %1346 = vset.pattern.permute.xlu0 0
      %1347 = vperm.xlu0 %1346, %v1129
      %v1348 = vpop.permute.xlu0 %1347
      %1351 = vset.pattern.permute.xlu0 0
      %1352 = vperm.xlu0 %1351, %v1130
      %v1353 = vpop.permute.xlu0 %1352
      %1356 = vset.pattern.permute.xlu0 0
      %1357 = vperm.xlu0 %1356, %v1131
      %v1358 = vpop.permute.xlu0 %1357
      %1361 = vset.pattern.permute.xlu0 0
      %1362 = vperm.xlu0 %1361, %v1132
      %v1363 = vpop.permute.xlu0 %1362
      %1366 = vset.pattern.permute.xlu0 0
      %1367 = vperm.xlu0 %1366, %v1133
      %v1368 = vpop.permute.xlu0 %1367
      %1371 = vset.pattern.permute.xlu0 0
      %1372 = vperm.xlu0 %1371, %v1134
      %v1373 = vpop.permute.xlu0 %1372
      %1376 = vset.pattern.permute.xlu0 0
      %1377 = vperm.xlu0 %1376, %v1135
      %v1378 = vpop.permute.xlu0 %1377
      %1381 = vset.pattern.permute.xlu0 0
      %1382 = vperm.xlu0 %1381, %v1136
      %v1383 = vpop.permute.xlu0 %1382
      %1386 = vset.pattern.permute.xlu0 0
      %1387 = vperm.xlu0 %1386, %v1137
      %v1388 = vpop.permute.xlu0 %1387
      %1391 = vset.pattern.permute.xlu0 0
      %1392 = vperm.xlu0 %1391, %v1138
      %v1393 = vpop.permute.xlu0 %1392
      %v1395 = vsub.f32 %v811, %v1238
      %v1396 = vsub.f32 %v900, %v1238
      %v1397 = vsub.f32 %v813, %v1243
      %v1398 = vsub.f32 %v902, %v1243
      %v1399 = vsub.f32 %v816, %v1248
      %v1400 = vsub.f32 %v905, %v1248
      %v1401 = vsub.f32 %v818, %v1253
      %v1402 = vsub.f32 %v907, %v1253
      %v1403 = vsub.f32 %v821, %v1258
      %v1404 = vsub.f32 %v910, %v1258
      %v1405 = vsub.f32 %v823, %v1263
      %v1406 = vsub.f32 %v912, %v1263
      %v1407 = vsub.f32 %v826, %v1268
      %v1408 = vsub.f32 %v915, %v1268
      %v1409 = vsub.f32 %v828, %v1273
      %v1410 = vsub.f32 %v917, %v1273
      %v1411 = vsub.f32 %v831, %v1278
      %v1412 = vsub.f32 %v920, %v1278
      %v1413 = vsub.f32 %v833, %v1283
      %v1414 = vsub.f32 %v922, %v1283
      %v1415 = vsub.f32 %v836, %v1288
      %v1416 = vsub.f32 %v925, %v1288
      %v1417 = vsub.f32 %v838, %v1293
      %v1418 = vsub.f32 %v927, %v1293
      %v1419 = vsub.f32 %v841, %v1298
      %v1420 = vsub.f32 %v930, %v1298
      %v1421 = vsub.f32 %v843, %v1303
      %v1422 = vsub.f32 %v932, %v1303
      %v1423 = vsub.f32 %v846, %v1308
      %v1424 = vsub.f32 %v935, %v1308
      %v1425 = vsub.f32 %v848, %v1313
      %v1426 = vsub.f32 %v937, %v1313
      %v1427 = vsub.f32 %v851, %v1318
      %v1428 = vsub.f32 %v940, %v1318
      %v1429 = vsub.f32 %v853, %v1323
      %v1430 = vsub.f32 %v942, %v1323
      %v1431 = vsub.f32 %v856, %v1328
      %v1432 = vsub.f32 %v945, %v1328
      %v1433 = vsub.f32 %v858, %v1333
      %v1434 = vsub.f32 %v947, %v1333
      %v1435 = vsub.f32 %v861, %v1338
      %v1436 = vsub.f32 %v950, %v1338
      %v1437 = vsub.f32 %v863, %v1343
      %v1438 = vsub.f32 %v952, %v1343
      %v1439 = vsub.f32 %v866, %v1348
      %v1440 = vsub.f32 %v955, %v1348
      %v1441 = vsub.f32 %v868, %v1353
      %v1442 = vsub.f32 %v957, %v1353
      %v1443 = vsub.f32 %v871, %v1358
      %v1444 = vsub.f32 %v960, %v1358
      %v1445 = vsub.f32 %v873, %v1363
      %v1446 = vsub.f32 %v962, %v1363
      %v1447 = vsub.f32 %v876, %v1368
      %v1448 = vsub.f32 %v965, %v1368
      %v1449 = vsub.f32 %v878, %v1373
      %v1450 = vsub.f32 %v967, %v1373
      %v1451 = vsub.f32 %v881, %v1378
      %v1452 = vsub.f32 %v970, %v1378
      %v1453 = vsub.f32 %v883, %v1383
      %v1454 = vsub.f32 %v972, %v1383
      %v1455 = vsub.f32 %v886, %v1388
      %v1456 = vsub.f32 %v975, %v1388
      %v1457 = vsub.f32 %v888, %v1393
      %v1458 = vsub.f32 %v977, %v1393
      %v1459 = vmul.f32 %v1395, 1.442695
      %v1460 = vpow.pop %v1459
      %v1461 = vmul.f32 %v1396, 1.442695
      %v1462 = vpow.pop %v1461
      %v1463 = vmul.f32 %v1397, 1.442695
      %v1464 = vpow.pop %v1463
      %v1465 = vmul.f32 %v1398, 1.442695
      %v1466 = vpow.pop %v1465
      %v1467 = vmul.f32 %v1399, 1.442695
      %v1468 = vpow.pop %v1467
      %v1469 = vmul.f32 %v1400, 1.442695
      %v1470 = vpow.pop %v1469
      %v1471 = vmul.f32 %v1401, 1.442695
      %v1472 = vpow.pop %v1471
      %v1473 = vmul.f32 %v1402, 1.442695
      %v1474 = vpow.pop %v1473
      %v1475 = vmul.f32 %v1403, 1.442695
      %v1476 = vpow.pop %v1475
      %v1477 = vmul.f32 %v1404, 1.442695
      %v1478 = vpow.pop %v1477
      %v1479 = vmul.f32 %v1405, 1.442695
      %v1480 = vpow.pop %v1479
      %v1481 = vmul.f32 %v1406, 1.442695
      %v1482 = vpow.pop %v1481
      %v1483 = vmul.f32 %v1407, 1.442695
      %v1484 = vpow.pop %v1483
      %v1485 = vmul.f32 %v1408, 1.442695
      %v1486 = vpow.pop %v1485
      %v1487 = vmul.f32 %v1409, 1.442695
      %v1488 = vpow.pop %v1487
      %v1489 = vmul.f32 %v1410, 1.442695
      %v1490 = vpow.pop %v1489
      %v1491 = vmul.f32 %v1411, 1.442695
      %v1492 = vpow.pop %v1491
      %v1493 = vmul.f32 %v1412, 1.442695
      %v1494 = vpow.pop %v1493
      %v1495 = vmul.f32 %v1413, 1.442695
      %v1496 = vpow.pop %v1495
      %v1497 = vmul.f32 %v1414, 1.442695
      %v1498 = vpow.pop %v1497
      %v1499 = vmul.f32 %v1415, 1.442695
      %v1500 = vpow.pop %v1499
      %v1501 = vmul.f32 %v1416, 1.442695
      %v1502 = vpow.pop %v1501
      %v1503 = vmul.f32 %v1417, 1.442695
      %v1504 = vpow.pop %v1503
      %v1505 = vmul.f32 %v1418, 1.442695
      %v1506 = vpow.pop %v1505
      %v1507 = vmul.f32 %v1419, 1.442695
      %v1508 = vpow.pop %v1507
      %v1509 = vmul.f32 %v1420, 1.442695
      %v1510 = vpow.pop %v1509
      %v1511 = vmul.f32 %v1421, 1.442695
      %v1512 = vpow.pop %v1511
      %v1513 = vmul.f32 %v1422, 1.442695
      %v1514 = vpow.pop %v1513
      %v1515 = vmul.f32 %v1423, 1.442695
      %v1516 = vpow.pop %v1515
      %v1517 = vmul.f32 %v1424, 1.442695
      %v1518 = vpow.pop %v1517
      %v1519 = vmul.f32 %v1425, 1.442695
      %v1520 = vpow.pop %v1519
      %v1521 = vmul.f32 %v1426, 1.442695
      %v1522 = vpow.pop %v1521
      %v1523 = vmul.f32 %v1427, 1.442695
      %v1524 = vpow.pop %v1523
      %v1525 = vmul.f32 %v1428, 1.442695
      %v1526 = vpow.pop %v1525
      %v1527 = vmul.f32 %v1429, 1.442695
      %v1528 = vpow.pop %v1527
      %v1529 = vmul.f32 %v1430, 1.442695
      %v1530 = vpow.pop %v1529
      %v1531 = vmul.f32 %v1431, 1.442695
      %v1532 = vpow.pop %v1531
      %v1533 = vmul.f32 %v1432, 1.442695
      %v1534 = vpow.pop %v1533
      %v1535 = vmul.f32 %v1433, 1.442695
      %v1536 = vpow.pop %v1535
      %v1537 = vmul.f32 %v1434, 1.442695
      %v1538 = vpow.pop %v1537
      %v1539 = vmul.f32 %v1435, 1.442695
      %v1540 = vpow.pop %v1539
      %v1541 = vmul.f32 %v1436, 1.442695
      %v1542 = vpow.pop %v1541
      %v1543 = vmul.f32 %v1437, 1.442695
      %v1544 = vpow.pop %v1543
      %v1545 = vmul.f32 %v1438, 1.442695
      %v1546 = vpow.pop %v1545
      %v1547 = vmul.f32 %v1439, 1.442695
      %v1548 = vpow.pop %v1547
      %v1549 = vmul.f32 %v1440, 1.442695
      %v1550 = vpow.pop %v1549
      %v1551 = vmul.f32 %v1441, 1.442695
      %v1552 = vpow.pop %v1551
      %v1553 = vmul.f32 %v1442, 1.442695
      %v1554 = vpow.pop %v1553
      %v1555 = vmul.f32 %v1443, 1.442695
      %v1556 = vpow.pop %v1555
      %v1557 = vmul.f32 %v1444, 1.442695
      %v1558 = vpow.pop %v1557
      %v1559 = vmul.f32 %v1445, 1.442695
      %v1560 = vpow.pop %v1559
      %v1561 = vmul.f32 %v1446, 1.442695
      %v1562 = vpow.pop %v1561
      %v1563 = vmul.f32 %v1447, 1.442695
      %v1564 = vpow.pop %v1563
      %v1565 = vmul.f32 %v1448, 1.442695
      %v1566 = vpow.pop %v1565
      %v1567 = vmul.f32 %v1449, 1.442695
      %v1568 = vpow.pop %v1567
      %v1569 = vmul.f32 %v1450, 1.442695
      %v1570 = vpow.pop %v1569
      %v1571 = vmul.f32 %v1451, 1.442695
      %v1572 = vpow.pop %v1571
      %v1573 = vmul.f32 %v1452, 1.442695
      %v1574 = vpow.pop %v1573
      %v1575 = vmul.f32 %v1453, 1.442695
      %v1576 = vpow.pop %v1575
      %v1577 = vmul.f32 %v1454, 1.442695
      %v1578 = vpow.pop %v1577
      %v1579 = vmul.f32 %v1455, 1.442695
      %v1580 = vpow.pop %v1579
      %v1581 = vmul.f32 %v1456, 1.442695
      %v1582 = vpow.pop %v1581
      %v1583 = vmul.f32 %v1457, 1.442695
      %v1584 = vpow.pop %v1583
      %v1585 = vmul.f32 %v1458, 1.442695
      %v1586 = vpow.pop %v1585
      %v1587 = vld [vmem:[#allocation3] sm:$0xff]
      %v1588 = vld [vmem:[#allocation3 + $0x8] sm:$0xff]
      %v1589 = vld [vmem:[#allocation3 + $0x10] sm:$0xff]
      %v1590 = vld [vmem:[#allocation3 + $0x18] sm:$0xff]
      %v1591 = vld [vmem:[#allocation3 + $0x20] sm:$0xff]
      %v1592 = vld [vmem:[#allocation3 + $0x28] sm:$0xff]
      %v1593 = vld [vmem:[#allocation3 + $0x30] sm:$0xff]
      %v1594 = vld [vmem:[#allocation3 + $0x38] sm:$0xff]
      %v1595 = vld [vmem:[#allocation3 + $0x40] sm:$0xff]
      %v1596 = vld [vmem:[#allocation3 + $0x48] sm:$0xff]
      %v1597 = vld [vmem:[#allocation3 + $0x50] sm:$0xff]
      %v1598 = vld [vmem:[#allocation3 + $0x58] sm:$0xff]
      %v1599 = vld [vmem:[#allocation3 + $0x60] sm:$0xff]
      %v1600 = vld [vmem:[#allocation3 + $0x68] sm:$0xff]
      %v1601 = vld [vmem:[#allocation3 + $0x70] sm:$0xff]
      %v1602 = vld [vmem:[#allocation3 + $0x78] sm:$0xff]
      %v1603 = vld [vmem:[#allocation3 + $0x80] sm:$0xff]
      %v1604 = vld [vmem:[#allocation3 + $0x88] sm:$0xff]
      %v1605 = vld [vmem:[#allocation3 + $0x90] sm:$0xff]
      %v1606 = vld [vmem:[#allocation3 + $0x98] sm:$0xff]
      %v1607 = vld [vmem:[#allocation3 + $0xa0] sm:$0xff]
      %v1608 = vld [vmem:[#allocation3 + $0xa8] sm:$0xff]
      %v1609 = vld [vmem:[#allocation3 + $0xb0] sm:$0xff]
      %v1610 = vld [vmem:[#allocation3 + $0xb8] sm:$0xff]
      %v1611 = vld [vmem:[#allocation3 + $0xc0] sm:$0xff]
      %v1612 = vld [vmem:[#allocation3 + $0xc8] sm:$0xff]
      %v1613 = vld [vmem:[#allocation3 + $0xd0] sm:$0xff]
      %v1614 = vld [vmem:[#allocation3 + $0xd8] sm:$0xff]
      %v1615 = vld [vmem:[#allocation3 + $0xe0] sm:$0xff]
      %v1616 = vld [vmem:[#allocation3 + $0xe8] sm:$0xff]
      %v1617 = vld [vmem:[#allocation3 + $0xf0] sm:$0xff]
      %v1618 = vld [vmem:[#allocation3 + $0xf8] sm:$0xff]
      %v1619 = vmul.f32 %v1172, %v1587
      %v1620 = vmul.f32 %v1174, %v1588
      %v1621 = vmul.f32 %v1176, %v1589
      %v1622 = vmul.f32 %v1178, %v1590
      %v1623 = vmul.f32 %v1180, %v1591
      %v1624 = vmul.f32 %v1182, %v1592
      %v1625 = vmul.f32 %v1184, %v1593
      %v1626 = vmul.f32 %v1186, %v1594
      %v1627 = vmul.f32 %v1188, %v1595
      %v1628 = vmul.f32 %v1190, %v1596
      %v1629 = vmul.f32 %v1192, %v1597
      %v1630 = vmul.f32 %v1194, %v1598
      %v1631 = vmul.f32 %v1196, %v1599
      %v1632 = vmul.f32 %v1198, %v1600
      %v1633 = vmul.f32 %v1200, %v1601
      %v1634 = vmul.f32 %v1202, %v1602
      %v1635 = vmul.f32 %v1204, %v1603
      %v1636 = vmul.f32 %v1206, %v1604
      %v1637 = vmul.f32 %v1208, %v1605
      %v1638 = vmul.f32 %v1210, %v1606
      %v1639 = vmul.f32 %v1212, %v1607
      %v1640 = vmul.f32 %v1214, %v1608
      %v1641 = vmul.f32 %v1216, %v1609
      %v1642 = vmul.f32 %v1218, %v1610
      %v1643 = vmul.f32 %v1220, %v1611
      %v1644 = vmul.f32 %v1222, %v1612
      %v1645 = vmul.f32 %v1224, %v1613
      %v1646 = vmul.f32 %v1226, %v1614
      %v1647 = vmul.f32 %v1228, %v1615
      %v1648 = vmul.f32 %v1230, %v1616
      %v1649 = vmul.f32 %v1232, %v1617
      %v1650 = vmul.f32 %v1234, %v1618
      %v1651 = vadd.f32 %v1460, %v1462
      %1652 = vadd.xlane.f32.xlu0 %v1651
      %v1653 = vpop.xlane.xlu0 %1652
      %v1654 = vadd.f32 %v1464, %v1466
      %1655 = vadd.xlane.f32.xlu0 %v1654
      %v1656 = vpop.xlane.xlu0 %1655
      %v1657 = vadd.f32 %v1468, %v1470
      %1658 = vadd.xlane.f32.xlu0 %v1657
      %v1659 = vpop.xlane.xlu0 %1658
      %v1660 = vadd.f32 %v1472, %v1474
      %1661 = vadd.xlane.f32.xlu0 %v1660
      %v1662 = vpop.xlane.xlu0 %1661
      %v1663 = vadd.f32 %v1476, %v1478
      %1664 = vadd.xlane.f32.xlu0 %v1663
      %v1665 = vpop.xlane.xlu0 %1664
      %v1666 = vadd.f32 %v1480, %v1482
      %1667 = vadd.xlane.f32.xlu0 %v1666
      %v1668 = vpop.xlane.xlu0 %1667
      %v1669 = vadd.f32 %v1484, %v1486
      %1670 = vadd.xlane.f32.xlu0 %v1669
      %v1671 = vpop.xlane.xlu0 %1670
      %v1672 = vadd.f32 %v1488, %v1490
      %1673 = vadd.xlane.f32.xlu0 %v1672
      %v1674 = vpop.xlane.xlu0 %1673
      %v1675 = vadd.f32 %v1492, %v1494
      %1676 = vadd.xlane.f32.xlu0 %v1675
      %v1677 = vpop.xlane.xlu0 %1676
      %v1678 = vadd.f32 %v1496, %v1498
      %1679 = vadd.xlane.f32.xlu0 %v1678
      %v1680 = vpop.xlane.xlu0 %1679
      %v1681 = vadd.f32 %v1500, %v1502
      %1682 = vadd.xlane.f32.xlu0 %v1681
      %v1683 = vpop.xlane.xlu0 %1682
      %v1684 = vadd.f32 %v1504, %v1506
      %1685 = vadd.xlane.f32.xlu0 %v1684
      %v1686 = vpop.xlane.xlu0 %1685
      %v1687 = vadd.f32 %v1508, %v1510
      %1688 = vadd.xlane.f32.xlu0 %v1687
      %v1689 = vpop.xlane.xlu0 %1688
      %v1690 = vadd.f32 %v1512, %v1514
      %1691 = vadd.xlane.f32.xlu0 %v1690
      %v1692 = vpop.xlane.xlu0 %1691
      %v1693 = vadd.f32 %v1516, %v1518
      %1694 = vadd.xlane.f32.xlu0 %v1693
      %v1695 = vpop.xlane.xlu0 %1694
      %v1696 = vadd.f32 %v1520, %v1522
      %1697 = vadd.xlane.f32.xlu0 %v1696
      %v1698 = vpop.xlane.xlu0 %1697
      %v1699 = vadd.f32 %v1524, %v1526
      %1700 = vadd.xlane.f32.xlu0 %v1699
      %v1701 = vpop.xlane.xlu0 %1700
      %v1702 = vadd.f32 %v1528, %v1530
      %1703 = vadd.xlane.f32.xlu0 %v1702
      %v1704 = vpop.xlane.xlu0 %1703
      %v1705 = vadd.f32 %v1532, %v1534
      %1706 = vadd.xlane.f32.xlu0 %v1705
      %v1707 = vpop.xlane.xlu0 %1706
      %v1708 = vadd.f32 %v1536, %v1538
      %1709 = vadd.xlane.f32.xlu0 %v1708
      %v1710 = vpop.xlane.xlu0 %1709
      %v1711 = vadd.f32 %v1540, %v1542
      %1712 = vadd.xlane.f32.xlu0 %v1711
      %v1713 = vpop.xlane.xlu0 %1712
      %v1714 = vadd.f32 %v1544, %v1546
      %1715 = vadd.xlane.f32.xlu0 %v1714
      %v1716 = vpop.xlane.xlu0 %1715
      %v1717 = vadd.f32 %v1548, %v1550
      %1718 = vadd.xlane.f32.xlu0 %v1717
      %v1719 = vpop.xlane.xlu0 %1718
      %v1720 = vadd.f32 %v1552, %v1554
      %1721 = vadd.xlane.f32.xlu0 %v1720
      %v1722 = vpop.xlane.xlu0 %1721
      %v1723 = vadd.f32 %v1556, %v1558
      %1724 = vadd.xlane.f32.xlu0 %v1723
      %v1725 = vpop.xlane.xlu0 %1724
      %v1726 = vadd.f32 %v1560, %v1562
      %1727 = vadd.xlane.f32.xlu0 %v1726
      %v1728 = vpop.xlane.xlu0 %1727
      %v1729 = vadd.f32 %v1564, %v1566
      %1730 = vadd.xlane.f32.xlu0 %v1729
      %v1731 = vpop.xlane.xlu0 %1730
      %v1732 = vadd.f32 %v1568, %v1570
      %1733 = vadd.xlane.f32.xlu0 %v1732
      %v1734 = vpop.xlane.xlu0 %1733
      %v1735 = vadd.f32 %v1572, %v1574
      %1736 = vadd.xlane.f32.xlu0 %v1735
      %v1737 = vpop.xlane.xlu0 %1736
      %v1738 = vadd.f32 %v1576, %v1578
      %1739 = vadd.xlane.f32.xlu0 %v1738
      %v1740 = vpop.xlane.xlu0 %1739
      %v1741 = vadd.f32 %v1580, %v1582
      %1742 = vadd.xlane.f32.xlu0 %v1741
      %v1743 = vpop.xlane.xlu0 %1742
      %v1744 = vadd.f32 %v1584, %v1586
      %1745 = vadd.xlane.f32.xlu0 %v1744
      %v1746 = vpop.xlane.xlu0 %1745
      %v1747 = vadd.f32 %v1619, %v1653
      %v1748 = vadd.f32 %v1620, %v1656
      %v1749 = vadd.f32 %v1621, %v1659
      %v1750 = vadd.f32 %v1622, %v1662
      %v1751 = vadd.f32 %v1623, %v1665
      %v1752 = vadd.f32 %v1624, %v1668
      %v1753 = vadd.f32 %v1625, %v1671
      %v1754 = vadd.f32 %v1626, %v1674
      %v1755 = vadd.f32 %v1627, %v1677
      %v1756 = vadd.f32 %v1628, %v1680
      %v1757 = vadd.f32 %v1629, %v1683
      %v1758 = vadd.f32 %v1630, %v1686
      %v1759 = vadd.f32 %v1631, %v1689
      %v1760 = vadd.f32 %v1632, %v1692
      %v1761 = vadd.f32 %v1633, %v1695
      %v1762 = vadd.f32 %v1634, %v1698
      %v1763 = vadd.f32 %v1635, %v1701
      %v1764 = vadd.f32 %v1636, %v1704
      %v1765 = vadd.f32 %v1637, %v1707
      %v1766 = vadd.f32 %v1638, %v1710
      %v1767 = vadd.f32 %v1639, %v1713
      %v1768 = vadd.f32 %v1640, %v1716
      %v1769 = vadd.f32 %v1641, %v1719
      %v1770 = vadd.f32 %v1642, %v1722
      %v1771 = vadd.f32 %v1643, %v1725
      %v1772 = vadd.f32 %v1644, %v1728
      %v1773 = vadd.f32 %v1645, %v1731
      %v1774 = vadd.f32 %v1646, %v1734
      %v1775 = vadd.f32 %v1647, %v1737
      %v1776 = vadd.f32 %v1648, %v1740
      %v1777 = vadd.f32 %v1649, %v1743
      %v1778 = vadd.f32 %v1650, %v1746
      %vm1779 = vcmask 7168
      %1780 = vst.msk [vmem:[#allocation3] sm:$0xff] %vm1779, %v1747
      %1781 = vst.msk [vmem:[#allocation3 + $0x8] sm:$0xff] %vm1779, %v1748
      %1782 = vst.msk [vmem:[#allocation3 + $0x10] sm:$0xff] %vm1779, %v1749
      %1783 = vst.msk [vmem:[#allocation3 + $0x18] sm:$0xff] %vm1779, %v1750
      %1784 = vst.msk [vmem:[#allocation3 + $0x20] sm:$0xff] %vm1779, %v1751
      %1785 = vst.msk [vmem:[#allocation3 + $0x28] sm:$0xff] %vm1779, %v1752
      %1786 = vst.msk [vmem:[#allocation3 + $0x30] sm:$0xff] %vm1779, %v1753
      %1787 = vst.msk [vmem:[#allocation3 + $0x38] sm:$0xff] %vm1779, %v1754
      %1788 = vst.msk [vmem:[#allocation3 + $0x40] sm:$0xff] %vm1779, %v1755
      %1789 = vst.msk [vmem:[#allocation3 + $0x48] sm:$0xff] %vm1779, %v1756
      %1790 = vst.msk [vmem:[#allocation3 + $0x50] sm:$0xff] %vm1779, %v1757
      %1791 = vst.msk [vmem:[#allocation3 + $0x58] sm:$0xff] %vm1779, %v1758
      %1792 = vst.msk [vmem:[#allocation3 + $0x60] sm:$0xff] %vm1779, %v1759
      %1793 = vst.msk [vmem:[#allocation3 + $0x68] sm:$0xff] %vm1779, %v1760
      %1794 = vst.msk [vmem:[#allocation3 + $0x70] sm:$0xff] %vm1779, %v1761
      %1795 = vst.msk [vmem:[#allocation3 + $0x78] sm:$0xff] %vm1779, %v1762
      %1796 = vst.msk [vmem:[#allocation3 + $0x80] sm:$0xff] %vm1779, %v1763
      %1797 = vst.msk [vmem:[#allocation3 + $0x88] sm:$0xff] %vm1779, %v1764
      %1798 = vst.msk [vmem:[#allocation3 + $0x90] sm:$0xff] %vm1779, %v1765
      %1799 = vst.msk [vmem:[#allocation3 + $0x98] sm:$0xff] %vm1779, %v1766
      %1800 = vst.msk [vmem:[#allocation3 + $0xa0] sm:$0xff] %vm1779, %v1767
      %1801 = vst.msk [vmem:[#allocation3 + $0xa8] sm:$0xff] %vm1779, %v1768
      %1802 = vst.msk [vmem:[#allocation3 + $0xb0] sm:$0xff] %vm1779, %v1769
      %1803 = vst.msk [vmem:[#allocation3 + $0xb8] sm:$0xff] %vm1779, %v1770
      %1804 = vst.msk [vmem:[#allocation3 + $0xc0] sm:$0xff] %vm1779, %v1771
      %1805 = vst.msk [vmem:[#allocation3 + $0xc8] sm:$0xff] %vm1779, %v1772
      %1806 = vst.msk [vmem:[#allocation3 + $0xd0] sm:$0xff] %vm1779, %v1773
      %1807 = vst.msk [vmem:[#allocation3 + $0xd8] sm:$0xff] %vm1779, %v1774
      %1808 = vst.msk [vmem:[#allocation3 + $0xe0] sm:$0xff] %vm1779, %v1775
      %1809 = vst.msk [vmem:[#allocation3 + $0xe8] sm:$0xff] %vm1779, %v1776
      %1810 = vst.msk [vmem:[#allocation3 + $0xf0] sm:$0xff] %vm1779, %v1777
      %1811 = vst.msk [vmem:[#allocation3 + $0xf8] sm:$0xff] %vm1779, %v1778
      %1812 = vst.msk [vmem:[#allocation2] sm:$0xff] %vm1779, %v1107
      %1813 = vst.msk [vmem:[#allocation2 + $0x8] sm:$0xff] %vm1779, %v1108
      %1814 = vst.msk [vmem:[#allocation2 + $0x10] sm:$0xff] %vm1779, %v1109
      %1815 = vst.msk [vmem:[#allocation2 + $0x18] sm:$0xff] %vm1779, %v1110
      %1816 = vst.msk [vmem:[#allocation2 + $0x20] sm:$0xff] %vm1779, %v1111
      %1817 = vst.msk [vmem:[#allocation2 + $0x28] sm:$0xff] %vm1779, %v1112
      %1818 = vst.msk [vmem:[#allocation2 + $0x30] sm:$0xff] %vm1779, %v1113
      %1819 = vst.msk [vmem:[#allocation2 + $0x38] sm:$0xff] %vm1779, %v1114
      %1820 = vst.msk [vmem:[#allocation2 + $0x40] sm:$0xff] %vm1779, %v1115
      %1821 = vst.msk [vmem:[#allocation2 + $0x48] sm:$0xff] %vm1779, %v1116
      %1822 = vst.msk [vmem:[#allocation2 + $0x50] sm:$0xff] %vm1779, %v1117
      %1823 = vst.msk [vmem:[#allocation2 + $0x58] sm:$0xff] %vm1779, %v1118
      %1824 = vst.msk [vmem:[#allocation2 + $0x60] sm:$0xff] %vm1779, %v1119
      %1825 = vst.msk [vmem:[#allocation2 + $0x68] sm:$0xff] %vm1779, %v1120
      %1826 = vst.msk [vmem:[#allocation2 + $0x70] sm:$0xff] %vm1779, %v1121
      %1827 = vst.msk [vmem:[#allocation2 + $0x78] sm:$0xff] %vm1779, %v1122
      %1828 = vst.msk [vmem:[#allocation2 + $0x80] sm:$0xff] %vm1779, %v1123
      %1829 = vst.msk [vmem:[#allocation2 + $0x88] sm:$0xff] %vm1779, %v1124
      %1830 = vst.msk [vmem:[#allocation2 + $0x90] sm:$0xff] %vm1779, %v1125
      %1831 = vst.msk [vmem:[#allocation2 + $0x98] sm:$0xff] %vm1779, %v1126
      %1832 = vst.msk [vmem:[#allocation2 + $0xa0] sm:$0xff] %vm1779, %v1127
      %1833 = vst.msk [vmem:[#allocation2 + $0xa8] sm:$0xff] %vm1779, %v1128
      %1834 = vst.msk [vmem:[#allocation2 + $0xb0] sm:$0xff] %vm1779, %v1129
      %1835 = vst.msk [vmem:[#allocation2 + $0xb8] sm:$0xff] %vm1779, %v1130
      %1836 = vst.msk [vmem:[#allocation2 + $0xc0] sm:$0xff] %vm1779, %v1131
      %1837 = vst.msk [vmem:[#allocation2 + $0xc8] sm:$0xff] %vm1779, %v1132
      %1838 = vst.msk [vmem:[#allocation2 + $0xd0] sm:$0xff] %vm1779, %v1133
      %1839 = vst.msk [vmem:[#allocation2 + $0xd8] sm:$0xff] %vm1779, %v1134
      %1840 = vst.msk [vmem:[#allocation2 + $0xe0] sm:$0xff] %vm1779, %v1135
      %1841 = vst.msk [vmem:[#allocation2 + $0xe8] sm:$0xff] %vm1779, %v1136
      %1842 = vst.msk [vmem:[#allocation2 + $0xf0] sm:$0xff] %vm1779, %v1137
      %1843 = vst.msk [vmem:[#allocation2 + $0xf8] sm:$0xff] %vm1779, %v1138
      %v1844 = vld [vmem:[#allocation4] sm:$0xff]
      %v1845 = vld [vmem:[#allocation4 + $0x8] sm:$0xff]
      %v1846 = vld [vmem:[#allocation4 + $0x10] sm:$0xff]
      %v1847 = vld [vmem:[#allocation4 + $0x18] sm:$0xff]
      %v1848 = vld [vmem:[#allocation4 + $0x20] sm:$0xff]
      %v1849 = vld [vmem:[#allocation4 + $0x28] sm:$0xff]
      %v1850 = vld [vmem:[#allocation4 + $0x30] sm:$0xff]
      %v1851 = vld [vmem:[#allocation4 + $0x38] sm:$0xff]
      %v1852 = vld [vmem:[#allocation4 + $0x40] sm:$0xff]
      %v1853 = vld [vmem:[#allocation4 + $0x48] sm:$0xff]
      %v1854 = vld [vmem:[#allocation4 + $0x50] sm:$0xff]
      %v1855 = vld [vmem:[#allocation4 + $0x58] sm:$0xff]
      %v1856 = vld [vmem:[#allocation4 + $0x60] sm:$0xff]
      %v1857 = vld [vmem:[#allocation4 + $0x68] sm:$0xff]
      %v1858 = vld [vmem:[#allocation4 + $0x70] sm:$0xff]
      %v1859 = vld [vmem:[#allocation4 + $0x78] sm:$0xff]
      %v1860 = vld [vmem:[#allocation4 + $0x80] sm:$0xff]
      %v1861 = vld [vmem:[#allocation4 + $0x88] sm:$0xff]
      %v1862 = vld [vmem:[#allocation4 + $0x90] sm:$0xff]
      %v1863 = vld [vmem:[#allocation4 + $0x98] sm:$0xff]
      %v1864 = vld [vmem:[#allocation4 + $0xa0] sm:$0xff]
      %v1865 = vld [vmem:[#allocation4 + $0xa8] sm:$0xff]
      %v1866 = vld [vmem:[#allocation4 + $0xb0] sm:$0xff]
      %v1867 = vld [vmem:[#allocation4 + $0xb8] sm:$0xff]
      %v1868 = vld [vmem:[#allocation4 + $0xc0] sm:$0xff]
      %v1869 = vld [vmem:[#allocation4 + $0xc8] sm:$0xff]
      %v1870 = vld [vmem:[#allocation4 + $0xd0] sm:$0xff]
      %v1871 = vld [vmem:[#allocation4 + $0xd8] sm:$0xff]
      %v1872 = vld [vmem:[#allocation4 + $0xe0] sm:$0xff]
      %v1873 = vld [vmem:[#allocation4 + $0xe8] sm:$0xff]
      %v1874 = vld [vmem:[#allocation4 + $0xf0] sm:$0xff]
      %v1875 = vld [vmem:[#allocation4 + $0xf8] sm:$0xff]
      %1877 = vset.pattern.permute.xlu0 0
      %1878 = vperm.xlu0 %1877, %v1172
      %v1879 = vpop.permute.xlu0 %1878
      %1882 = vset.pattern.permute.xlu0 0
      %1883 = vperm.xlu0 %1882, %v1174
      %v1884 = vpop.permute.xlu0 %1883
      %1887 = vset.pattern.permute.xlu0 0
      %1888 = vperm.xlu0 %1887, %v1176
      %v1889 = vpop.permute.xlu0 %1888
      %1892 = vset.pattern.permute.xlu0 0
      %1893 = vperm.xlu0 %1892, %v1178
      %v1894 = vpop.permute.xlu0 %1893
      %1897 = vset.pattern.permute.xlu0 0
      %1898 = vperm.xlu0 %1897, %v1180
      %v1899 = vpop.permute.xlu0 %1898
      %1902 = vset.pattern.permute.xlu0 0
      %1903 = vperm.xlu0 %1902, %v1182
      %v1904 = vpop.permute.xlu0 %1903
      %1907 = vset.pattern.permute.xlu0 0
      %1908 = vperm.xlu0 %1907, %v1184
      %v1909 = vpop.permute.xlu0 %1908
      %1912 = vset.pattern.permute.xlu0 0
      %1913 = vperm.xlu0 %1912, %v1186
      %v1914 = vpop.permute.xlu0 %1913
      %1917 = vset.pattern.permute.xlu0 0
      %1918 = vperm.xlu0 %1917, %v1188
      %v1919 = vpop.permute.xlu0 %1918
      %1922 = vset.pattern.permute.xlu0 0
      %1923 = vperm.xlu0 %1922, %v1190
      %v1924 = vpop.permute.xlu0 %1923
      %1927 = vset.pattern.permute.xlu0 0
      %1928 = vperm.xlu0 %1927, %v1192
      %v1929 = vpop.permute.xlu0 %1928
      %1932 = vset.pattern.permute.xlu0 0
      %1933 = vperm.xlu0 %1932, %v1194
      %v1934 = vpop.permute.xlu0 %1933
      %1937 = vset.pattern.permute.xlu0 0
      %1938 = vperm.xlu0 %1937, %v1196
      %v1939 = vpop.permute.xlu0 %1938
      %1942 = vset.pattern.permute.xlu0 0
      %1943 = vperm.xlu0 %1942, %v1198
      %v1944 = vpop.permute.xlu0 %1943
      %1947 = vset.pattern.permute.xlu0 0
      %1948 = vperm.xlu0 %1947, %v1200
      %v1949 = vpop.permute.xlu0 %1948
      %1952 = vset.pattern.permute.xlu0 0
      %1953 = vperm.xlu0 %1952, %v1202
      %v1954 = vpop.permute.xlu0 %1953
      %1957 = vset.pattern.permute.xlu0 0
      %1958 = vperm.xlu0 %1957, %v1204
      %v1959 = vpop.permute.xlu0 %1958
      %1962 = vset.pattern.permute.xlu0 0
      %1963 = vperm.xlu0 %1962, %v1206
      %v1964 = vpop.permute.xlu0 %1963
      %1967 = vset.pattern.permute.xlu0 0
      %1968 = vperm.xlu0 %1967, %v1208
      %v1969 = vpop.permute.xlu0 %1968
      %1972 = vset.pattern.permute.xlu0 0
      %1973 = vperm.xlu0 %1972, %v1210
      %v1974 = vpop.permute.xlu0 %1973
      %1977 = vset.pattern.permute.xlu0 0
      %1978 = vperm.xlu0 %1977, %v1212
      %v1979 = vpop.permute.xlu0 %1978
      %1982 = vset.pattern.permute.xlu0 0
      %1983 = vperm.xlu0 %1982, %v1214
      %v1984 = vpop.permute.xlu0 %1983
      %1987 = vset.pattern.permute.xlu0 0
      %1988 = vperm.xlu0 %1987, %v1216
      %v1989 = vpop.permute.xlu0 %1988
      %1992 = vset.pattern.permute.xlu0 0
      %1993 = vperm.xlu0 %1992, %v1218
      %v1994 = vpop.permute.xlu0 %1993
      %1997 = vset.pattern.permute.xlu0 0
      %1998 = vperm.xlu0 %1997, %v1220
      %v1999 = vpop.permute.xlu0 %1998
      %2002 = vset.pattern.permute.xlu0 0
      %2003 = vperm.xlu0 %2002, %v1222
      %v2004 = vpop.permute.xlu0 %2003
      %2007 = vset.pattern.permute.xlu0 0
      %2008 = vperm.xlu0 %2007, %v1224
      %v2009 = vpop.permute.xlu0 %2008
      %2012 = vset.pattern.permute.xlu0 0
      %2013 = vperm.xlu0 %2012, %v1226
      %v2014 = vpop.permute.xlu0 %2013
      %2017 = vset.pattern.permute.xlu0 0
      %2018 = vperm.xlu0 %2017, %v1228
      %v2019 = vpop.permute.xlu0 %2018
      %2022 = vset.pattern.permute.xlu0 0
      %2023 = vperm.xlu0 %2022, %v1230
      %v2024 = vpop.permute.xlu0 %2023
      %2027 = vset.pattern.permute.xlu0 0
      %2028 = vperm.xlu0 %2027, %v1232
      %v2029 = vpop.permute.xlu0 %2028
      %2032 = vset.pattern.permute.xlu0 0
      %2033 = vperm.xlu0 %2032, %v1234
      %v2034 = vpop.permute.xlu0 %2033
      %v2036 = vmul.f32 %v1879, %v1844
      %v2037 = vmul.f32 %v1884, %v1845
      %v2038 = vmul.f32 %v1889, %v1846
      %v2039 = vmul.f32 %v1894, %v1847
      %v2040 = vmul.f32 %v1899, %v1848
      %v2041 = vmul.f32 %v1904, %v1849
      %v2042 = vmul.f32 %v1909, %v1850
      %v2043 = vmul.f32 %v1914, %v1851
      %v2044 = vmul.f32 %v1919, %v1852
      %v2045 = vmul.f32 %v1924, %v1853
      %v2046 = vmul.f32 %v1929, %v1854
      %v2047 = vmul.f32 %v1934, %v1855
      %v2048 = vmul.f32 %v1939, %v1856
      %v2049 = vmul.f32 %v1944, %v1857
      %v2050 = vmul.f32 %v1949, %v1858
      %v2051 = vmul.f32 %v1954, %v1859
      %v2052 = vmul.f32 %v1959, %v1860
      %v2053 = vmul.f32 %v1964, %v1861
      %v2054 = vmul.f32 %v1969, %v1862
      %v2055 = vmul.f32 %v1974, %v1863
      %v2056 = vmul.f32 %v1979, %v1864
      %v2057 = vmul.f32 %v1984, %v1865
      %v2058 = vmul.f32 %v1989, %v1866
      %v2059 = vmul.f32 %v1994, %v1867
      %v2060 = vmul.f32 %v1999, %v1868
      %v2061 = vmul.f32 %v2004, %v1869
      %v2062 = vmul.f32 %v2009, %v1870
      %v2063 = vmul.f32 %v2014, %v1871
      %v2064 = vmul.f32 %v2019, %v1872
      %v2065 = vmul.f32 %v2024, %v1873
      %v2066 = vmul.f32 %v2029, %v1874
      %v2067 = vmul.f32 %v2034, %v1875
      %v2068 = vpack.c.bf16 %v1464, %v1460
      %v2069 = vpack.c.bf16 %v1466, %v1462
      %v2070 = vpack.c.bf16 %v1472, %v1468
      %v2071 = vpack.c.bf16 %v1474, %v1470
      %v2072 = vpack.c.bf16 %v1480, %v1476
      %v2073 = vpack.c.bf16 %v1482, %v1478
      %v2074 = vpack.c.bf16 %v1488, %v1484
      %v2075 = vpack.c.bf16 %v1490, %v1486
      %v2076 = vpack.c.bf16 %v1496, %v1492
      %v2077 = vpack.c.bf16 %v1498, %v1494
      %v2078 = vpack.c.bf16 %v1504, %v1500
      %v2079 = vpack.c.bf16 %v1506, %v1502
      %v2080 = vpack.c.bf16 %v1512, %v1508
      %v2081 = vpack.c.bf16 %v1514, %v1510
      %v2082 = vpack.c.bf16 %v1520, %v1516
      %v2083 = vpack.c.bf16 %v1522, %v1518
      %v2084 = vpack.c.bf16 %v1528, %v1524
      %v2085 = vpack.c.bf16 %v1530, %v1526
      %v2086 = vpack.c.bf16 %v1536, %v1532
      %v2087 = vpack.c.bf16 %v1538, %v1534
      %v2088 = vpack.c.bf16 %v1544, %v1540
      %v2089 = vpack.c.bf16 %v1546, %v1542
      %v2090 = vpack.c.bf16 %v1552, %v1548
      %v2091 = vpack.c.bf16 %v1554, %v1550
      %v2092 = vpack.c.bf16 %v1560, %v1556
      %v2093 = vpack.c.bf16 %v1562, %v1558
      %v2094 = vpack.c.bf16 %v1568, %v1564
      %v2095 = vpack.c.bf16 %v1570, %v1566
      %v2096 = vpack.c.bf16 %v1576, %v1572
      %v2097 = vpack.c.bf16 %v1578, %v1574
      %v2098 = vpack.c.bf16 %v1584, %v1580
      %v2099 = vpack.c.bf16 %v1586, %v1582
      %v2132 = vunpack.c.l.b16 %v577
      %v2133 = vunpack.c.l.b16 %v578
      %v2134 = vunpack.c.l.b16 %v579
      %v2135 = vunpack.c.l.b16 %v580
      %v2136 = vunpack.c.l.b16 %v581
      %v2137 = vunpack.c.l.b16 %v582
      %v2138 = vunpack.c.l.b16 %v583
      %v2139 = vunpack.c.l.b16 %v584
      %v2140 = vunpack.c.l.b16 %v585
      %v2141 = vunpack.c.l.b16 %v586
      %v2142 = vunpack.c.l.b16 %v587
      %v2143 = vunpack.c.l.b16 %v588
      %v2144 = vunpack.c.l.b16 %v589
      %v2145 = vunpack.c.l.b16 %v590
      %v2146 = vunpack.c.l.b16 %v591
      %v2147 = vunpack.c.l.b16 %v592
      %v2148 = vunpack.c.l.b16 %v593
      %v2149 = vunpack.c.l.b16 %v594
      %v2150 = vunpack.c.l.b16 %v595
      %v2151 = vunpack.c.l.b16 %v596
      %v2152 = vunpack.c.l.b16 %v597
      %v2153 = vunpack.c.l.b16 %v598
      %v2154 = vunpack.c.l.b16 %v599
      %v2155 = vunpack.c.l.b16 %v600
      %v2156 = vunpack.c.l.b16 %v601
      %v2157 = vunpack.c.l.b16 %v602
      %v2158 = vunpack.c.l.b16 %v603
      %v2159 = vunpack.c.l.b16 %v604
      %v2160 = vunpack.c.l.b16 %v605
      %v2161 = vunpack.c.l.b16 %v606
      %v2162 = vunpack.c.l.b16 %v607
      %v2163 = vunpack.c.l.b16 %v608
      %v2164 = vpack.c.b16 %v2133, %v2132
      %v2165 = vpack.c.b16 %v2135, %v2134
      %v2166 = vpack.c.b16 %v2137, %v2136
      %v2167 = vpack.c.b16 %v2139, %v2138
      %v2168 = vpack.c.b16 %v2141, %v2140
      %v2169 = vpack.c.b16 %v2143, %v2142
      %v2170 = vpack.c.b16 %v2145, %v2144
      %v2171 = vpack.c.b16 %v2147, %v2146
      %v2172 = vpack.c.b16 %v2149, %v2148
      %v2173 = vpack.c.b16 %v2151, %v2150
      %v2174 = vpack.c.b16 %v2153, %v2152
      %v2175 = vpack.c.b16 %v2155, %v2154
      %v2176 = vpack.c.b16 %v2157, %v2156
      %v2177 = vpack.c.b16 %v2159, %v2158
      %v2178 = vpack.c.b16 %v2161, %v2160
      %v2179 = vpack.c.b16 %v2163, %v2162
      %2196 = vmatpush.bf16.msra.mxu0 %v2171
      %2197 = vmatpush.bf16.msra.mxu0 %v2170
      %2198 = vmatpush.bf16.msra.mxu0 %v2169
      %2199 = vmatpush.bf16.msra.mxu0 %v2168
      %2200 = vmatpush.bf16.msra.mxu0 %v2167
      %2201 = vmatpush.bf16.msra.mxu0 %v2166
      %2202 = vmatpush.bf16.msra.mxu0 %v2165
      %2203 = vmatpush.bf16.msra.mxu0 %v2164
      %2204 = vmatmul.bf16.gmra.mxu0 %v2068
      %v2205 = vpop.f32.mrf.mxu0
      %v2206 = vadd.f32 0.0, %v2205
      %v2207 = vpop.f32.mrf.mxu0
      %v2208 = vadd.f32 0.0, %v2207
      %2209 = vmatmul.bf16.gmra.mxu0 %v2070
      %v2210 = vpop.f32.mrf.mxu0
      %v2211 = vadd.f32 0.0, %v2210
      %v2212 = vpop.f32.mrf.mxu0
      %v2213 = vadd.f32 0.0, %v2212
      %2214 = vmatmul.bf16.gmra.mxu0 %v2072
      %v2215 = vpop.f32.mrf.mxu0
      %v2216 = vadd.f32 0.0, %v2215
      %v2217 = vpop.f32.mrf.mxu0
      %v2218 = vadd.f32 0.0, %v2217
      %2219 = vmatmul.bf16.gmra.mxu0 %v2074
      %v2220 = vpop.f32.mrf.mxu0
      %v2221 = vadd.f32 0.0, %v2220
      %v2222 = vpop.f32.mrf.mxu0
      %v2223 = vadd.f32 0.0, %v2222
      %2224 = vmatmul.bf16.gmra.mxu0 %v2076
      %v2225 = vpop.f32.mrf.mxu0
      %v2226 = vadd.f32 0.0, %v2225
      %v2227 = vpop.f32.mrf.mxu0
      %v2228 = vadd.f32 0.0, %v2227
      %2229 = vmatmul.bf16.gmra.mxu0 %v2078
      %v2230 = vpop.f32.mrf.mxu0
      %v2231 = vadd.f32 0.0, %v2230
      %v2232 = vpop.f32.mrf.mxu0
      %v2233 = vadd.f32 0.0, %v2232
      %2234 = vmatmul.bf16.gmra.mxu0 %v2080
      %v2235 = vpop.f32.mrf.mxu0
      %v2236 = vadd.f32 0.0, %v2235
      %v2237 = vpop.f32.mrf.mxu0
      %v2238 = vadd.f32 0.0, %v2237
      %2239 = vmatmul.bf16.gmra.mxu0 %v2082
      %v2240 = vpop.f32.mrf.mxu0
      %v2241 = vadd.f32 0.0, %v2240
      %v2242 = vpop.f32.mrf.mxu0
      %v2243 = vadd.f32 0.0, %v2242
      %2244 = vmatmul.bf16.gmra.mxu0 %v2084
      %v2245 = vpop.f32.mrf.mxu0
      %v2246 = vadd.f32 0.0, %v2245
      %v2247 = vpop.f32.mrf.mxu0
      %v2248 = vadd.f32 0.0, %v2247
      %2249 = vmatmul.bf16.gmra.mxu0 %v2086
      %v2250 = vpop.f32.mrf.mxu0
      %v2251 = vadd.f32 0.0, %v2250
      %v2252 = vpop.f32.mrf.mxu0
      %v2253 = vadd.f32 0.0, %v2252
      %2254 = vmatmul.bf16.gmra.mxu0 %v2088
      %v2255 = vpop.f32.mrf.mxu0
      %v2256 = vadd.f32 0.0, %v2255
      %v2257 = vpop.f32.mrf.mxu0
      %v2258 = vadd.f32 0.0, %v2257
      %2259 = vmatmul.bf16.gmra.mxu0 %v2090
      %v2260 = vpop.f32.mrf.mxu0
      %v2261 = vadd.f32 0.0, %v2260
      %v2262 = vpop.f32.mrf.mxu0
      %v2263 = vadd.f32 0.0, %v2262
      %2264 = vmatmul.bf16.gmra.mxu0 %v2092
      %v2265 = vpop.f32.mrf.mxu0
      %v2266 = vadd.f32 0.0, %v2265
      %v2267 = vpop.f32.mrf.mxu0
      %v2268 = vadd.f32 0.0, %v2267
      %2269 = vmatmul.bf16.gmra.mxu0 %v2094
      %v2270 = vpop.f32.mrf.mxu0
      %v2271 = vadd.f32 0.0, %v2270
      %v2272 = vpop.f32.mrf.mxu0
      %v2273 = vadd.f32 0.0, %v2272
      %2274 = vmatmul.bf16.gmra.mxu0 %v2096
      %v2275 = vpop.f32.mrf.mxu0
      %v2276 = vadd.f32 0.0, %v2275
      %v2277 = vpop.f32.mrf.mxu0
      %v2278 = vadd.f32 0.0, %v2277
      %2279 = vmatmul.bf16.gmra.mxu0 %v2098
      %v2280 = vpop.f32.mrf.mxu0
      %v2281 = vadd.f32 0.0, %v2280
      %v2282 = vpop.f32.mrf.mxu0
      %v2283 = vadd.f32 0.0, %v2282
      %2284 = vdwg.mxu0
      %2285 = vmatpush.bf16.msra.mxu0 %v2179
      %2286 = vmatpush.bf16.msra.mxu0 %v2178
      %2287 = vmatpush.bf16.msra.mxu0 %v2177
      %2288 = vmatpush.bf16.msra.mxu0 %v2176
      %2289 = vmatpush.bf16.msra.mxu0 %v2175
      %2290 = vmatpush.bf16.msra.mxu0 %v2174
      %2291 = vmatpush.bf16.msra.mxu0 %v2173
      %2292 = vmatpush.bf16.msra.mxu0 %v2172
      %2293 = vmatmul.bf16.gmra.mxu0 %v2069
      %v2294 = vpop.f32.mrf.mxu0
      %v2295 = vadd.f32 %v2206, %v2294
      %v2296 = vpop.f32.mrf.mxu0
      %v2297 = vadd.f32 %v2208, %v2296
      %2298 = vmatmul.bf16.gmra.mxu0 %v2071
      %v2299 = vpop.f32.mrf.mxu0
      %v2300 = vadd.f32 %v2211, %v2299
      %v2301 = vpop.f32.mrf.mxu0
      %v2302 = vadd.f32 %v2213, %v2301
      %2303 = vmatmul.bf16.gmra.mxu0 %v2073
      %v2304 = vpop.f32.mrf.mxu0
      %v2305 = vadd.f32 %v2216, %v2304
      %v2306 = vpop.f32.mrf.mxu0
      %v2307 = vadd.f32 %v2218, %v2306
      %2308 = vmatmul.bf16.gmra.mxu0 %v2075
      %v2309 = vpop.f32.mrf.mxu0
      %v2310 = vadd.f32 %v2221, %v2309
      %v2311 = vpop.f32.mrf.mxu0
      %v2312 = vadd.f32 %v2223, %v2311
      %2313 = vmatmul.bf16.gmra.mxu0 %v2077
      %v2314 = vpop.f32.mrf.mxu0
      %v2315 = vadd.f32 %v2226, %v2314
      %v2316 = vpop.f32.mrf.mxu0
      %v2317 = vadd.f32 %v2228, %v2316
      %2318 = vmatmul.bf16.gmra.mxu0 %v2079
      %v2319 = vpop.f32.mrf.mxu0
      %v2320 = vadd.f32 %v2231, %v2319
      %v2321 = vpop.f32.mrf.mxu0
      %v2322 = vadd.f32 %v2233, %v2321
      %2323 = vmatmul.bf16.gmra.mxu0 %v2081
      %v2324 = vpop.f32.mrf.mxu0
      %v2325 = vadd.f32 %v2236, %v2324
      %v2326 = vpop.f32.mrf.mxu0
      %v2327 = vadd.f32 %v2238, %v2326
      %2328 = vmatmul.bf16.gmra.mxu0 %v2083
      %v2329 = vpop.f32.mrf.mxu0
      %v2330 = vadd.f32 %v2241, %v2329
      %v2331 = vpop.f32.mrf.mxu0
      %v2332 = vadd.f32 %v2243, %v2331
      %2333 = vmatmul.bf16.gmra.mxu0 %v2085
      %v2334 = vpop.f32.mrf.mxu0
      %v2335 = vadd.f32 %v2246, %v2334
      %v2336 = vpop.f32.mrf.mxu0
      %v2337 = vadd.f32 %v2248, %v2336
      %2338 = vmatmul.bf16.gmra.mxu0 %v2087
      %v2339 = vpop.f32.mrf.mxu0
      %v2340 = vadd.f32 %v2251, %v2339
      %v2341 = vpop.f32.mrf.mxu0
      %v2342 = vadd.f32 %v2253, %v2341
      %2343 = vmatmul.bf16.gmra.mxu0 %v2089
      %v2344 = vpop.f32.mrf.mxu0
      %v2345 = vadd.f32 %v2256, %v2344
      %v2346 = vpop.f32.mrf.mxu0
      %v2347 = vadd.f32 %v2258, %v2346
      %2348 = vmatmul.bf16.gmra.mxu0 %v2091
      %v2349 = vpop.f32.mrf.mxu0
      %v2350 = vadd.f32 %v2261, %v2349
      %v2351 = vpop.f32.mrf.mxu0
      %v2352 = vadd.f32 %v2263, %v2351
      %2353 = vmatmul.bf16.gmra.mxu0 %v2093
      %v2354 = vpop.f32.mrf.mxu0
      %v2355 = vadd.f32 %v2266, %v2354
      %v2356 = vpop.f32.mrf.mxu0
      %v2357 = vadd.f32 %v2268, %v2356
      %2358 = vmatmul.bf16.gmra.mxu0 %v2095
      %v2359 = vpop.f32.mrf.mxu0
      %v2360 = vadd.f32 %v2271, %v2359
      %v2361 = vpop.f32.mrf.mxu0
      %v2362 = vadd.f32 %v2273, %v2361
      %2363 = vmatmul.bf16.gmra.mxu0 %v2097
      %v2364 = vpop.f32.mrf.mxu0
      %v2365 = vadd.f32 %v2276, %v2364
      %v2366 = vpop.f32.mrf.mxu0
      %v2367 = vadd.f32 %v2278, %v2366
      %2368 = vmatmul.bf16.gmra.mxu0 %v2099
      %v2369 = vpop.f32.mrf.mxu0
      %v2370 = vadd.f32 %v2281, %v2369
      %v2371 = vpop.f32.mrf.mxu0
      %v2372 = vadd.f32 %v2283, %v2371
      %2373 = vdwg.mxu0
      %v2374 = vadd.f32 %v2036, %v2295
      %v2375 = vadd.f32 %v2037, %v2297
      %v2376 = vadd.f32 %v2038, %v2300
      %v2377 = vadd.f32 %v2039, %v2302
      %v2378 = vadd.f32 %v2040, %v2305
      %v2379 = vadd.f32 %v2041, %v2307
      %v2380 = vadd.f32 %v2042, %v2310
      %v2381 = vadd.f32 %v2043, %v2312
      %v2382 = vadd.f32 %v2044, %v2315
      %v2383 = vadd.f32 %v2045, %v2317
      %v2384 = vadd.f32 %v2046, %v2320
      %v2385 = vadd.f32 %v2047, %v2322
      %v2386 = vadd.f32 %v2048, %v2325
      %v2387 = vadd.f32 %v2049, %v2327
      %v2388 = vadd.f32 %v2050, %v2330
      %v2389 = vadd.f32 %v2051, %v2332
      %v2390 = vadd.f32 %v2052, %v2335
      %v2391 = vadd.f32 %v2053, %v2337
      %v2392 = vadd.f32 %v2054, %v2340
      %v2393 = vadd.f32 %v2055, %v2342
      %v2394 = vadd.f32 %v2056, %v2345
      %v2395 = vadd.f32 %v2057, %v2347
      %v2396 = vadd.f32 %v2058, %v2350
      %v2397 = vadd.f32 %v2059, %v2352
      %v2398 = vadd.f32 %v2060, %v2355
      %v2399 = vadd.f32 %v2061, %v2357
      %v2400 = vadd.f32 %v2062, %v2360
      %v2401 = vadd.f32 %v2063, %v2362
      %v2402 = vadd.f32 %v2064, %v2365
      %v2403 = vadd.f32 %v2065, %v2367
      %v2404 = vadd.f32 %v2066, %v2370
      %v2405 = vadd.f32 %v2067, %v2372
      %2406 = vst [vmem:[#allocation4] sm:$0xff] %v2374
      %2407 = vst [vmem:[#allocation4 + $0x8] sm:$0xff] %v2375
      %2408 = vst [vmem:[#allocation4 + $0x10] sm:$0xff] %v2376
      %2409 = vst [vmem:[#allocation4 + $0x18] sm:$0xff] %v2377
      %2410 = vst [vmem:[#allocation4 + $0x20] sm:$0xff] %v2378
      %2411 = vst [vmem:[#allocation4 + $0x28] sm:$0xff] %v2379
      %2412 = vst [vmem:[#allocation4 + $0x30] sm:$0xff] %v2380
      %2413 = vst [vmem:[#allocation4 + $0x38] sm:$0xff] %v2381
      %2414 = vst [vmem:[#allocation4 + $0x40] sm:$0xff] %v2382
      %2415 = vst [vmem:[#allocation4 + $0x48] sm:$0xff] %v2383
      %2416 = vst [vmem:[#allocation4 + $0x50] sm:$0xff] %v2384
      %2417 = vst [vmem:[#allocation4 + $0x58] sm:$0xff] %v2385
      %2418 = vst [vmem:[#allocation4 + $0x60] sm:$0xff] %v2386
      %2419 = vst [vmem:[#allocation4 + $0x68] sm:$0xff] %v2387
      %2420 = vst [vmem:[#allocation4 + $0x70] sm:$0xff] %v2388
      %2421 = vst [vmem:[#allocation4 + $0x78] sm:$0xff] %v2389
      %2422 = vst [vmem:[#allocation4 + $0x80] sm:$0xff] %v2390
      %2423 = vst [vmem:[#allocation4 + $0x88] sm:$0xff] %v2391
      %2424 = vst [vmem:[#allocation4 + $0x90] sm:$0xff] %v2392
      %2425 = vst [vmem:[#allocation4 + $0x98] sm:$0xff] %v2393
      %2426 = vst [vmem:[#allocation4 + $0xa0] sm:$0xff] %v2394
      %2427 = vst [vmem:[#allocation4 + $0xa8] sm:$0xff] %v2395
      %2428 = vst [vmem:[#allocation4 + $0xb0] sm:$0xff] %v2396
      %2429 = vst [vmem:[#allocation4 + $0xb8] sm:$0xff] %v2397
      %2430 = vst [vmem:[#allocation4 + $0xc0] sm:$0xff] %v2398
      %2431 = vst [vmem:[#allocation4 + $0xc8] sm:$0xff] %v2399
      %2432 = vst [vmem:[#allocation4 + $0xd0] sm:$0xff] %v2400
      %2433 = vst [vmem:[#allocation4 + $0xd8] sm:$0xff] %v2401
      %2434 = vst [vmem:[#allocation4 + $0xe0] sm:$0xff] %v2402
      %2435 = vst [vmem:[#allocation4 + $0xe8] sm:$0xff] %v2403
      %2436 = vst [vmem:[#allocation4 + $0xf0] sm:$0xff] %v2404
      %2437 = vst [vmem:[#allocation4 + $0xf8] sm:$0xff] %v2405
      // Predicated region
      $region49: #{self_attention_2d.3} parent=43 // pred_check
        %p2438 = pneg %p412
      $region50: #{self_attention_2d.3} parent=43 // pred_check_branch
        %2440 = sbr.rel (%p2438) target = $region52
      $region51: #{self_attention_2d.3} parent=43 // pred_region
        %v2441 = vld [vmem:[#allocation3] sm:$0xff]
        %v2442 = vld [vmem:[#allocation3 + $0x8] sm:$0xff]
        %v2443 = vld [vmem:[#allocation3 + $0x10] sm:$0xff]
        %v2444 = vld [vmem:[#allocation3 + $0x18] sm:$0xff]
        %v2445 = vld [vmem:[#allocation3 + $0x20] sm:$0xff]
        %v2446 = vld [vmem:[#allocation3 + $0x28] sm:$0xff]
        %v2447 = vld [vmem:[#allocation3 + $0x30] sm:$0xff]
        %v2448 = vld [vmem:[#allocation3 + $0x38] sm:$0xff]
        %v2449 = vld [vmem:[#allocation3 + $0x40] sm:$0xff]
        %v2450 = vld [vmem:[#allocation3 + $0x48] sm:$0xff]
        %v2451 = vld [vmem:[#allocation3 + $0x50] sm:$0xff]
        %v2452 = vld [vmem:[#allocation3 + $0x58] sm:$0xff]
        %v2453 = vld [vmem:[#allocation3 + $0x60] sm:$0xff]
        %v2454 = vld [vmem:[#allocation3 + $0x68] sm:$0xff]
        %v2455 = vld [vmem:[#allocation3 + $0x70] sm:$0xff]
        %v2456 = vld [vmem:[#allocation3 + $0x78] sm:$0xff]
        %v2457 = vld [vmem:[#allocation3 + $0x80] sm:$0xff]
        %v2458 = vld [vmem:[#allocation3 + $0x88] sm:$0xff]
        %v2459 = vld [vmem:[#allocation3 + $0x90] sm:$0xff]
        %v2460 = vld [vmem:[#allocation3 + $0x98] sm:$0xff]
        %v2461 = vld [vmem:[#allocation3 + $0xa0] sm:$0xff]
        %v2462 = vld [vmem:[#allocation3 + $0xa8] sm:$0xff]
        %v2463 = vld [vmem:[#allocation3 + $0xb0] sm:$0xff]
        %v2464 = vld [vmem:[#allocation3 + $0xb8] sm:$0xff]
        %v2465 = vld [vmem:[#allocation3 + $0xc0] sm:$0xff]
        %v2466 = vld [vmem:[#allocation3 + $0xc8] sm:$0xff]
        %v2467 = vld [vmem:[#allocation3 + $0xd0] sm:$0xff]
        %v2468 = vld [vmem:[#allocation3 + $0xd8] sm:$0xff]
        %v2469 = vld [vmem:[#allocation3 + $0xe0] sm:$0xff]
        %v2470 = vld [vmem:[#allocation3 + $0xe8] sm:$0xff]
        %v2471 = vld [vmem:[#allocation3 + $0xf0] sm:$0xff]
        %v2472 = vld [vmem:[#allocation3 + $0xf8] sm:$0xff]
        %v2473 = vrcp.pop %v2441
        %v2474 = vrcp.pop %v2442
        %v2475 = vrcp.pop %v2443
        %v2476 = vrcp.pop %v2444
        %v2477 = vrcp.pop %v2445
        %v2478 = vrcp.pop %v2446
        %v2479 = vrcp.pop %v2447
        %v2480 = vrcp.pop %v2448
        %v2481 = vrcp.pop %v2449
        %v2482 = vrcp.pop %v2450
        %v2483 = vrcp.pop %v2451
        %v2484 = vrcp.pop %v2452
        %v2485 = vrcp.pop %v2453
        %v2486 = vrcp.pop %v2454
        %v2487 = vrcp.pop %v2455
        %v2488 = vrcp.pop %v2456
        %v2489 = vrcp.pop %v2457
        %v2490 = vrcp.pop %v2458
        %v2491 = vrcp.pop %v2459
        %v2492 = vrcp.pop %v2460
        %v2493 = vrcp.pop %v2461
        %v2494 = vrcp.pop %v2462
        %v2495 = vrcp.pop %v2463
        %v2496 = vrcp.pop %v2464
        %v2497 = vrcp.pop %v2465
        %v2498 = vrcp.pop %v2466
        %v2499 = vrcp.pop %v2467
        %v2500 = vrcp.pop %v2468
        %v2501 = vrcp.pop %v2469
        %v2502 = vrcp.pop %v2470
        %v2503 = vrcp.pop %v2471
        %v2504 = vrcp.pop %v2472
        %v2505 = vld [vmem:[#allocation4] sm:$0xff]
        %v2506 = vld [vmem:[#allocation4 + $0x8] sm:$0xff]
        %v2507 = vld [vmem:[#allocation4 + $0x10] sm:$0xff]
        %v2508 = vld [vmem:[#allocation4 + $0x18] sm:$0xff]
        %v2509 = vld [vmem:[#allocation4 + $0x20] sm:$0xff]
        %v2510 = vld [vmem:[#allocation4 + $0x28] sm:$0xff]
        %v2511 = vld [vmem:[#allocation4 + $0x30] sm:$0xff]
        %v2512 = vld [vmem:[#allocation4 + $0x38] sm:$0xff]
        %v2513 = vld [vmem:[#allocation4 + $0x40] sm:$0xff]
        %v2514 = vld [vmem:[#allocation4 + $0x48] sm:$0xff]
        %v2515 = vld [vmem:[#allocation4 + $0x50] sm:$0xff]
        %v2516 = vld [vmem:[#allocation4 + $0x58] sm:$0xff]
        %v2517 = vld [vmem:[#allocation4 + $0x60] sm:$0xff]
        %v2518 = vld [vmem:[#allocation4 + $0x68] sm:$0xff]
        %v2519 = vld [vmem:[#allocation4 + $0x70] sm:$0xff]
        %v2520 = vld [vmem:[#allocation4 + $0x78] sm:$0xff]
        %v2521 = vld [vmem:[#allocation4 + $0x80] sm:$0xff]
        %v2522 = vld [vmem:[#allocation4 + $0x88] sm:$0xff]
        %v2523 = vld [vmem:[#allocation4 + $0x90] sm:$0xff]
        %v2524 = vld [vmem:[#allocation4 + $0x98] sm:$0xff]
        %v2525 = vld [vmem:[#allocation4 + $0xa0] sm:$0xff]
        %v2526 = vld [vmem:[#allocation4 + $0xa8] sm:$0xff]
        %v2527 = vld [vmem:[#allocation4 + $0xb0] sm:$0xff]
        %v2528 = vld [vmem:[#allocation4 + $0xb8] sm:$0xff]
        %v2529 = vld [vmem:[#allocation4 + $0xc0] sm:$0xff]
        %v2530 = vld [vmem:[#allocation4 + $0xc8] sm:$0xff]
        %v2531 = vld [vmem:[#allocation4 + $0xd0] sm:$0xff]
        %v2532 = vld [vmem:[#allocation4 + $0xd8] sm:$0xff]
        %v2533 = vld [vmem:[#allocation4 + $0xe0] sm:$0xff]
        %v2534 = vld [vmem:[#allocation4 + $0xe8] sm:$0xff]
        %v2535 = vld [vmem:[#allocation4 + $0xf0] sm:$0xff]
        %v2536 = vld [vmem:[#allocation4 + $0xf8] sm:$0xff]
        %2538 = vset.pattern.permute.xlu0 0
        %2539 = vperm.xlu0 %2538, %v2473
        %v2540 = vpop.permute.xlu0 %2539
        %2543 = vset.pattern.permute.xlu0 0
        %2544 = vperm.xlu0 %2543, %v2474
        %v2545 = vpop.permute.xlu0 %2544
        %2548 = vset.pattern.permute.xlu0 0
        %2549 = vperm.xlu0 %2548, %v2475
        %v2550 = vpop.permute.xlu0 %2549
        %2553 = vset.pattern.permute.xlu0 0
        %2554 = vperm.xlu0 %2553, %v2476
        %v2555 = vpop.permute.xlu0 %2554
        %2558 = vset.pattern.permute.xlu0 0
        %2559 = vperm.xlu0 %2558, %v2477
        %v2560 = vpop.permute.xlu0 %2559
        %2563 = vset.pattern.permute.xlu0 0
        %2564 = vperm.xlu0 %2563, %v2478
        %v2565 = vpop.permute.xlu0 %2564
        %2568 = vset.pattern.permute.xlu0 0
        %2569 = vperm.xlu0 %2568, %v2479
        %v2570 = vpop.permute.xlu0 %2569
        %2573 = vset.pattern.permute.xlu0 0
        %2574 = vperm.xlu0 %2573, %v2480
        %v2575 = vpop.permute.xlu0 %2574
        %2578 = vset.pattern.permute.xlu0 0
        %2579 = vperm.xlu0 %2578, %v2481
        %v2580 = vpop.permute.xlu0 %2579
        %2583 = vset.pattern.permute.xlu0 0
        %2584 = vperm.xlu0 %2583, %v2482
        %v2585 = vpop.permute.xlu0 %2584
        %2588 = vset.pattern.permute.xlu0 0
        %2589 = vperm.xlu0 %2588, %v2483
        %v2590 = vpop.permute.xlu0 %2589
        %2593 = vset.pattern.permute.xlu0 0
        %2594 = vperm.xlu0 %2593, %v2484
        %v2595 = vpop.permute.xlu0 %2594
        %2598 = vset.pattern.permute.xlu0 0
        %2599 = vperm.xlu0 %2598, %v2485
        %v2600 = vpop.permute.xlu0 %2599
        %2603 = vset.pattern.permute.xlu0 0
        %2604 = vperm.xlu0 %2603, %v2486
        %v2605 = vpop.permute.xlu0 %2604
        %2608 = vset.pattern.permute.xlu0 0
        %2609 = vperm.xlu0 %2608, %v2487
        %v2610 = vpop.permute.xlu0 %2609
        %2613 = vset.pattern.permute.xlu0 0
        %2614 = vperm.xlu0 %2613, %v2488
        %v2615 = vpop.permute.xlu0 %2614
        %2618 = vset.pattern.permute.xlu0 0
        %2619 = vperm.xlu0 %2618, %v2489
        %v2620 = vpop.permute.xlu0 %2619
        %2623 = vset.pattern.permute.xlu0 0
        %2624 = vperm.xlu0 %2623, %v2490
        %v2625 = vpop.permute.xlu0 %2624
        %2628 = vset.pattern.permute.xlu0 0
        %2629 = vperm.xlu0 %2628, %v2491
        %v2630 = vpop.permute.xlu0 %2629
        %2633 = vset.pattern.permute.xlu0 0
        %2634 = vperm.xlu0 %2633, %v2492
        %v2635 = vpop.permute.xlu0 %2634
        %2638 = vset.pattern.permute.xlu0 0
        %2639 = vperm.xlu0 %2638, %v2493
        %v2640 = vpop.permute.xlu0 %2639
        %2643 = vset.pattern.permute.xlu0 0
        %2644 = vperm.xlu0 %2643, %v2494
        %v2645 = vpop.permute.xlu0 %2644
        %2648 = vset.pattern.permute.xlu0 0
        %2649 = vperm.xlu0 %2648, %v2495
        %v2650 = vpop.permute.xlu0 %2649
        %2653 = vset.pattern.permute.xlu0 0
        %2654 = vperm.xlu0 %2653, %v2496
        %v2655 = vpop.permute.xlu0 %2654
        %2658 = vset.pattern.permute.xlu0 0
        %2659 = vperm.xlu0 %2658, %v2497
        %v2660 = vpop.permute.xlu0 %2659
        %2663 = vset.pattern.permute.xlu0 0
        %2664 = vperm.xlu0 %2663, %v2498
        %v2665 = vpop.permute.xlu0 %2664
        %2668 = vset.pattern.permute.xlu0 0
        %2669 = vperm.xlu0 %2668, %v2499
        %v2670 = vpop.permute.xlu0 %2669
        %2673 = vset.pattern.permute.xlu0 0
        %2674 = vperm.xlu0 %2673, %v2500
        %v2675 = vpop.permute.xlu0 %2674
        %2678 = vset.pattern.permute.xlu0 0
        %2679 = vperm.xlu0 %2678, %v2501
        %v2680 = vpop.permute.xlu0 %2679
        %2683 = vset.pattern.permute.xlu0 0
        %2684 = vperm.xlu0 %2683, %v2502
        %v2685 = vpop.permute.xlu0 %2684
        %2688 = vset.pattern.permute.xlu0 0
        %2689 = vperm.xlu0 %2688, %v2503
        %v2690 = vpop.permute.xlu0 %2689
        %2693 = vset.pattern.permute.xlu0 0
        %2694 = vperm.xlu0 %2693, %v2504
        %v2695 = vpop.permute.xlu0 %2694
        %v2697 = vmul.f32 %v2505, %v2540
        %v2698 = vmul.f32 %v2506, %v2545
        %v2699 = vmul.f32 %v2507, %v2550
        %v2700 = vmul.f32 %v2508, %v2555
        %v2701 = vmul.f32 %v2509, %v2560
        %v2702 = vmul.f32 %v2510, %v2565
        %v2703 = vmul.f32 %v2511, %v2570
        %v2704 = vmul.f32 %v2512, %v2575
        %v2705 = vmul.f32 %v2513, %v2580
        %v2706 = vmul.f32 %v2514, %v2585
        %v2707 = vmul.f32 %v2515, %v2590
        %v2708 = vmul.f32 %v2516, %v2595
        %v2709 = vmul.f32 %v2517, %v2600
        %v2710 = vmul.f32 %v2518, %v2605
        %v2711 = vmul.f32 %v2519, %v2610
        %v2712 = vmul.f32 %v2520, %v2615
        %v2713 = vmul.f32 %v2521, %v2620
        %v2714 = vmul.f32 %v2522, %v2625
        %v2715 = vmul.f32 %v2523, %v2630
        %v2716 = vmul.f32 %v2524, %v2635
        %v2717 = vmul.f32 %v2525, %v2640
        %v2718 = vmul.f32 %v2526, %v2645
        %v2719 = vmul.f32 %v2527, %v2650
        %v2720 = vmul.f32 %v2528, %v2655
        %v2721 = vmul.f32 %v2529, %v2660
        %v2722 = vmul.f32 %v2530, %v2665
        %v2723 = vmul.f32 %v2531, %v2670
        %v2724 = vmul.f32 %v2532, %v2675
        %v2725 = vmul.f32 %v2533, %v2680
        %v2726 = vmul.f32 %v2534, %v2685
        %v2727 = vmul.f32 %v2535, %v2690
        %v2728 = vmul.f32 %v2536, %v2695
        %2729 = vst [vmem:[#allocation4] sm:$0xff] %v2697
        %2730 = vst [vmem:[#allocation4 + $0x8] sm:$0xff] %v2698
        %2731 = vst [vmem:[#allocation4 + $0x10] sm:$0xff] %v2699
        %2732 = vst [vmem:[#allocation4 + $0x18] sm:$0xff] %v2700
        %2733 = vst [vmem:[#allocation4 + $0x20] sm:$0xff] %v2701
        %2734 = vst [vmem:[#allocation4 + $0x28] sm:$0xff] %v2702
        %2735 = vst [vmem:[#allocation4 + $0x30] sm:$0xff] %v2703
        %2736 = vst [vmem:[#allocation4 + $0x38] sm:$0xff] %v2704
        %2737 = vst [vmem:[#allocation4 + $0x40] sm:$0xff] %v2705
        %2738 = vst [vmem:[#allocation4 + $0x48] sm:$0xff] %v2706
        %2739 = vst [vmem:[#allocation4 + $0x50] sm:$0xff] %v2707
        %2740 = vst [vmem:[#allocation4 + $0x58] sm:$0xff] %v2708
        %2741 = vst [vmem:[#allocation4 + $0x60] sm:$0xff] %v2709
        %2742 = vst [vmem:[#allocation4 + $0x68] sm:$0xff] %v2710
        %2743 = vst [vmem:[#allocation4 + $0x70] sm:$0xff] %v2711
        %2744 = vst [vmem:[#allocation4 + $0x78] sm:$0xff] %v2712
        %2745 = vst [vmem:[#allocation4 + $0x80] sm:$0xff] %v2713
        %2746 = vst [vmem:[#allocation4 + $0x88] sm:$0xff] %v2714
        %2747 = vst [vmem:[#allocation4 + $0x90] sm:$0xff] %v2715
        %2748 = vst [vmem:[#allocation4 + $0x98] sm:$0xff] %v2716
        %2749 = vst [vmem:[#allocation4 + $0xa0] sm:$0xff] %v2717
        %2750 = vst [vmem:[#allocation4 + $0xa8] sm:$0xff] %v2718
        %2751 = vst [vmem:[#allocation4 + $0xb0] sm:$0xff] %v2719
        %2752 = vst [vmem:[#allocation4 + $0xb8] sm:$0xff] %v2720
        %2753 = vst [vmem:[#allocation4 + $0xc0] sm:$0xff] %v2721
        %2754 = vst [vmem:[#allocation4 + $0xc8] sm:$0xff] %v2722
        %2755 = vst [vmem:[#allocation4 + $0xd0] sm:$0xff] %v2723
        %2756 = vst [vmem:[#allocation4 + $0xd8] sm:$0xff] %v2724
        %2757 = vst [vmem:[#allocation4 + $0xe0] sm:$0xff] %v2725
        %2758 = vst [vmem:[#allocation4 + $0xe8] sm:$0xff] %v2726
        %2759 = vst [vmem:[#allocation4 + $0xf0] sm:$0xff] %v2727
        %2760 = vst [vmem:[#allocation4 + $0xf8] sm:$0xff] %v2728
        %v2761 = vld [vmem:[#allocation4] sm:$0xff]
        %v2762 = vld [vmem:[#allocation4 + $0x8] sm:$0xff]
        %v2763 = vld [vmem:[#allocation4 + $0x10] sm:$0xff]
        %v2764 = vld [vmem:[#allocation4 + $0x18] sm:$0xff]
        %v2765 = vld [vmem:[#allocation4 + $0x20] sm:$0xff]
        %v2766 = vld [vmem:[#allocation4 + $0x28] sm:$0xff]
        %v2767 = vld [vmem:[#allocation4 + $0x30] sm:$0xff]
        %v2768 = vld [vmem:[#allocation4 + $0x38] sm:$0xff]
        %v2769 = vld [vmem:[#allocation4 + $0x40] sm:$0xff]
        %v2770 = vld [vmem:[#allocation4 + $0x48] sm:$0xff]
        %v2771 = vld [vmem:[#allocation4 + $0x50] sm:$0xff]
        %v2772 = vld [vmem:[#allocation4 + $0x58] sm:$0xff]
        %v2773 = vld [vmem:[#allocation4 + $0x60] sm:$0xff]
        %v2774 = vld [vmem:[#allocation4 + $0x68] sm:$0xff]
        %v2775 = vld [vmem:[#allocation4 + $0x70] sm:$0xff]
        %v2776 = vld [vmem:[#allocation4 + $0x78] sm:$0xff]
        %v2777 = vld [vmem:[#allocation4 + $0x80] sm:$0xff]
        %v2778 = vld [vmem:[#allocation4 + $0x88] sm:$0xff]
        %v2779 = vld [vmem:[#allocation4 + $0x90] sm:$0xff]
        %v2780 = vld [vmem:[#allocation4 + $0x98] sm:$0xff]
        %v2781 = vld [vmem:[#allocation4 + $0xa0] sm:$0xff]
        %v2782 = vld [vmem:[#allocation4 + $0xa8] sm:$0xff]
        %v2783 = vld [vmem:[#allocation4 + $0xb0] sm:$0xff]
        %v2784 = vld [vmem:[#allocation4 + $0xb8] sm:$0xff]
        %v2785 = vld [vmem:[#allocation4 + $0xc0] sm:$0xff]
        %v2786 = vld [vmem:[#allocation4 + $0xc8] sm:$0xff]
        %v2787 = vld [vmem:[#allocation4 + $0xd0] sm:$0xff]
        %v2788 = vld [vmem:[#allocation4 + $0xd8] sm:$0xff]
        %v2789 = vld [vmem:[#allocation4 + $0xe0] sm:$0xff]
        %v2790 = vld [vmem:[#allocation4 + $0xe8] sm:$0xff]
        %v2791 = vld [vmem:[#allocation4 + $0xf0] sm:$0xff]
        %v2792 = vld [vmem:[#allocation4 + $0xf8] sm:$0xff]
        %v2793 = vpack.c.bf16 %v2762, %v2761
        %v2794 = vpack.c.bf16 %v2764, %v2763
        %v2795 = vpack.c.bf16 %v2766, %v2765
        %v2796 = vpack.c.bf16 %v2768, %v2767
        %v2797 = vpack.c.bf16 %v2770, %v2769
        %v2798 = vpack.c.bf16 %v2772, %v2771
        %v2799 = vpack.c.bf16 %v2774, %v2773
        %v2800 = vpack.c.bf16 %v2776, %v2775
        %v2801 = vpack.c.bf16 %v2778, %v2777
        %v2802 = vpack.c.bf16 %v2780, %v2779
        %v2803 = vpack.c.bf16 %v2782, %v2781
        %v2804 = vpack.c.bf16 %v2784, %v2783
        %v2805 = vpack.c.bf16 %v2786, %v2785
        %v2806 = vpack.c.bf16 %v2788, %v2787
        %v2807 = vpack.c.bf16 %v2790, %v2789
        %v2808 = vpack.c.bf16 %v2792, %v2791
        %v2809 = vld [vmem:[%s4] sm:$0xf]
        %v2810 = vld [vmem:[%s4 + $0x4] sm:$0xf]
        %v2811 = vld [vmem:[%s4 + $0x8] sm:$0xf]
        %v2812 = vld [vmem:[%s4 + $0xc] sm:$0xf]
        %v2813 = vld [vmem:[%s4 + $0x10] sm:$0xf]
        %v2814 = vld [vmem:[%s4 + $0x14] sm:$0xf]
        %v2815 = vld [vmem:[%s4 + $0x18] sm:$0xf]
        %v2816 = vld [vmem:[%s4 + $0x1c] sm:$0xf]
        %v2817 = vld [vmem:[%s4 + $0x20] sm:$0xf]
        %v2818 = vld [vmem:[%s4 + $0x24] sm:$0xf]
        %v2819 = vld [vmem:[%s4 + $0x28] sm:$0xf]
        %v2820 = vld [vmem:[%s4 + $0x2c] sm:$0xf]
        %v2821 = vld [vmem:[%s4 + $0x30] sm:$0xf]
        %v2822 = vld [vmem:[%s4 + $0x34] sm:$0xf]
        %v2823 = vld [vmem:[%s4 + $0x38] sm:$0xf]
        %v2824 = vld [vmem:[%s4 + $0x3c] sm:$0xf]
        %v2841 = vunpack.c.l.b16 %v2809
        %v2842 = vunpack.c.l.b16 %v2810
        %v2843 = vunpack.c.l.b16 %v2811
        %v2844 = vunpack.c.l.b16 %v2812
        %v2845 = vunpack.c.l.b16 %v2813
        %v2846 = vunpack.c.l.b16 %v2814
        %v2847 = vunpack.c.l.b16 %v2815
        %v2848 = vunpack.c.l.b16 %v2816
        %v2849 = vunpack.c.l.b16 %v2817
        %v2850 = vunpack.c.l.b16 %v2818
        %v2851 = vunpack.c.l.b16 %v2819
        %v2852 = vunpack.c.l.b16 %v2820
        %v2853 = vunpack.c.l.b16 %v2821
        %v2854 = vunpack.c.l.b16 %v2822
        %v2855 = vunpack.c.l.b16 %v2823
        %v2856 = vunpack.c.l.b16 %v2824
        %v2857 = vpack.c.b16 %v2842, %v2841
        %v2858 = vpack.c.b16 %v2844, %v2843
        %v2859 = vpack.c.b16 %v2846, %v2845
        %v2860 = vpack.c.b16 %v2848, %v2847
        %v2861 = vpack.c.b16 %v2850, %v2849
        %v2862 = vpack.c.b16 %v2852, %v2851
        %v2863 = vpack.c.b16 %v2854, %v2853
        %v2864 = vpack.c.b16 %v2856, %v2855
        %2873 = vmatpush.bf16.msra.mxu0 %v2864
        %2874 = vmatpush.bf16.msra.mxu0 %v2863
        %2875 = vmatpush.bf16.msra.mxu0 %v2862
        %2876 = vmatpush.bf16.msra.mxu0 %v2861
        %2877 = vmatpush.bf16.msra.mxu0 %v2860
        %2878 = vmatpush.bf16.msra.mxu0 %v2859
        %2879 = vmatpush.bf16.msra.mxu0 %v2858
        %2880 = vmatpush.bf16.msra.mxu0 %v2857
        %2881 = vmatmul.bf16.gmra.mxu0 %v2793
        %v2882 = vpop.f32.mrf.mxu0
        %v2883 = vadd.f32 0.0, %v2882
        %v2884 = vpop.f32.mrf.mxu0
        %v2885 = vadd.f32 0.0, %v2884
        %2886 = vmatmul.bf16.gmra.mxu0 %v2794
        %v2887 = vpop.f32.mrf.mxu0
        %v2888 = vadd.f32 0.0, %v2887
        %v2889 = vpop.f32.mrf.mxu0
        %v2890 = vadd.f32 0.0, %v2889
        %2891 = vmatmul.bf16.gmra.mxu0 %v2795
        %v2892 = vpop.f32.mrf.mxu0
        %v2893 = vadd.f32 0.0, %v2892
        %v2894 = vpop.f32.mrf.mxu0
        %v2895 = vadd.f32 0.0, %v2894
        %2896 = vmatmul.bf16.gmra.mxu0 %v2796
        %v2897 = vpop.f32.mrf.mxu0
        %v2898 = vadd.f32 0.0, %v2897
        %v2899 = vpop.f32.mrf.mxu0
        %v2900 = vadd.f32 0.0, %v2899
        %2901 = vmatmul.bf16.gmra.mxu0 %v2797
        %v2902 = vpop.f32.mrf.mxu0
        %v2903 = vadd.f32 0.0, %v2902
        %v2904 = vpop.f32.mrf.mxu0
        %v2905 = vadd.f32 0.0, %v2904
        %2906 = vmatmul.bf16.gmra.mxu0 %v2798
        %v2907 = vpop.f32.mrf.mxu0
        %v2908 = vadd.f32 0.0, %v2907
        %v2909 = vpop.f32.mrf.mxu0
        %v2910 = vadd.f32 0.0, %v2909
        %2911 = vmatmul.bf16.gmra.mxu0 %v2799
        %v2912 = vpop.f32.mrf.mxu0
        %v2913 = vadd.f32 0.0, %v2912
        %v2914 = vpop.f32.mrf.mxu0
        %v2915 = vadd.f32 0.0, %v2914
        %2916 = vmatmul.bf16.gmra.mxu0 %v2800
        %v2917 = vpop.f32.mrf.mxu0
        %v2918 = vadd.f32 0.0, %v2917
        %v2919 = vpop.f32.mrf.mxu0
        %v2920 = vadd.f32 0.0, %v2919
        %2921 = vmatmul.bf16.gmra.mxu0 %v2801
        %v2922 = vpop.f32.mrf.mxu0
        %v2923 = vadd.f32 0.0, %v2922
        %v2924 = vpop.f32.mrf.mxu0
        %v2925 = vadd.f32 0.0, %v2924
        %2926 = vmatmul.bf16.gmra.mxu0 %v2802
        %v2927 = vpop.f32.mrf.mxu0
        %v2928 = vadd.f32 0.0, %v2927
        %v2929 = vpop.f32.mrf.mxu0
        %v2930 = vadd.f32 0.0, %v2929
        %2931 = vmatmul.bf16.gmra.mxu0 %v2803
        %v2932 = vpop.f32.mrf.mxu0
        %v2933 = vadd.f32 0.0, %v2932
        %v2934 = vpop.f32.mrf.mxu0
        %v2935 = vadd.f32 0.0, %v2934
        %2936 = vmatmul.bf16.gmra.mxu0 %v2804
        %v2937 = vpop.f32.mrf.mxu0
        %v2938 = vadd.f32 0.0, %v2937
        %v2939 = vpop.f32.mrf.mxu0
        %v2940 = vadd.f32 0.0, %v2939
        %2941 = vmatmul.bf16.gmra.mxu0 %v2805
        %v2942 = vpop.f32.mrf.mxu0
        %v2943 = vadd.f32 0.0, %v2942
        %v2944 = vpop.f32.mrf.mxu0
        %v2945 = vadd.f32 0.0, %v2944
        %2946 = vmatmul.bf16.gmra.mxu0 %v2806
        %v2947 = vpop.f32.mrf.mxu0
        %v2948 = vadd.f32 0.0, %v2947
        %v2949 = vpop.f32.mrf.mxu0
        %v2950 = vadd.f32 0.0, %v2949
        %2951 = vmatmul.bf16.gmra.mxu0 %v2807
        %v2952 = vpop.f32.mrf.mxu0
        %v2953 = vadd.f32 0.0, %v2952
        %v2954 = vpop.f32.mrf.mxu0
        %v2955 = vadd.f32 0.0, %v2954
        %2956 = vmatmul.bf16.gmra.mxu0 %v2808
        %v2957 = vpop.f32.mrf.mxu0
        %v2958 = vadd.f32 0.0, %v2957
        %v2959 = vpop.f32.mrf.mxu0
        %v2960 = vadd.f32 0.0, %v2959
        %2961 = vdwg.mxu0
        %v2962 = vld [vmem:[%s368] sm:$0xff]
        %v2963 = vld [vmem:[%s368 + $0x8] sm:$0xff]
        %v2964 = vld [vmem:[%s368 + $0x10] sm:$0xff]
        %v2965 = vld [vmem:[%s368 + $0x18] sm:$0xff]
        %v2966 = vld [vmem:[%s368 + $0x20] sm:$0xff]
        %v2967 = vld [vmem:[%s368 + $0x28] sm:$0xff]
        %v2968 = vld [vmem:[%s368 + $0x30] sm:$0xff]
        %v2969 = vld [vmem:[%s368 + $0x38] sm:$0xff]
        %v2970 = vld [vmem:[%s368 + $0x40] sm:$0xff]
        %v2971 = vld [vmem:[%s368 + $0x48] sm:$0xff]
        %v2972 = vld [vmem:[%s368 + $0x50] sm:$0xff]
        %v2973 = vld [vmem:[%s368 + $0x58] sm:$0xff]
        %v2974 = vld [vmem:[%s368 + $0x60] sm:$0xff]
        %v2975 = vld [vmem:[%s368 + $0x68] sm:$0xff]
        %v2976 = vld [vmem:[%s368 + $0x70] sm:$0xff]
        %v2977 = vld [vmem:[%s368 + $0x78] sm:$0xff]
        %v2978 = vld [vmem:[%s368 + $0x80] sm:$0xff]
        %v2979 = vld [vmem:[%s368 + $0x88] sm:$0xff]
        %v2980 = vld [vmem:[%s368 + $0x90] sm:$0xff]
        %v2981 = vld [vmem:[%s368 + $0x98] sm:$0xff]
        %v2982 = vld [vmem:[%s368 + $0xa0] sm:$0xff]
        %v2983 = vld [vmem:[%s368 + $0xa8] sm:$0xff]
        %v2984 = vld [vmem:[%s368 + $0xb0] sm:$0xff]
        %v2985 = vld [vmem:[%s368 + $0xb8] sm:$0xff]
        %v2986 = vld [vmem:[%s368 + $0xc0] sm:$0xff]
        %v2987 = vld [vmem:[%s368 + $0xc8] sm:$0xff]
        %v2988 = vld [vmem:[%s368 + $0xd0] sm:$0xff]
        %v2989 = vld [vmem:[%s368 + $0xd8] sm:$0xff]
        %v2990 = vld [vmem:[%s368 + $0xe0] sm:$0xff]
        %v2991 = vld [vmem:[%s368 + $0xe8] sm:$0xff]
        %v2992 = vld [vmem:[%s368 + $0xf0] sm:$0xff]
        %v2993 = vld [vmem:[%s368 + $0xf8] sm:$0xff]
        %v2994 = vadd.f32 %v2962, %v2883
        %v2995 = vadd.f32 %v2963, %v2885
        %v2996 = vadd.f32 %v2964, %v2888
        %v2997 = vadd.f32 %v2965, %v2890
        %v2998 = vadd.f32 %v2966, %v2893
        %v2999 = vadd.f32 %v2967, %v2895
        %v3000 = vadd.f32 %v2968, %v2898
        %v3001 = vadd.f32 %v2969, %v2900
        %v3002 = vadd.f32 %v2970, %v2903
        %v3003 = vadd.f32 %v2971, %v2905
        %v3004 = vadd.f32 %v2972, %v2908
        %v3005 = vadd.f32 %v2973, %v2910
        %v3006 = vadd.f32 %v2974, %v2913
        %v3007 = vadd.f32 %v2975, %v2915
        %v3008 = vadd.f32 %v2976, %v2918
        %v3009 = vadd.f32 %v2977, %v2920
        %v3010 = vadd.f32 %v2978, %v2923
        %v3011 = vadd.f32 %v2979, %v2925
        %v3012 = vadd.f32 %v2980, %v2928
        %v3013 = vadd.f32 %v2981, %v2930
        %v3014 = vadd.f32 %v2982, %v2933
        %v3015 = vadd.f32 %v2983, %v2935
        %v3016 = vadd.f32 %v2984, %v2938
        %v3017 = vadd.f32 %v2985, %v2940
        %v3018 = vadd.f32 %v2986, %v2943
        %v3019 = vadd.f32 %v2987, %v2945
        %v3020 = vadd.f32 %v2988, %v2948
        %v3021 = vadd.f32 %v2989, %v2950
        %v3022 = vadd.f32 %v2990, %v2953
        %v3023 = vadd.f32 %v2991, %v2955
        %v3024 = vadd.f32 %v2992, %v2958
        %v3025 = vadd.f32 %v2993, %v2960
        %v3026 = vld [vmem:[%s5] sm:$0x1]
        %v3028 = vperm.slane %v3026, 0
        %v3030 = vadd.f32 %v2994, %v3028
        %v3031 = vadd.f32 %v2995, %v3028
        %v3032 = vadd.f32 %v2996, %v3028
        %v3033 = vadd.f32 %v2997, %v3028
        %v3034 = vadd.f32 %v2998, %v3028
        %v3035 = vadd.f32 %v2999, %v3028
        %v3036 = vadd.f32 %v3000, %v3028
        %v3037 = vadd.f32 %v3001, %v3028
        %v3038 = vadd.f32 %v3002, %v3028
        %v3039 = vadd.f32 %v3003, %v3028
        %v3040 = vadd.f32 %v3004, %v3028
        %v3041 = vadd.f32 %v3005, %v3028
        %v3042 = vadd.f32 %v3006, %v3028
        %v3043 = vadd.f32 %v3007, %v3028
        %v3044 = vadd.f32 %v3008, %v3028
        %v3045 = vadd.f32 %v3009, %v3028
        %v3046 = vadd.f32 %v3010, %v3028
        %v3047 = vadd.f32 %v3011, %v3028
        %v3048 = vadd.f32 %v3012, %v3028
        %v3049 = vadd.f32 %v3013, %v3028
        %v3050 = vadd.f32 %v3014, %v3028
        %v3051 = vadd.f32 %v3015, %v3028
        %v3052 = vadd.f32 %v3016, %v3028
        %v3053 = vadd.f32 %v3017, %v3028
        %v3054 = vadd.f32 %v3018, %v3028
        %v3055 = vadd.f32 %v3019, %v3028
        %v3056 = vadd.f32 %v3020, %v3028
        %v3057 = vadd.f32 %v3021, %v3028
        %v3058 = vadd.f32 %v3022, %v3028
        %v3059 = vadd.f32 %v3023, %v3028
        %v3060 = vadd.f32 %v3024, %v3028
        %v3061 = vadd.f32 %v3025, %v3028
        %3062 = vst [vmem:[%s410] sm:$0xff] %v3030
        %3063 = vst [vmem:[%s410 + $0x8] sm:$0xff] %v3031
        %3064 = vst [vmem:[%s410 + $0x10] sm:$0xff] %v3032
        %3065 = vst [vmem:[%s410 + $0x18] sm:$0xff] %v3033
        %3066 = vst [vmem:[%s410 + $0x20] sm:$0xff] %v3034
        %3067 = vst [vmem:[%s410 + $0x28] sm:$0xff] %v3035
        %3068 = vst [vmem:[%s410 + $0x30] sm:$0xff] %v3036
        %3069 = vst [vmem:[%s410 + $0x38] sm:$0xff] %v3037
        %3070 = vst [vmem:[%s410 + $0x40] sm:$0xff] %v3038
        %3071 = vst [vmem:[%s410 + $0x48] sm:$0xff] %v3039
        %3072 = vst [vmem:[%s410 + $0x50] sm:$0xff] %v3040
        %3073 = vst [vmem:[%s410 + $0x58] sm:$0xff] %v3041
        %3074 = vst [vmem:[%s410 + $0x60] sm:$0xff] %v3042
        %3075 = vst [vmem:[%s410 + $0x68] sm:$0xff] %v3043
        %3076 = vst [vmem:[%s410 + $0x70] sm:$0xff] %v3044
        %3077 = vst [vmem:[%s410 + $0x78] sm:$0xff] %v3045
        %3078 = vst [vmem:[%s410 + $0x80] sm:$0xff] %v3046
        %3079 = vst [vmem:[%s410 + $0x88] sm:$0xff] %v3047
        %3080 = vst [vmem:[%s410 + $0x90] sm:$0xff] %v3048
        %3081 = vst [vmem:[%s410 + $0x98] sm:$0xff] %v3049
        %3082 = vst [vmem:[%s410 + $0xa0] sm:$0xff] %v3050
        %3083 = vst [vmem:[%s410 + $0xa8] sm:$0xff] %v3051
        %3084 = vst [vmem:[%s410 + $0xb0] sm:$0xff] %v3052
        %3085 = vst [vmem:[%s410 + $0xb8] sm:$0xff] %v3053
        %3086 = vst [vmem:[%s410 + $0xc0] sm:$0xff] %v3054
        %3087 = vst [vmem:[%s410 + $0xc8] sm:$0xff] %v3055
        %3088 = vst [vmem:[%s410 + $0xd0] sm:$0xff] %v3056
        %3089 = vst [vmem:[%s410 + $0xd8] sm:$0xff] %v3057
        %3090 = vst [vmem:[%s410 + $0xe0] sm:$0xff] %v3058
        %3091 = vst [vmem:[%s410 + $0xe8] sm:$0xff] %v3059
        %3092 = vst [vmem:[%s410 + $0xf0] sm:$0xff] %v3060
        %3093 = vst [vmem:[%s410 + $0xf8] sm:$0xff] %v3061
      $region52: #{self_attention_2d.3} parent=43 // pred_fallthru
        _
      %s3094 = smul.u32 32, %s23
      %p3095 = scmp.lt.s32.totalorder %s22, 1
      %s3096 = scalar_select %p3095, %s22, 1
      %p3097 = scmp.lt.s32.totalorder %s3094, 31
      %s3098 = scalar_select %p3097, %s3094, 31
      %s3099 = smul.addr %s3096, 32
      %s3100 = sadd.s32 %s3098, %s3099
      %s3101 = smul.addr %s3100, 8
      %s3102 = scalar_lea.vmem %s6, %s3101
      // Predicated region
      $region53: #{self_attention_2d.3} parent=43 // pred_check
        %p3103 = pneg %p210
      $region54: #{self_attention_2d.3} parent=43 // pred_check_branch
        %3105 = sbr.rel (%p3103) target = $region56
      $region55: #{self_attention_2d.3} parent=43 // pred_region
        %s3106 = smul.u32 32, %s23
      $region56: #{self_attention_2d.3} parent=43 // pred_fallthru
        _
    $region44: #{self_attention_2d.3} parent=5 // pred_fallthru
      _
    %p3107 = scmp.le.s32.totalorder 2, %s12
    // Predicated region
    $region57: #{self_attention_2d.3} parent=5 // pred_check
      %p3108 = pneg %p3107
    $region58: #{self_attention_2d.3} parent=5 // pred_check_branch
      %3110 = sbr.rel (%p3108) target = $region60
    $region59: #{self_attention_2d.3} parent=5 // pred_region
      %s3111 = ssub.s32 %s12, 2
      // Predicated region
      $region61: #{self_attention_2d.3} parent=59 // pred_check
        %p3112 = pneg %p216
      $region62: #{self_attention_2d.3} parent=59 // pred_check_branch
        %3114 = sbr.rel (%p3112) target = $region64
      $region63: #{self_attention_2d.3} parent=59 // pred_region
        %s3115 = smul.u32 32, %s26
        %p3116 = scmp.lt.s32.totalorder %s25, 1
        %s3117 = scalar_select %p3116, %s25, 1
        %p3118 = scmp.lt.s32.totalorder %s3115, 31
        %s3119 = scalar_select %p3118, %s3115, 31
        %s3120 = smul.addr %s3117, 32
        %s3121 = sadd.s32 %s3119, %s3120
        %s3122 = smul.addr %s3121, 8
        %s3123 = scalar_lea.vmem %s6, %s3122
      $region64: #{self_attention_2d.3} parent=59 // pred_fallthru
        _
    $region60: #{self_attention_2d.3} parent=5 // pred_fallthru
      _
  $region6: #{self_attention_2d.3} parent=0 // loop_footer
    %s16 = sadd.s32 1, %s12
  $region7: #{self_attention_2d.3} parent=0 // loop_footer_branch
    %11 = sbr.rel target = $region3
  $region8: #{self_attention_2d.3} parent=0 // loop_exit
    _

</llo_original>
